<compile_context>
chip_gen: v7x
topology: tpu7x:2x2x1
jax: 0.10.0
libtpu: 0.0.40
codegen_flags: <defaults>
</compile_context>

<pallas_src>
import functools

import jax
import jax.numpy as jnp
from jax.experimental import pallas as pl
from jax.experimental.pallas import tpu as pltpu

LANE = 128
SUBLANE = 8


def _round_up(n, m):
    return ((n + m - 1) // m) * m


def _pad2d(a, rows, cols):
    r, c = a.shape
    return jnp.pad(a, ((0, rows - r), (0, cols - c)))


@functools.lru_cache(maxsize=None)
def _vmem_limit_bytes():
    """Per-generation VMEM budget: ~3/8 of physical, capped at 64 MiB."""
    cap = 128 * 1024 * 1024
    try:
        cap = int(getattr(pltpu.get_tpu_info(), "vmem_capacity_bytes", cap))
    except Exception:
        pass
    return int(min(64 * 1024 * 1024, (cap * 3) // 8))


def _lora_qkv_kernel(x_ref, wcat_ref, b_ref, wb_ref, o_ref, *, n_base, n_out):
    """o = base + lora + bias; base and (x@Wa) come from ONE fused x @ [W|Wa]."""
    x = x_ref[...]                                                       # (tm, C_p) bf16
    y = jnp.dot(x, wcat_ref[...], preferred_element_type=jnp.float32)   # (tm, n_base+R_p)
    base = y[:, :n_base]                                                 # 128-aligned slice
    a = y[:, n_base:]                                                    # (tm, R_p)
    lora = jnp.dot(a.astype(wb_ref.dtype), wb_ref[...],
                   preferred_element_type=jnp.float32)                   # (tm, n_base)
    out = (base + lora)[:, :n_out] + b_ref[...]                          # fp32 epilogue
    o_ref[...] = out.astype(o_ref.dtype)                                 # bf16 store


def _lora_qkv_call(x2d, wcat, b, wb, *, tm, single_buffer_weights):
    """x2d: (M_pad, C_p) bf16; wcat: (nb, C_p, C_out_p+R_p) bf16;
    b: (nb, 1, C_out) f32; wb: (nb, R_p, C_out_p) bf16 -> (nb, M_pad, C_out) bf16."""
    M_pad, C_p = x2d.shape
    nb, _, K_p = wcat.shape
    R_p, C_out_p = wb.shape[1], wb.shape[2]
    n_out = b.shape[-1]

    def _wspec(shape, index_map):
        if single_buffer_weights:
            # Weights/bias only change on the outer block axis: single-buffer
            # them to halve their VMEM footprint (matters on 64 MiB v7x parts).
            return pl.BlockSpec(shape, index_map, pipeline_mode=pl.Buffered(1))
        return pl.BlockSpec(shape, index_map)

    # Blocks outermost: the big weight slabs are DMA'd once per block and stay
    # resident while the cheap x tiles stream underneath them.
    grid = (nb, M_pad // tm)
    kernel = functools.partial(_lora_qkv_kernel, n_base=C_out_p, n_out=n_out)
    return pl.pallas_call(
        kernel,
        out_shape=jax.ShapeDtypeStruct((nb, M_pad, n_out), jnp.bfloat16),
        grid_spec=pltpu.PrefetchScalarGridSpec(
            num_scalar_prefetch=0,
            grid=grid,
            in_specs=[
                pl.BlockSpec((tm, C_p), lambda blk, i: (i, 0)),            # x tile
                _wspec((None, C_p, K_p), lambda blk, i: (blk, 0, 0)),      # [W | Wa]
                _wspec((None, 1, n_out), lambda blk, i: (blk, 0, 0)),      # bias (true width)
                _wspec((None, R_p, C_out_p), lambda blk, i: (blk, 0, 0)),  # Wb
            ],
            out_specs=pl.BlockSpec((None, tm, n_out), lambda blk, i: (blk, i, 0)),
        ),
        compiler_params=pltpu.CompilerParams(
            # Only the block axis is parallel: a 2-TC (v7x) megacore split lands
            # on blocks, keeping each core's weight slab resident across M tiles.
            dimension_semantics=("parallel", "arbitrary"),
            vmem_limit_bytes=_vmem_limit_bytes()),
    )(x2d, wcat, b, wb)


@functools.partial(jax.jit, static_argnames=("tm", "single_buffer_weights"))
def _forward_impl(x_tokens, wcat, b, wb, *, tm, single_buffer_weights):
    B, N, C = x_tokens.shape
    nb, C_p, _ = wcat.shape
    n_out = b.shape[-1]

    M = B * N
    n_tiles = -(-M // tm)                               # cdiv
    tm_eff = _round_up(-(-M // n_tiles), SUBLANE)       # <= tm, multiple of 8
    M_pad = n_tiles * tm_eff                            # minimal row padding

    x2d = _pad2d(x_tokens.reshape(M, C).astype(jnp.bfloat16), M_pad, C_p)
    out = _lora_qkv_call(x2d, wcat, b, wb, tm=tm_eff,
                         single_buffer_weights=single_buffer_weights)
    out = out[:, :M, :]                                 # no-op when M_pad == M
    return out.reshape(nb, B, N, n_out)                 # bf16


def pack_lora_qkv_params(params_per_block):
    """One-time (module-init) packing of the per-block LoRA qkv parameters.

    params_per_block: list of (w (C,3C), b (1,3C), wa (C,3r), wb (3r,3C)),
    weights stored (in, out) (transposed vs nn.Linear).  Returns the packed
    stacks (wcat bf16, bias f32, wb bf16) consumed by the kernel.
    """
    C, C_out = params_per_block[0][0].shape
    r3 = params_per_block[0][2].shape[1]
    C_p = _round_up(C, LANE)
    C_out_p = _round_up(C_out, LANE)
    R_p = _round_up(r3, LANE)

    wcat_s, b_s, wb_s = [], [], []
    for (w, b, wa, wb) in params_per_block:
        wcat_s.append(jnp.concatenate(
            [_pad2d(w, C_p, C_out_p), _pad2d(wa, C_p, R_p)], axis=1))
        b_s.append(b.reshape(1, C_out))
        wb_s.append(_pad2d(wb, R_p, C_out_p))
    wcat_stack = jnp.stack(wcat_s).astype(jnp.bfloat16)   # (nb, C_p, C_out_p+R_p)
    b_stack = jnp.stack(b_s).astype(jnp.float32)          # (nb, 1, C_out)
    wb_stack = jnp.stack(wb_s).astype(jnp.bfloat16)       # (nb, R_p, C_out_p)
    return wcat_stack, b_stack, wb_stack


def swin_lora_qkv_stack(x_tokens, packed_params, *, tm=512):
    """Apply the LoRA-augmented qkv projection of every Swin block.

    x_tokens: (B, N, C); packed_params from pack_lora_qkv_params().
    Returns bf16 (num_blocks, B, N, 3C).  (tm=1024 is also fine on the
    128 MiB-VMEM v5e/v6e parts for small-C stages.)
    """
    wcat, b, wb = packed_params
    try:
        return _forward_impl(x_tokens, wcat, b, wb, tm=tm,
                             single_buffer_weights=True)
    except Exception:
        # pl.Buffered(1) rejected by this Pallas build: fall back to default
        # double-buffered weight slabs (identical results, slightly more VMEM).
        return _forward_impl(x_tokens, wcat, b, wb, tm=tm,
                             single_buffer_weights=False)


def make_block_params(key, in_features, rank, zero_init_b=True):
    """Deterministic params for one LoRA-wrapped qkv layer, stored (in, out)."""
    out_features = 3 * in_features
    k1, k2, k3, k4 = jax.random.split(key, 4)
    s = 1.0 / jnp.sqrt(in_features)
    w = jax.random.uniform(k1, (in_features, out_features), jnp.float32, -s, s)
    b = jax.random.uniform(k2, (1, out_features), jnp.float32, -s, s)
    wa = jax.random.uniform(k3, (in_features, rank * 3), jnp.float32, -s, s)
    if zero_init_b:
        # torch.nn.init.zeros_(w_b_linear_qkv.weight) in the module
        wb = jnp.zeros((rank * 3, out_features), jnp.float32)
    else:
        sb = 1.0 / jnp.sqrt(rank * 3)
        wb = jax.random.uniform(k4, (rank * 3, out_features), jnp.float32, -sb, sb)
    return w, b, wa, wb


if __name__ == "__main__":
    key = jax.random.PRNGKey(0)
    B, N, C = 2, 200, 96        # batch, tokens, Swin-T embed dim; M=400 (not tile-aligned)
    rank = 4
    num_blocks = 3              # small synthetic stack of Swin blocks

    kx, kp = jax.random.split(key)
    x = jax.random.normal(kx, (B, N, C), jnp.float32)
    # mask_matrix is consumed only by the (untranslated) shifted-window attention.
    mask_matrix = jnp.zeros((1, N, N), jnp.float32)

    block_keys = jax.random.split(kp, num_blocks)
    params = []
    for bi, k in enumerate(block_keys):
        # The module zero-initializes w_b; the last block here uses a nonzero
        # w_b purely so the low-rank path of the kernel is numerically exercised.
        params.append(make_block_params(k, C, rank,
                                        zero_init_b=(bi != num_blocks - 1)))

    packed = pack_lora_qkv_params(params)            # ONCE, at "module init"
    out = swin_lora_qkv_stack(x, packed, tm=512)     # (nb, B, N, 3C) bf16
    out = jax.block_until_ready(out)

    # Correctness checks vs. plain-JAX references of the LoRALayer forward.
    x2d = x.reshape(B * N, C)
    x_q = x2d.astype(jnp.bfloat16).astype(jnp.float32)
    for i, (w, b, wa, wb) in enumerate(params):
        o2d = out[i].reshape(B * N, 3 * C).astype(jnp.float32)
        # (1) tight check against a bf16-quantized-input / bf16-output reference
        w_q = w.astype(jnp.bfloat16).astype(jnp.float32)
        wa_q = wa.astype(jnp.bfloat16).astype(jnp.float32)
        wb_q = wb.astype(jnp.bfloat16).astype(jnp.float32)
        a_q = (x_q @ wa_q).astype(jnp.bfloat16).astype(jnp.float32)
        ref_q = (x_q @ w_q + b + a_q @ wb_q).astype(jnp.bfloat16).astype(jnp.float32)
        assert jnp.allclose(o2d, ref_q, atol=2e-2, rtol=2e-2), "mismatch vs bf16 reference"
        # (2) looser check against the full-fp32 reference of the LoRALayer forward
        ref_f32 = x2d @ w + b + (x2d @ wa) @ wb
        assert jnp.allclose(o2d, ref_f32, atol=8e-2, rtol=8e-2), "mismatch vs fp32 reference"

    print("KERNEL_OK")
</pallas_src>

<mosaic_0001>
module attributes {stable_mosaic.version = 11 : i64} {
  func.func @_lora_qkv_kernel(%arg0: i32, %arg1: i32, %arg2: memref<400x128xbf16, #tpu.memory_space<vmem>>, %arg3: memref<1x128x512xbf16, #tpu.memory_space<vmem>>, %arg4: memref<1x1x288xf32, #tpu.memory_space<vmem>>, %arg5: memref<1x128x384xbf16, #tpu.memory_space<vmem>>, %arg6: memref<1x400x288xbf16, #tpu.memory_space<vmem>>) attributes {dimension_semantics = [#tpu.dimension_semantics<parallel>, #tpu.dimension_semantics<arbitrary>], iteration_bounds = array<i64: 3, 1>, scalar_prefetch = 0 : i64, scratch_operands = 0 : i64, tpu.core_type = #tpu.core_type<tc>, window_params = [{transform_indices = @transform_0, window_bounds = array<i64: 400, 128>}, {pipeline_mode = #tpu.pipeline_mode<synchronous>, transform_indices = @transform_1, window_bounds = array<i64: 1, 128, 512>}, {pipeline_mode = #tpu.pipeline_mode<synchronous>, transform_indices = @transform_2, window_bounds = array<i64: 1, 1, 288>}, {pipeline_mode = #tpu.pipeline_mode<synchronous>, transform_indices = @transform_3, window_bounds = array<i64: 1, 128, 384>}, {transform_indices = @transform_4, window_bounds = array<i64: 1, 400, 288>}]} {
    %c0 = arith.constant 0 : index
    %c0_0 = arith.constant 0 : index
    %0 = vector.load %arg2[%c0, %c0_0] : memref<400x128xbf16, #tpu.memory_space<vmem>>, vector<400x128xbf16>
    %c0_1 = arith.constant 0 : index
    %c0_2 = arith.constant 0 : index
    %c0_3 = arith.constant 0 : index
    %1 = vector.load %arg3[%c0_1, %c0_2, %c0_3] : memref<1x128x512xbf16, #tpu.memory_space<vmem>>, vector<1x128x512xbf16>
    %2 = vector.shape_cast %1 : vector<1x128x512xbf16> to vector<128x512xbf16>
    %cst = arith.constant dense<0.000000e+00> : vector<400x512xf32>
    %3 = tpu.matmul %0, %2, %cst {dimension_numbers = #tpu.dot_dimension_numbers<[1], [0], [0], [1], [0, 0, 1, 1], [], []>} : vector<400x128xbf16>, vector<128x512xbf16>, vector<400x512xf32> -> vector<400x512xf32>
    %4 = vector.extract_strided_slice %3 {offsets = [0, 0], sizes = [400, 384], strides = [1, 1]} : vector<400x512xf32> to vector<400x384xf32>
    %5 = vector.extract_strided_slice %3 {offsets = [0, 384], sizes = [400, 128], strides = [1, 1]} : vector<400x512xf32> to vector<400x128xf32>
    %6 = arith.truncf %5 : vector<400x128xf32> to vector<400x128xbf16>
    %c0_4 = arith.constant 0 : index
    %c0_5 = arith.constant 0 : index
    %c0_6 = arith.constant 0 : index
    %7 = vector.load %arg5[%c0_4, %c0_5, %c0_6] : memref<1x128x384xbf16, #tpu.memory_space<vmem>>, vector<1x128x384xbf16>
    %8 = vector.shape_cast %7 : vector<1x128x384xbf16> to vector<128x384xbf16>
    %cst_7 = arith.constant dense<0.000000e+00> : vector<400x384xf32>
    %9 = tpu.matmul %6, %8, %cst_7 {dimension_numbers = #tpu.dot_dimension_numbers<[1], [0], [0], [1], [0, 0, 1, 1], [], []>} : vector<400x128xbf16>, vector<128x384xbf16>, vector<400x384xf32> -> vector<400x384xf32>
    %10 = arith.addf %4, %9 : vector<400x384xf32>
    %11 = vector.extract_strided_slice %10 {offsets = [0, 0], sizes = [400, 288], strides = [1, 1]} : vector<400x384xf32> to vector<400x288xf32>
    %c0_8 = arith.constant 0 : index
    %c0_9 = arith.constant 0 : index
    %c0_10 = arith.constant 0 : index
    %12 = vector.load %arg4[%c0_8, %c0_9, %c0_10] : memref<1x1x288xf32, #tpu.memory_space<vmem>>, vector<1x1x288xf32>
    %13 = vector.shape_cast %12 : vector<1x1x288xf32> to vector<1x288xf32>
    %14 = vector.broadcast %13 : vector<1x288xf32> to vector<400x288xf32>
    %15 = arith.addf %11, %14 : vector<400x288xf32>
    %16 = arith.truncf %15 : vector<400x288xf32> to vector<400x288xbf16>
    %c0_11 = arith.constant 0 : index
    %c0_12 = arith.constant 0 : index
    %c0_13 = arith.constant 0 : index
    %17 = vector.load %arg6[%c0_11, %c0_12, %c0_13] : memref<1x400x288xbf16, #tpu.memory_space<vmem>>, vector<1x400x288xbf16>
    %18 = vector.shape_cast %17 : vector<1x400x288xbf16> to vector<400x288xbf16>
    %19 = vector.shape_cast %16 : vector<400x288xbf16> to vector<1x400x288xbf16>
    tpu.vector_store %arg6[%c0_11, %c0_12, %c0_13], %19 {strides = array<i32>} : memref<1x400x288xbf16, #tpu.memory_space<vmem>>, vector<1x400x288xbf16>,
    return
  }
  func.func @transform_0(%arg0: i32, %arg1: i32) -> (i32, i32) {
    %c0_i32 = arith.constant 0 : i32
    %c0_i32_0 = arith.constant 0 : i32
    return %arg1, %c0_i32 : i32, i32
  }
  func.func @transform_1(%arg0: i32, %arg1: i32) -> (i32, i32, i32) {
    %c0_i32 = arith.constant 0 : i32
    %c0_i32_0 = arith.constant 0 : i32
    %c0_i32_1 = arith.constant 0 : i32
    return %arg0, %c0_i32, %c0_i32_0 : i32, i32, i32
  }
  func.func @transform_2(%arg0: i32, %arg1: i32) -> (i32, i32, i32) {
    %c0_i32 = arith.constant 0 : i32
    %c0_i32_0 = arith.constant 0 : i32
    %c0_i32_1 = arith.constant 0 : i32
    return %arg0, %c0_i32, %c0_i32_0 : i32, i32, i32
  }
  func.func @transform_3(%arg0: i32, %arg1: i32) -> (i32, i32, i32) {
    %c0_i32 = arith.constant 0 : i32
    %c0_i32_0 = arith.constant 0 : i32
    %c0_i32_1 = arith.constant 0 : i32
    return %arg0, %c0_i32, %c0_i32_0 : i32, i32, i32
  }
  func.func @transform_4(%arg0: i32, %arg1: i32) -> (i32, i32, i32) {
    %c0_i32 = arith.constant 0 : i32
    %c0_i32_0 = arith.constant 0 : i32
    return %arg0, %arg1, %c0_i32 : i32, i32, i32
  }
}

module attributes {stable_mosaic.version = 11 : i64} {
  func.func @_lora_qkv_kernel(%arg0: i32, %arg1: i32, %arg2: memref<400x128xbf16, #tpu.memory_space<vmem>>, %arg3: memref<1x128x512xbf16, #tpu.memory_space<vmem>>, %arg4: memref<1x1x288xf32, #tpu.memory_space<vmem>>, %arg5: memref<1x128x384xbf16, #tpu.memory_space<vmem>>, %arg6: memref<1x400x288xbf16, #tpu.memory_space<vmem>>) attributes {dimension_semantics = [#tpu.dimension_semantics<parallel>, #tpu.dimension_semantics<arbitrary>], iteration_bounds = array<i64: 3, 1>, scalar_prefetch = 0 : i64, scratch_operands = 0 : i64, tpu.core_type = #tpu.core_type<tc>, window_params = [{transform_indices = @transform_0, window_bounds = array<i64: 400, 128>}, {transform_indices = @transform_1, window_bounds = array<i64: 1, 128, 512>}, {transform_indices = @transform_2, window_bounds = array<i64: 1, 1, 288>}, {transform_indices = @transform_3, window_bounds = array<i64: 1, 128, 384>}, {transform_indices = @transform_4, window_bounds = array<i64: 1, 400, 288>}]} {
    %c0 = arith.constant 0 : index
    %c0_0 = arith.constant 0 : index
    %0 = vector.load %arg2[%c0, %c0_0] : memref<400x128xbf16, #tpu.memory_space<vmem>>, vector<400x128xbf16>
    %c0_1 = arith.constant 0 : index
    %c0_2 = arith.constant 0 : index
    %c0_3 = arith.constant 0 : index
    %1 = vector.load %arg3[%c0_1, %c0_2, %c0_3] : memref<1x128x512xbf16, #tpu.memory_space<vmem>>, vector<1x128x512xbf16>
    %2 = vector.shape_cast %1 : vector<1x128x512xbf16> to vector<128x512xbf16>
    %cst = arith.constant dense<0.000000e+00> : vector<400x512xf32>
    %3 = tpu.matmul %0, %2, %cst {dimension_numbers = #tpu.dot_dimension_numbers<[1], [0], [0], [1], [0, 0, 1, 1], [], []>} : vector<400x128xbf16>, vector<128x512xbf16>, vector<400x512xf32> -> vector<400x512xf32>
    %4 = vector.extract_strided_slice %3 {offsets = [0, 0], sizes = [400, 384], strides = [1, 1]} : vector<400x512xf32> to vector<400x384xf32>
    %5 = vector.extract_strided_slice %3 {offsets = [0, 384], sizes = [400, 128], strides = [1, 1]} : vector<400x512xf32> to vector<400x128xf32>
    %6 = arith.truncf %5 : vector<400x128xf32> to vector<400x128xbf16>
    %c0_4 = arith.constant 0 : index
    %c0_5 = arith.constant 0 : index
    %c0_6 = arith.constant 0 : index
    %7 = vector.load %arg5[%c0_4, %c0_5, %c0_6] : memref<1x128x384xbf16, #tpu.memory_space<vmem>>, vector<1x128x384xbf16>
    %8 = vector.shape_cast %7 : vector<1x128x384xbf16> to vector<128x384xbf16>
    %cst_7 = arith.constant dense<0.000000e+00> : vector<400x384xf32>
    %9 = tpu.matmul %6, %8, %cst_7 {dimension_numbers = #tpu.dot_dimension_numbers<[1], [0], [0], [1], [0, 0, 1, 1], [], []>} : vector<400x128xbf16>, vector<128x384xbf16>, vector<400x384xf32> -> vector<400x384xf32>
    %10 = arith.addf %4, %9 : vector<400x384xf32>
    %11 = vector.extract_strided_slice %10 {offsets = [0, 0], sizes = [400, 288], strides = [1, 1]} : vector<400x384xf32> to vector<400x288xf32>
    %c0_8 = arith.constant 0 : index
    %c0_9 = arith.constant 0 : index
    %c0_10 = arith.constant 0 : index
    %12 = vector.load %arg4[%c0_8, %c0_9, %c0_10] : memref<1x1x288xf32, #tpu.memory_space<vmem>>, vector<1x1x288xf32>
    %13 = vector.shape_cast %12 : vector<1x1x288xf32> to vector<1x288xf32>
    %14 = vector.broadcast %13 : vector<1x288xf32> to vector<400x288xf32>
    %15 = arith.addf %11, %14 : vector<400x288xf32>
    %16 = arith.truncf %15 : vector<400x288xf32> to vector<400x288xbf16>
    %c0_11 = arith.constant 0 : index
    %c0_12 = arith.constant 0 : index
    %c0_13 = arith.constant 0 : index
    %17 = vector.load %arg6[%c0_11, %c0_12, %c0_13] : memref<1x400x288xbf16, #tpu.memory_space<vmem>>, vector<1x400x288xbf16>
    %18 = vector.shape_cast %17 : vector<1x400x288xbf16> to vector<400x288xbf16>
    %19 = vector.shape_cast %16 : vector<400x288xbf16> to vector<1x400x288xbf16>
    tpu.vector_store %arg6[%c0_11, %c0_12, %c0_13], %19 {strides = array<i32>} : memref<1x400x288xbf16, #tpu.memory_space<vmem>>, vector<1x400x288xbf16>,
    return
  }
  func.func @transform_0(%arg0: i32, %arg1: i32) -> (i32, i32) {
    %c0_i32 = arith.constant 0 : i32
    %c0_i32_0 = arith.constant 0 : i32
    return %arg1, %c0_i32 : i32, i32
  }
  func.func @transform_1(%arg0: i32, %arg1: i32) -> (i32, i32, i32) {
    %c0_i32 = arith.constant 0 : i32
    %c0_i32_0 = arith.constant 0 : i32
    %c0_i32_1 = arith.constant 0 : i32
    return %arg0, %c0_i32, %c0_i32_0 : i32, i32, i32
  }
  func.func @transform_2(%arg0: i32, %arg1: i32) -> (i32, i32, i32) {
    %c0_i32 = arith.constant 0 : i32
    %c0_i32_0 = arith.constant 0 : i32
    %c0_i32_1 = arith.constant 0 : i32
    return %arg0, %c0_i32, %c0_i32_0 : i32, i32, i32
  }
  func.func @transform_3(%arg0: i32, %arg1: i32) -> (i32, i32, i32) {
    %c0_i32 = arith.constant 0 : i32
    %c0_i32_0 = arith.constant 0 : i32
    %c0_i32_1 = arith.constant 0 : i32
    return %arg0, %c0_i32, %c0_i32_0 : i32, i32, i32
  }
  func.func @transform_4(%arg0: i32, %arg1: i32) -> (i32, i32, i32) {
    %c0_i32 = arith.constant 0 : i32
    %c0_i32_0 = arith.constant 0 : i32
    return %arg0, %arg1, %c0_i32 : i32, i32, i32
  }
}

</mosaic_0001>

<llo_original>
// kernel: _forward_impl.1
$region0: #{_forward_impl.1}
  #allocation0 [shape = 'u32[]', space=smem, size = 0x4, offset = 0x4, fixed_abs, tag = 'smem constant byte address 0x4 - core index']
  #allocation1 [shape = 'u32[144,128]{1,0:T(1,128)}', space=vmem, size = 0x12000, scoped, tag = 'internal scratch']
  %s0 = inlined_call_operand.vmem [shape: bf16[400,128], index: 0, kind: input, shape index: {}]
  %s1 = inlined_call_operand.vmem [shape: bf16[3,128,512], index: 1, kind: input, shape index: {}]
  %s2 = inlined_call_operand.vmem [shape: f32[3,1,288], index: 2, kind: input, shape index: {}]
  %s3 = inlined_call_operand.vmem [shape: bf16[3,128,384], index: 3, kind: input, shape index: {}]
  %s4 = inlined_call_operand.vmem [shape: bf16[3,400,288], index: 4, kind: output, shape index: {}]
  %s5 = sld [smem:[#allocation0]]
  $region49: #{_forward_impl.1} parent=0
    _
  %s7 = ssub.s32 1, %s5
  %s8 = scalar_select 0, %s7, %s5
  loop: start=0, step=1, limit=5
  $region2: #{_forward_impl.1} parent=0 // loop_pre_header
    _
  $region3: #{_forward_impl.1} parent=0 // loop_header
    %s10 = sphi 0, %s14
    %p11 = scmp.ge.s32.totalorder %s10, 5
    %s17 = sphi 0, %s29
    %s18 = sphi 0, %s25
    %s19 = sphi 0, %s17
    %s20 = sphi 0, %s18
    %s21 = sphi 0, %s19
    %s22 = sphi 0, %s20
    %s32 = sphi 0, %s34
    %s35 = sphi 0, %s32
    %s36 = sphi 0, %s35
    %s52 = sphi 0, %s36
    %s58 = sphi 0, %s60
    %s61 = sphi 0, %s58
    %s62 = sphi 0, %s61
    %s78 = sphi 0, %s62
    %s84 = sphi 0, %s86
    %s87 = sphi 0, %s84
    %s88 = sphi 0, %s87
    %s104 = sphi 0, %s88
    %s110 = sphi 0, %s112
    %s113 = sphi 0, %s110
    %s114 = sphi 0, %s113
    %s130 = sphi 0, %s114
    %s138 = sphi 0, %s140
    %s141 = sphi 0, %s138
    %s142 = sphi 0, %s141
    %s158 = sphi 0, %s142
  $region4: #{_forward_impl.1} parent=0 // loop_header_branch
    %13 = sbr.rel (%p11) target = $region8
  $region5: #{_forward_impl.1} parent=0 // loop_body
    %s15 = ssub.s32 %s10, 1
    %s16 = ssub.s32 %s10, 2
    %s23 = sadd.s32 1, %s18
    %p24 = scmp.ge.s32.totalorder %s23, 1
    %s25 = scalar_select %p24, 0, %s23
    %s26 = sadd.s32 1, %s17
    %s27 = scalar_select %p24, %s26, %s17
    %p28 = scmp.ge.s32.totalorder %s27, 3
    %s29 = scalar_select %p28, 0, %s27
    %s30 = ssub.s32 %s18, %s25
    %p31 = scmp.eq.s32.totalorder %s30, 0
    %s33 = sadd.s32 %s32, 1
    %s34 = scalar_select %p31, %s32, %s33
    %p37 = pneg %p31
    %p38 = scmp.eq.s32.totalorder %s10, 2
    %p39 = por %p37, %p38
    %p40 = scmp.ne.s32.totalorder %s32, %s35
    %p41 = scmp.eq.s32.totalorder %s10, 0
    %p42 = por %p40, %p41
    %p43 = scmp.ne.s32.totalorder %s32, %s35
    %p44 = scmp.eq.s32.totalorder %s15, 2
    %p45 = por %p43, %p44
    %p46 = scmp.ne.s32.totalorder %s35, %s36
    %p47 = scmp.eq.s32.totalorder %s15, 0
    %p48 = por %p46, %p47
    %p49 = scmp.ne.s32.totalorder %s35, %s36
    %p50 = scmp.eq.s32.totalorder %s16, 2
    %p51 = por %p49, %p50
    %p53 = scmp.ne.s32.totalorder %s36, %s52
    %p54 = scmp.eq.s32.totalorder %s16, 0
    %p55 = por %p53, %p54
    %s56 = ssub.s32 %s17, %s29
    %p57 = scmp.eq.s32.totalorder %s56, 0
    %s59 = sadd.s32 %s58, 1
    %s60 = scalar_select %p57, %s58, %s59
    %p63 = pneg %p57
    %p64 = scmp.eq.s32.totalorder %s10, 2
    %p65 = por %p63, %p64
    %p66 = scmp.ne.s32.totalorder %s58, %s61
    %p67 = scmp.eq.s32.totalorder %s10, 0
    %p68 = por %p66, %p67
    %p69 = scmp.ne.s32.totalorder %s58, %s61
    %p70 = scmp.eq.s32.totalorder %s15, 2
    %p71 = por %p69, %p70
    %p72 = scmp.ne.s32.totalorder %s61, %s62
    %p73 = scmp.eq.s32.totalorder %s15, 0
    %p74 = por %p72, %p73
    %p75 = scmp.ne.s32.totalorder %s61, %s62
    %p76 = scmp.eq.s32.totalorder %s16, 2
    %p77 = por %p75, %p76
    %p79 = scmp.ne.s32.totalorder %s62, %s78
    %p80 = scmp.eq.s32.totalorder %s16, 0
    %p81 = por %p79, %p80
    %s82 = ssub.s32 %s17, %s29
    %p83 = scmp.eq.s32.totalorder %s82, 0
    %s85 = sadd.s32 %s84, 1
    %s86 = scalar_select %p83, %s84, %s85
    %p89 = pneg %p83
    %p90 = scmp.eq.s32.totalorder %s10, 2
    %p91 = por %p89, %p90
    %p92 = scmp.ne.s32.totalorder %s84, %s87
    %p93 = scmp.eq.s32.totalorder %s10, 0
    %p94 = por %p92, %p93
    %p95 = scmp.ne.s32.totalorder %s84, %s87
    %p96 = scmp.eq.s32.totalorder %s15, 2
    %p97 = por %p95, %p96
    %p98 = scmp.ne.s32.totalorder %s87, %s88
    %p99 = scmp.eq.s32.totalorder %s15, 0
    %p100 = por %p98, %p99
    %p101 = scmp.ne.s32.totalorder %s87, %s88
    %p102 = scmp.eq.s32.totalorder %s16, 2
    %p103 = por %p101, %p102
    %p105 = scmp.ne.s32.totalorder %s88, %s104
    %p106 = scmp.eq.s32.totalorder %s16, 0
    %p107 = por %p105, %p106
    %s108 = ssub.s32 %s17, %s29
    %p109 = scmp.eq.s32.totalorder %s108, 0
    %s111 = sadd.s32 %s110, 1
    %s112 = scalar_select %p109, %s110, %s111
    %p115 = pneg %p109
    %p116 = scmp.eq.s32.totalorder %s10, 2
    %p117 = por %p115, %p116
    %p118 = scmp.ne.s32.totalorder %s110, %s113
    %p119 = scmp.eq.s32.totalorder %s10, 0
    %p120 = por %p118, %p119
    %p121 = scmp.ne.s32.totalorder %s110, %s113
    %p122 = scmp.eq.s32.totalorder %s15, 2
    %p123 = por %p121, %p122
    %p124 = scmp.ne.s32.totalorder %s113, %s114
    %p125 = scmp.eq.s32.totalorder %s15, 0
    %p126 = por %p124, %p125
    %p127 = scmp.ne.s32.totalorder %s113, %s114
    %p128 = scmp.eq.s32.totalorder %s16, 2
    %p129 = por %p127, %p128
    %p131 = scmp.ne.s32.totalorder %s114, %s130
    %p132 = scmp.eq.s32.totalorder %s16, 0
    %p133 = por %p131, %p132
    %s134 = ssub.s32 %s17, %s29
    %s135 = ssub.s32 %s18, %s25
    %s136 = sor.u32 %s134, %s135
    %p137 = scmp.eq.s32.totalorder %s136, 0
    %s139 = sadd.s32 %s138, 1
    %s140 = scalar_select %p137, %s138, %s139
    %p143 = pneg %p137
    %p144 = scmp.eq.s32.totalorder %s10, 2
    %p145 = por %p143, %p144
    %p146 = scmp.ne.s32.totalorder %s138, %s141
    %p147 = scmp.eq.s32.totalorder %s10, 0
    %p148 = por %p146, %p147
    %p149 = scmp.ne.s32.totalorder %s138, %s141
    %p150 = scmp.eq.s32.totalorder %s15, 2
    %p151 = por %p149, %p150
    %p152 = scmp.ne.s32.totalorder %s141, %s142
    %p153 = scmp.eq.s32.totalorder %s15, 0
    %p154 = por %p152, %p153
    %p155 = scmp.ne.s32.totalorder %s141, %s142
    %p156 = scmp.eq.s32.totalorder %s16, 2
    %p157 = por %p155, %p156
    %p159 = scmp.ne.s32.totalorder %s142, %s158
    %p160 = scmp.eq.s32.totalorder %s16, 0
    %p161 = por %p159, %p160
    %p162 = scmp.le.s32.totalorder 1, %s10
    %p163 = scmp.lt.s32.totalorder %s10, 4
    %p164 = pnand %p162, %p163
    %p165 = pneg %p164
    // Predicated region
    $region9: #{_forward_impl.1} parent=5 // pred_check
      _
    $region10: #{_forward_impl.1} parent=5 // pred_check_branch
      %167 = sbr.rel (%p164) target = $region12
    $region11: #{_forward_impl.1} parent=5 // pred_region
      %s168 = ssub.s32 %s10, 1
      // Predicated region
      $region13: #{_forward_impl.1} parent=11 // pred_check
        %p169 = pneg %p48
      $region14: #{_forward_impl.1} parent=11 // pred_check_branch
        %171 = sbr.rel (%p169) target = $region16
      $region15: #{_forward_impl.1} parent=11 // pred_region
        %s172 = smul.u32 50, %s20
        %p173 = scmp.lt.s32.totalorder %s172, 49
        %s174 = scalar_select %p173, %s172, 49
        %s175 = smul.addr %s174, 4
        %s176 = scalar_lea.vmem %s0, %s175
        %s177 = smul.u32 50, %s20
      $region16: #{_forward_impl.1} parent=11 // pred_fallthru
        _
      // Predicated region
      $region17: #{_forward_impl.1} parent=11 // pred_check
        %p178 = pneg %p74
      $region18: #{_forward_impl.1} parent=11 // pred_check_branch
        %180 = sbr.rel (%p178) target = $region20
      $region19: #{_forward_impl.1} parent=11 // pred_region
        %p181 = scmp.lt.s32.totalorder %s19, 2
        %s182 = scalar_select %p181, %s19, 2
        %s183 = smul.addr %s182, 64
        %s184 = smul.addr %s183, 4
        %s185 = scalar_lea.vmem %s1, %s184
      $region20: #{_forward_impl.1} parent=11 // pred_fallthru
        _
      // Predicated region
      $region21: #{_forward_impl.1} parent=11 // pred_check
        %p186 = pneg %p100
      $region22: #{_forward_impl.1} parent=11 // pred_check_branch
        %188 = sbr.rel (%p186) target = $region24
      $region23: #{_forward_impl.1} parent=11 // pred_region
        %p189 = scmp.lt.s32.totalorder %s19, 2
        %s190 = scalar_select %p189, %s19, 2
        %s191 = smul.addr %s190, 3
        %s192 = scalar_lea.vmem %s2, %s191
      $region24: #{_forward_impl.1} parent=11 // pred_fallthru
        _
      // Predicated region
      $region25: #{_forward_impl.1} parent=11 // pred_check
        %p193 = pneg %p126
      $region26: #{_forward_impl.1} parent=11 // pred_check_branch
        %195 = sbr.rel (%p193) target = $region28
      $region27: #{_forward_impl.1} parent=11 // pred_region
        %p196 = scmp.lt.s32.totalorder %s19, 2
        %s197 = scalar_select %p196, %s19, 2
        %s198 = smul.addr %s197, 48
        %s199 = smul.addr %s198, 4
        %s200 = scalar_lea.vmem %s3, %s199
      $region28: #{_forward_impl.1} parent=11 // pred_fallthru
        _
    $region12: #{_forward_impl.1} parent=5 // pred_fallthru
      _
    %p201 = scmp.lt.s32.totalorder %s10, 3
    // Predicated region
    $region29: #{_forward_impl.1} parent=5 // pred_check
      %p202 = pneg %p201
    $region30: #{_forward_impl.1} parent=5 // pred_check_branch
      %204 = sbr.rel (%p202) target = $region32
    $region31: #{_forward_impl.1} parent=5 // pred_region
      _
    $region32: #{_forward_impl.1} parent=5 // pred_fallthru
      _
    %p205 = scmp.le.s32.totalorder 1, %s10
    %p206 = scmp.lt.s32.totalorder %s10, 4
    %p207 = pnand %p205, %p206
    %p208 = pneg %p207
    // Predicated region
    $region33: #{_forward_impl.1} parent=5 // pred_check
      _
    $region34: #{_forward_impl.1} parent=5 // pred_check_branch
      %210 = sbr.rel (%p207) target = $region36
    $region35: #{_forward_impl.1} parent=5 // pred_region
      %s211 = ssub.s32 %s10, 1
      %s212 = smul.u32 50, %s20
      %p213 = scmp.lt.s32.totalorder %s212, 49
      %s214 = scalar_select %p213, %s212, 49
      %s215 = smul.addr %s214, 4
      %s216 = scalar_lea.vmem %s0, %s215
      %p217 = pneg %p48
      %p218 = pneg %p45
      %p219 = scmp.lt.s32.totalorder %s19, 2
      %s220 = scalar_select %p219, %s19, 2
      %s221 = smul.addr %s220, 64
      %s222 = smul.addr %s221, 4
      %s223 = scalar_lea.vmem %s1, %s222
      %p224 = pneg %p74
      %p225 = pneg %p71
      %p226 = scmp.lt.s32.totalorder %s19, 2
      %s227 = scalar_select %p226, %s19, 2
      %s228 = smul.addr %s227, 3
      %s229 = scalar_lea.vmem %s2, %s228
      %p230 = pneg %p100
      %p231 = pneg %p97
      %p232 = scmp.lt.s32.totalorder %s19, 2
      %s233 = scalar_select %p232, %s19, 2
      %s234 = smul.addr %s233, 48
      %s235 = smul.addr %s234, 4
      %s236 = scalar_lea.vmem %s3, %s235
      %p237 = pneg %p126
      %p238 = pneg %p123
      %p239 = pneg %p154
      %p240 = pneg %p151
      %s241 = smul.u32 50, %s20
      %p242 = scmp.lt.s32.totalorder %s19, 2
      %s243 = scalar_select %p242, %s19, 2
      %p244 = scmp.lt.s32.totalorder %s241, 49
      %s245 = scalar_select %p244, %s241, 49
      %s246 = smul.addr %s245, 3
      %s247 = smul.addr %s243, 150
      %s248 = sadd.s32 %s246, %s247
      %s249 = smul.addr %s248, 4
      %s250 = scalar_lea.vmem %s4, %s249
      %s251 = smul.u32 50, %s20
      %p252 = scmp.lt.s32.totalorder %s251, 49
      %s253 = scalar_select %p252, %s251, 49
      %s254 = smul.addr %s253, 4
      %s255 = scalar_lea.vmem %s0, %s254
      %s256 = smul.u32 50, %s20
      %p257 = scmp.lt.s32.totalorder %s19, 2
      %s258 = scalar_select %p257, %s19, 2
      %s259 = smul.addr %s258, 64
      %s260 = smul.addr %s259, 4
      %s261 = scalar_lea.vmem %s1, %s260
      %p262 = scmp.lt.s32.totalorder %s19, 2
      %s263 = scalar_select %p262, %s19, 2
      %s264 = smul.addr %s263, 3
      %s265 = scalar_lea.vmem %s2, %s264
      %p266 = scmp.lt.s32.totalorder %s19, 2
      %s267 = scalar_select %p266, %s19, 2
      %s268 = smul.addr %s267, 48
      %s269 = smul.addr %s268, 4
      %s270 = scalar_lea.vmem %s3, %s269
      %s271 = smul.u32 50, %s20
      %p272 = scmp.lt.s32.totalorder %s19, 2
      %s273 = scalar_select %p272, %s19, 2
      %p274 = scmp.lt.s32.totalorder %s271, 49
      %s275 = scalar_select %p274, %s271, 49
      %s276 = smul.addr %s275, 3
      %s277 = smul.addr %s273, 150
      %s278 = sadd.s32 %s276, %s277
      %s279 = smul.addr %s278, 4
      %s280 = scalar_lea.vmem %s4, %s279
      %s281 = smul.u32 50, %s20
      %v283 = vld [vmem:[%s255] sm:$0xf]
      %v284 = vld [vmem:[%s255 + $0x4] sm:$0xf]
      %v285 = vld [vmem:[%s255 + $0x8] sm:$0xf]
      %v286 = vld [vmem:[%s255 + $0xc] sm:$0xf]
      %v287 = vld [vmem:[%s255 + $0x10] sm:$0xf]
      %v288 = vld [vmem:[%s255 + $0x14] sm:$0xf]
      %v289 = vld [vmem:[%s255 + $0x18] sm:$0xf]
      %v290 = vld [vmem:[%s255 + $0x1c] sm:$0xf]
      %v291 = vld [vmem:[%s255 + $0x20] sm:$0xf]
      %v292 = vld [vmem:[%s255 + $0x24] sm:$0xf]
      %v293 = vld [vmem:[%s255 + $0x28] sm:$0xf]
      %v294 = vld [vmem:[%s255 + $0x2c] sm:$0xf]
      %v295 = vld [vmem:[%s255 + $0x30] sm:$0xf]
      %v296 = vld [vmem:[%s255 + $0x34] sm:$0xf]
      %v297 = vld [vmem:[%s255 + $0x38] sm:$0xf]
      %v298 = vld [vmem:[%s255 + $0x3c] sm:$0xf]
      %v299 = vld [vmem:[%s255 + $0x40] sm:$0xf]
      %v300 = vld [vmem:[%s255 + $0x44] sm:$0xf]
      %v301 = vld [vmem:[%s255 + $0x48] sm:$0xf]
      %v302 = vld [vmem:[%s255 + $0x4c] sm:$0xf]
      %v303 = vld [vmem:[%s255 + $0x50] sm:$0xf]
      %v304 = vld [vmem:[%s255 + $0x54] sm:$0xf]
      %v305 = vld [vmem:[%s255 + $0x58] sm:$0xf]
      %v306 = vld [vmem:[%s255 + $0x5c] sm:$0xf]
      %v307 = vld [vmem:[%s255 + $0x60] sm:$0xf]
      %v308 = vld [vmem:[%s255 + $0x64] sm:$0xf]
      %v309 = vld [vmem:[%s255 + $0x68] sm:$0xf]
      %v310 = vld [vmem:[%s255 + $0x6c] sm:$0xf]
      %v311 = vld [vmem:[%s255 + $0x70] sm:$0xf]
      %v312 = vld [vmem:[%s255 + $0x74] sm:$0xf]
      %v313 = vld [vmem:[%s255 + $0x78] sm:$0xf]
      %v314 = vld [vmem:[%s255 + $0x7c] sm:$0xf]
      %v315 = vld [vmem:[%s255 + $0x80] sm:$0xf]
      %v316 = vld [vmem:[%s255 + $0x84] sm:$0xf]
      %v317 = vld [vmem:[%s255 + $0x88] sm:$0xf]
      %v318 = vld [vmem:[%s255 + $0x8c] sm:$0xf]
      %v319 = vld [vmem:[%s255 + $0x90] sm:$0xf]
      %v320 = vld [vmem:[%s255 + $0x94] sm:$0xf]
      %v321 = vld [vmem:[%s255 + $0x98] sm:$0xf]
      %v322 = vld [vmem:[%s255 + $0x9c] sm:$0xf]
      %v323 = vld [vmem:[%s255 + $0xa0] sm:$0xf]
      %v324 = vld [vmem:[%s255 + $0xa4] sm:$0xf]
      %v325 = vld [vmem:[%s255 + $0xa8] sm:$0xf]
      %v326 = vld [vmem:[%s255 + $0xac] sm:$0xf]
      %v327 = vld [vmem:[%s255 + $0xb0] sm:$0xf]
      %v328 = vld [vmem:[%s255 + $0xb4] sm:$0xf]
      %v329 = vld [vmem:[%s255 + $0xb8] sm:$0xf]
      %v330 = vld [vmem:[%s255 + $0xbc] sm:$0xf]
      %v331 = vld [vmem:[%s255 + $0xc0] sm:$0xf]
      %v332 = vld [vmem:[%s255 + $0xc4] sm:$0xf]
      %v333 = vld [vmem:[%s261] sm:$0xff]
      %v334 = vld [vmem:[%s261 + $0x8] sm:$0xff]
      %v335 = vld [vmem:[%s261 + $0x10] sm:$0xff]
      %v336 = vld [vmem:[%s261 + $0x18] sm:$0xff]
      %v337 = vld [vmem:[%s261 + $0x20] sm:$0xff]
      %v338 = vld [vmem:[%s261 + $0x28] sm:$0xff]
      %v339 = vld [vmem:[%s261 + $0x30] sm:$0xff]
      %v340 = vld [vmem:[%s261 + $0x38] sm:$0xff]
      %v341 = vld [vmem:[%s261 + $0x40] sm:$0xff]
      %v342 = vld [vmem:[%s261 + $0x48] sm:$0xff]
      %v343 = vld [vmem:[%s261 + $0x50] sm:$0xff]
      %v344 = vld [vmem:[%s261 + $0x58] sm:$0xff]
      %v345 = vld [vmem:[%s261 + $0x60] sm:$0xff]
      %v346 = vld [vmem:[%s261 + $0x68] sm:$0xff]
      %v347 = vld [vmem:[%s261 + $0x70] sm:$0xff]
      %v348 = vld [vmem:[%s261 + $0x78] sm:$0xff]
      %v349 = vld [vmem:[%s261 + $0x80] sm:$0xff]
      %v350 = vld [vmem:[%s261 + $0x88] sm:$0xff]
      %v351 = vld [vmem:[%s261 + $0x90] sm:$0xff]
      %v352 = vld [vmem:[%s261 + $0x98] sm:$0xff]
      %v353 = vld [vmem:[%s261 + $0xa0] sm:$0xff]
      %v354 = vld [vmem:[%s261 + $0xa8] sm:$0xff]
      %v355 = vld [vmem:[%s261 + $0xb0] sm:$0xff]
      %v356 = vld [vmem:[%s261 + $0xb8] sm:$0xff]
      %v357 = vld [vmem:[%s261 + $0xc0] sm:$0xff]
      %v358 = vld [vmem:[%s261 + $0xc8] sm:$0xff]
      %v359 = vld [vmem:[%s261 + $0xd0] sm:$0xff]
      %v360 = vld [vmem:[%s261 + $0xd8] sm:$0xff]
      %v361 = vld [vmem:[%s261 + $0xe0] sm:$0xff]
      %v362 = vld [vmem:[%s261 + $0xe8] sm:$0xff]
      %v363 = vld [vmem:[%s261 + $0xf0] sm:$0xff]
      %v364 = vld [vmem:[%s261 + $0xf8] sm:$0xff]
      %v415 = vunpack.c.l.b16 %v283
      %v416 = vunpack.c.l.b16 %v284
      %v417 = vunpack.c.l.b16 %v285
      %v418 = vunpack.c.l.b16 %v286
      %v419 = vunpack.c.l.b16 %v287
      %v420 = vunpack.c.l.b16 %v288
      %v421 = vunpack.c.l.b16 %v289
      %v422 = vunpack.c.l.b16 %v290
      %v423 = vunpack.c.l.b16 %v291
      %v424 = vunpack.c.l.b16 %v292
      %v425 = vunpack.c.l.b16 %v293
      %v426 = vunpack.c.l.b16 %v294
      %v427 = vunpack.c.l.b16 %v295
      %v428 = vunpack.c.l.b16 %v296
      %v429 = vunpack.c.l.b16 %v297
      %v430 = vunpack.c.l.b16 %v298
      %v431 = vunpack.c.l.b16 %v299
      %v432 = vunpack.c.l.b16 %v300
      %v433 = vunpack.c.l.b16 %v301
      %v434 = vunpack.c.l.b16 %v302
      %v435 = vunpack.c.l.b16 %v303
      %v436 = vunpack.c.l.b16 %v304
      %v437 = vunpack.c.l.b16 %v305
      %v438 = vunpack.c.l.b16 %v306
      %v439 = vunpack.c.l.b16 %v307
      %v440 = vunpack.c.l.b16 %v308
      %v441 = vunpack.c.l.b16 %v309
      %v442 = vunpack.c.l.b16 %v310
      %v443 = vunpack.c.l.b16 %v311
      %v444 = vunpack.c.l.b16 %v312
      %v445 = vunpack.c.l.b16 %v313
      %v446 = vunpack.c.l.b16 %v314
      %v447 = vunpack.c.l.b16 %v315
      %v448 = vunpack.c.l.b16 %v316
      %v449 = vunpack.c.l.b16 %v317
      %v450 = vunpack.c.l.b16 %v318
      %v451 = vunpack.c.l.b16 %v319
      %v452 = vunpack.c.l.b16 %v320
      %v453 = vunpack.c.l.b16 %v321
      %v454 = vunpack.c.l.b16 %v322
      %v455 = vunpack.c.l.b16 %v323
      %v456 = vunpack.c.l.b16 %v324
      %v457 = vunpack.c.l.b16 %v325
      %v458 = vunpack.c.l.b16 %v326
      %v459 = vunpack.c.l.b16 %v327
      %v460 = vunpack.c.l.b16 %v328
      %v461 = vunpack.c.l.b16 %v329
      %v462 = vunpack.c.l.b16 %v330
      %v463 = vunpack.c.l.b16 %v331
      %v464 = vunpack.c.l.b16 %v332
      %v465 = vpack.c.b16 %v416, %v415
      %v466 = vpack.c.b16 %v418, %v417
      %v467 = vpack.c.b16 %v420, %v419
      %v468 = vpack.c.b16 %v422, %v421
      %v469 = vpack.c.b16 %v424, %v423
      %v470 = vpack.c.b16 %v426, %v425
      %v471 = vpack.c.b16 %v428, %v427
      %v472 = vpack.c.b16 %v430, %v429
      %v473 = vpack.c.b16 %v432, %v431
      %v474 = vpack.c.b16 %v434, %v433
      %v475 = vpack.c.b16 %v436, %v435
      %v476 = vpack.c.b16 %v438, %v437
      %v477 = vpack.c.b16 %v440, %v439
      %v478 = vpack.c.b16 %v442, %v441
      %v479 = vpack.c.b16 %v444, %v443
      %v480 = vpack.c.b16 %v446, %v445
      %v481 = vpack.c.b16 %v448, %v447
      %v482 = vpack.c.b16 %v450, %v449
      %v483 = vpack.c.b16 %v452, %v451
      %v484 = vpack.c.b16 %v454, %v453
      %v485 = vpack.c.b16 %v456, %v455
      %v486 = vpack.c.b16 %v458, %v457
      %v487 = vpack.c.b16 %v460, %v459
      %v488 = vpack.c.b16 %v462, %v461
      %v489 = vpack.c.b16 %v464, %v463
      %v547 = vunpack.c.l.b16 %v333
      %v548 = vunpack.c.h.b16 %v333
      %v549 = vunpack.c.l.b16 %v334
      %v550 = vunpack.c.h.b16 %v334
      %v551 = vunpack.c.l.b16 %v335
      %v552 = vunpack.c.h.b16 %v335
      %v553 = vunpack.c.l.b16 %v336
      %v554 = vunpack.c.h.b16 %v336
      %v555 = vunpack.c.l.b16 %v337
      %v556 = vunpack.c.h.b16 %v337
      %v557 = vunpack.c.l.b16 %v338
      %v558 = vunpack.c.h.b16 %v338
      %v559 = vunpack.c.l.b16 %v339
      %v560 = vunpack.c.h.b16 %v339
      %v561 = vunpack.c.l.b16 %v340
      %v562 = vunpack.c.h.b16 %v340
      %v563 = vunpack.c.l.b16 %v341
      %v564 = vunpack.c.h.b16 %v341
      %v565 = vunpack.c.l.b16 %v342
      %v566 = vunpack.c.h.b16 %v342
      %v567 = vunpack.c.l.b16 %v343
      %v568 = vunpack.c.h.b16 %v343
      %v569 = vunpack.c.l.b16 %v344
      %v570 = vunpack.c.h.b16 %v344
      %v571 = vunpack.c.l.b16 %v345
      %v572 = vunpack.c.h.b16 %v345
      %v573 = vunpack.c.l.b16 %v346
      %v574 = vunpack.c.h.b16 %v346
      %v575 = vunpack.c.l.b16 %v347
      %v576 = vunpack.c.h.b16 %v347
      %v577 = vunpack.c.l.b16 %v348
      %v578 = vunpack.c.h.b16 %v348
      %v579 = vunpack.c.l.b16 %v349
      %v580 = vunpack.c.h.b16 %v349
      %v581 = vunpack.c.l.b16 %v350
      %v582 = vunpack.c.h.b16 %v350
      %v583 = vunpack.c.l.b16 %v351
      %v584 = vunpack.c.h.b16 %v351
      %v585 = vunpack.c.l.b16 %v352
      %v586 = vunpack.c.h.b16 %v352
      %v587 = vunpack.c.l.b16 %v353
      %v588 = vunpack.c.h.b16 %v353
      %v589 = vunpack.c.l.b16 %v354
      %v590 = vunpack.c.h.b16 %v354
      %v591 = vunpack.c.l.b16 %v355
      %v592 = vunpack.c.h.b16 %v355
      %v593 = vunpack.c.l.b16 %v356
      %v594 = vunpack.c.h.b16 %v356
      %v595 = vunpack.c.l.b16 %v357
      %v596 = vunpack.c.h.b16 %v357
      %v597 = vunpack.c.l.b16 %v358
      %v598 = vunpack.c.h.b16 %v358
      %v599 = vunpack.c.l.b16 %v359
      %v600 = vunpack.c.h.b16 %v359
      %v601 = vunpack.c.l.b16 %v360
      %v602 = vunpack.c.h.b16 %v360
      %v603 = vunpack.c.l.b16 %v361
      %v604 = vunpack.c.h.b16 %v361
      %v605 = vunpack.c.l.b16 %v362
      %v606 = vunpack.c.h.b16 %v362
      %v607 = vunpack.c.l.b16 %v363
      %v608 = vunpack.c.h.b16 %v363
      %v609 = vunpack.c.l.b16 %v364
      %v610 = vunpack.c.h.b16 %v364
      %v611 = vpack.c.b16 %v551, %v547
      %v612 = vpack.c.b16 %v552, %v548
      %v613 = vpack.c.b16 %v553, %v549
      %v614 = vpack.c.b16 %v554, %v550
      %v615 = vpack.c.b16 %v559, %v555
      %v616 = vpack.c.b16 %v560, %v556
      %v617 = vpack.c.b16 %v561, %v557
      %v618 = vpack.c.b16 %v562, %v558
      %v619 = vpack.c.b16 %v567, %v563
      %v620 = vpack.c.b16 %v568, %v564
      %v621 = vpack.c.b16 %v569, %v565
      %v622 = vpack.c.b16 %v570, %v566
      %v623 = vpack.c.b16 %v575, %v571
      %v624 = vpack.c.b16 %v576, %v572
      %v625 = vpack.c.b16 %v577, %v573
      %v626 = vpack.c.b16 %v578, %v574
      %v627 = vpack.c.b16 %v583, %v579
      %v628 = vpack.c.b16 %v584, %v580
      %v629 = vpack.c.b16 %v585, %v581
      %v630 = vpack.c.b16 %v586, %v582
      %v631 = vpack.c.b16 %v591, %v587
      %v632 = vpack.c.b16 %v592, %v588
      %v633 = vpack.c.b16 %v593, %v589
      %v634 = vpack.c.b16 %v594, %v590
      %v635 = vpack.c.b16 %v599, %v595
      %v636 = vpack.c.b16 %v600, %v596
      %v637 = vpack.c.b16 %v601, %v597
      %v638 = vpack.c.b16 %v602, %v598
      %v639 = vpack.c.b16 %v607, %v603
      %v640 = vpack.c.b16 %v608, %v604
      %v641 = vpack.c.b16 %v609, %v605
      %v642 = vpack.c.b16 %v610, %v606
      %675 = vmatprep.subr.bf16.mxu0 %v612
      %676 = vmatpush1.bf16.msra.mxu0 %v611
      %677 = vmatprep.subr.bf16.mxu0 %v616
      %678 = vmatpush1.bf16.msra.mxu0 %v615
      %679 = vmatprep.subr.bf16.mxu0 %v620
      %680 = vmatpush1.bf16.msra.mxu0 %v619
      %681 = vmatprep.subr.bf16.mxu0 %v624
      %682 = vmatpush1.bf16.msra.mxu0 %v623
      %683 = vmatprep.subr.bf16.mxu0 %v628
      %684 = vmatpush1.bf16.msra.mxu0 %v627
      %685 = vmatprep.subr.bf16.mxu0 %v632
      %686 = vmatpush1.bf16.msra.mxu0 %v631
      %687 = vmatprep.subr.bf16.mxu0 %v636
      %688 = vmatpush1.bf16.msra.mxu0 %v635
      %689 = vmatprep.subr.bf16.mxu0 %v640
      %690 = vmatpush1.bf16.msra.mxu0 %v639
      %691 = vmatprep.subr.bf16.mxu0 0
      %692 = vmatpush1.bf16.msra.mxu0 0
      %693 = vmatprep.subr.bf16.mxu0 0
      %694 = vmatpush1.bf16.msra.mxu0 0
      %695 = vmatprep.subr.bf16.mxu0 0
      %696 = vmatpush1.bf16.msra.mxu0 0
      %697 = vmatprep.subr.bf16.mxu0 0
      %698 = vmatpush1.bf16.msra.mxu0 0
      %699 = vmatprep.subr.bf16.mxu0 0
      %700 = vmatpush1.bf16.msra.mxu0 0
      %701 = vmatprep.subr.bf16.mxu0 0
      %702 = vmatpush1.bf16.msra.mxu0 0
      %703 = vmatprep.subr.bf16.mxu0 0
      %704 = vmatpush1.bf16.msra.mxu0 0
      %705 = vmatprep.subr.bf16.mxu0 0
      %706 = vmatpush1.bf16.msra.mxu0 0
      %707 = vmatprep.mubr.bf16.mxu0 0
      %708 = vmatmul.mubr.bf16.gmra.mrb[0].mxu0 %v465
      %v709 = vpop.f32.mrb[0].mxu0
      %v710 = vadd.f32 0.0, %v709
      %v711 = vpop.f32.mrb[0].mxu0
      %v712 = vadd.f32 0.0, %v711
      %v713 = vpop.f32.mrb[0].mxu0
      %v714 = vadd.f32 0.0, %v713
      %v715 = vpop.f32.mrb[0].mxu0
      %v716 = vadd.f32 0.0, %v715
      %717 = vmatprep.mubr.bf16.mxu0 0
      %718 = vmatmul.mubr.bf16.gmra.mrb[0].mxu0 %v466
      %v719 = vpop.f32.mrb[0].mxu0
      %v720 = vadd.f32 0.0, %v719
      %v721 = vpop.f32.mrb[0].mxu0
      %v722 = vadd.f32 0.0, %v721
      %v723 = vpop.f32.mrb[0].mxu0
      %v724 = vadd.f32 0.0, %v723
      %v725 = vpop.f32.mrb[0].mxu0
      %v726 = vadd.f32 0.0, %v725
      %727 = vmatprep.mubr.bf16.mxu0 0
      %728 = vmatmul.mubr.bf16.gmra.mrb[0].mxu0 %v467
      %v729 = vpop.f32.mrb[0].mxu0
      %v730 = vadd.f32 0.0, %v729
      %v731 = vpop.f32.mrb[0].mxu0
      %v732 = vadd.f32 0.0, %v731
      %v733 = vpop.f32.mrb[0].mxu0
      %v734 = vadd.f32 0.0, %v733
      %v735 = vpop.f32.mrb[0].mxu0
      %v736 = vadd.f32 0.0, %v735
      %737 = vmatprep.mubr.bf16.mxu0 0
      %738 = vmatmul.mubr.bf16.gmra.mrb[0].mxu0 %v468
      %v739 = vpop.f32.mrb[0].mxu0
      %v740 = vadd.f32 0.0, %v739
      %v741 = vpop.f32.mrb[0].mxu0
      %v742 = vadd.f32 0.0, %v741
      %v743 = vpop.f32.mrb[0].mxu0
      %v744 = vadd.f32 0.0, %v743
      %v745 = vpop.f32.mrb[0].mxu0
      %v746 = vadd.f32 0.0, %v745
      %747 = vmatprep.mubr.bf16.mxu0 0
      %748 = vmatmul.mubr.bf16.gmra.mrb[0].mxu0 %v469
      %v749 = vpop.f32.mrb[0].mxu0
      %v750 = vadd.f32 0.0, %v749
      %v751 = vpop.f32.mrb[0].mxu0
      %v752 = vadd.f32 0.0, %v751
      %v753 = vpop.f32.mrb[0].mxu0
      %v754 = vadd.f32 0.0, %v753
      %v755 = vpop.f32.mrb[0].mxu0
      %v756 = vadd.f32 0.0, %v755
      %757 = vmatprep.mubr.bf16.mxu0 0
      %758 = vmatmul.mubr.bf16.gmra.mrb[0].mxu0 %v470
      %v759 = vpop.f32.mrb[0].mxu0
      %v760 = vadd.f32 0.0, %v759
      %v761 = vpop.f32.mrb[0].mxu0
      %v762 = vadd.f32 0.0, %v761
      %v763 = vpop.f32.mrb[0].mxu0
      %v764 = vadd.f32 0.0, %v763
      %v765 = vpop.f32.mrb[0].mxu0
      %v766 = vadd.f32 0.0, %v765
      %767 = vmatprep.mubr.bf16.mxu0 0
      %768 = vmatmul.mubr.bf16.gmra.mrb[0].mxu0 %v471
      %v769 = vpop.f32.mrb[0].mxu0
      %v770 = vadd.f32 0.0, %v769
      %v771 = vpop.f32.mrb[0].mxu0
      %v772 = vadd.f32 0.0, %v771
      %v773 = vpop.f32.mrb[0].mxu0
      %v774 = vadd.f32 0.0, %v773
      %v775 = vpop.f32.mrb[0].mxu0
      %v776 = vadd.f32 0.0, %v775
      %777 = vmatprep.mubr.bf16.mxu0 0
      %778 = vmatmul.mubr.bf16.gmra.mrb[0].mxu0 %v472
      %v779 = vpop.f32.mrb[0].mxu0
      %v780 = vadd.f32 0.0, %v779
      %v781 = vpop.f32.mrb[0].mxu0
      %v782 = vadd.f32 0.0, %v781
      %v783 = vpop.f32.mrb[0].mxu0
      %v784 = vadd.f32 0.0, %v783
      %v785 = vpop.f32.mrb[0].mxu0
      %v786 = vadd.f32 0.0, %v785
      %787 = vmatprep.mubr.bf16.mxu0 0
      %788 = vmatmul.mubr.bf16.gmra.mrb[0].mxu0 %v473
      %v789 = vpop.f32.mrb[0].mxu0
      %v790 = vadd.f32 0.0, %v789
      %v791 = vpop.f32.mrb[0].mxu0
      %v792 = vadd.f32 0.0, %v791
      %v793 = vpop.f32.mrb[0].mxu0
      %v794 = vadd.f32 0.0, %v793
      %v795 = vpop.f32.mrb[0].mxu0
      %v796 = vadd.f32 0.0, %v795
      %797 = vmatprep.mubr.bf16.mxu0 0
      %798 = vmatmul.mubr.bf16.gmra.mrb[0].mxu0 %v474
      %v799 = vpop.f32.mrb[0].mxu0
      %v800 = vadd.f32 0.0, %v799
      %v801 = vpop.f32.mrb[0].mxu0
      %v802 = vadd.f32 0.0, %v801
      %v803 = vpop.f32.mrb[0].mxu0
      %v804 = vadd.f32 0.0, %v803
      %v805 = vpop.f32.mrb[0].mxu0
      %v806 = vadd.f32 0.0, %v805
      %807 = vmatprep.mubr.bf16.mxu0 0
      %808 = vmatmul.mubr.bf16.gmra.mrb[0].mxu0 %v475
      %v809 = vpop.f32.mrb[0].mxu0
      %v810 = vadd.f32 0.0, %v809
      %v811 = vpop.f32.mrb[0].mxu0
      %v812 = vadd.f32 0.0, %v811
      %v813 = vpop.f32.mrb[0].mxu0
      %v814 = vadd.f32 0.0, %v813
      %v815 = vpop.f32.mrb[0].mxu0
      %v816 = vadd.f32 0.0, %v815
      %817 = vmatprep.mubr.bf16.mxu0 0
      %818 = vmatmul.mubr.bf16.gmra.mrb[0].mxu0 %v476
      %v819 = vpop.f32.mrb[0].mxu0
      %v820 = vadd.f32 0.0, %v819
      %v821 = vpop.f32.mrb[0].mxu0
      %v822 = vadd.f32 0.0, %v821
      %v823 = vpop.f32.mrb[0].mxu0
      %v824 = vadd.f32 0.0, %v823
      %v825 = vpop.f32.mrb[0].mxu0
      %v826 = vadd.f32 0.0, %v825
      %827 = vmatprep.mubr.bf16.mxu0 0
      %828 = vmatmul.mubr.bf16.gmra.mrb[0].mxu0 %v477
      %v829 = vpop.f32.mrb[0].mxu0
      %v830 = vadd.f32 0.0, %v829
      %v831 = vpop.f32.mrb[0].mxu0
      %v832 = vadd.f32 0.0, %v831
      %v833 = vpop.f32.mrb[0].mxu0
      %v834 = vadd.f32 0.0, %v833
      %v835 = vpop.f32.mrb[0].mxu0
      %v836 = vadd.f32 0.0, %v835
      %837 = vmatprep.mubr.bf16.mxu0 0
      %838 = vmatmul.mubr.bf16.gmra.mrb[0].mxu0 %v478
      %v839 = vpop.f32.mrb[0].mxu0
      %v840 = vadd.f32 0.0, %v839
      %v841 = vpop.f32.mrb[0].mxu0
      %v842 = vadd.f32 0.0, %v841
      %v843 = vpop.f32.mrb[0].mxu0
      %v844 = vadd.f32 0.0, %v843
      %v845 = vpop.f32.mrb[0].mxu0
      %v846 = vadd.f32 0.0, %v845
      %847 = vmatprep.mubr.bf16.mxu0 0
      %848 = vmatmul.mubr.bf16.gmra.mrb[0].mxu0 %v479
      %v849 = vpop.f32.mrb[0].mxu0
      %v850 = vadd.f32 0.0, %v849
      %v851 = vpop.f32.mrb[0].mxu0
      %v852 = vadd.f32 0.0, %v851
      %v853 = vpop.f32.mrb[0].mxu0
      %v854 = vadd.f32 0.0, %v853
      %v855 = vpop.f32.mrb[0].mxu0
      %v856 = vadd.f32 0.0, %v855
      %857 = vmatprep.mubr.bf16.mxu0 0
      %858 = vmatmul.mubr.bf16.gmra.mrb[0].mxu0 %v480
      %v859 = vpop.f32.mrb[0].mxu0
      %v860 = vadd.f32 0.0, %v859
      %v861 = vpop.f32.mrb[0].mxu0
      %v862 = vadd.f32 0.0, %v861
      %v863 = vpop.f32.mrb[0].mxu0
      %v864 = vadd.f32 0.0, %v863
      %v865 = vpop.f32.mrb[0].mxu0
      %v866 = vadd.f32 0.0, %v865
      %867 = vmatprep.mubr.bf16.mxu0 0
      %868 = vmatmul.mubr.bf16.gmra.mrb[0].mxu0 %v481
      %v869 = vpop.f32.mrb[0].mxu0
      %v870 = vadd.f32 0.0, %v869
      %v871 = vpop.f32.mrb[0].mxu0
      %v872 = vadd.f32 0.0, %v871
      %v873 = vpop.f32.mrb[0].mxu0
      %v874 = vadd.f32 0.0, %v873
      %v875 = vpop.f32.mrb[0].mxu0
      %v876 = vadd.f32 0.0, %v875
      %877 = vmatprep.mubr.bf16.mxu0 0
      %878 = vmatmul.mubr.bf16.gmra.mrb[0].mxu0 %v482
      %v879 = vpop.f32.mrb[0].mxu0
      %v880 = vadd.f32 0.0, %v879
      %v881 = vpop.f32.mrb[0].mxu0
      %v882 = vadd.f32 0.0, %v881
      %v883 = vpop.f32.mrb[0].mxu0
      %v884 = vadd.f32 0.0, %v883
      %v885 = vpop.f32.mrb[0].mxu0
      %v886 = vadd.f32 0.0, %v885
      %887 = vmatprep.mubr.bf16.mxu0 0
      %888 = vmatmul.mubr.bf16.gmra.mrb[0].mxu0 %v483
      %v889 = vpop.f32.mrb[0].mxu0
      %v890 = vadd.f32 0.0, %v889
      %v891 = vpop.f32.mrb[0].mxu0
      %v892 = vadd.f32 0.0, %v891
      %v893 = vpop.f32.mrb[0].mxu0
      %v894 = vadd.f32 0.0, %v893
      %v895 = vpop.f32.mrb[0].mxu0
      %v896 = vadd.f32 0.0, %v895
      %897 = vmatprep.mubr.bf16.mxu0 0
      %898 = vmatmul.mubr.bf16.gmra.mrb[0].mxu0 %v484
      %v899 = vpop.f32.mrb[0].mxu0
      %v900 = vadd.f32 0.0, %v899
      %v901 = vpop.f32.mrb[0].mxu0
      %v902 = vadd.f32 0.0, %v901
      %v903 = vpop.f32.mrb[0].mxu0
      %v904 = vadd.f32 0.0, %v903
      %v905 = vpop.f32.mrb[0].mxu0
      %v906 = vadd.f32 0.0, %v905
      %907 = vmatprep.mubr.bf16.mxu0 0
      %908 = vmatmul.mubr.bf16.gmra.mrb[0].mxu0 %v485
      %v909 = vpop.f32.mrb[0].mxu0
      %v910 = vadd.f32 0.0, %v909
      %v911 = vpop.f32.mrb[0].mxu0
      %v912 = vadd.f32 0.0, %v911
      %v913 = vpop.f32.mrb[0].mxu0
      %v914 = vadd.f32 0.0, %v913
      %v915 = vpop.f32.mrb[0].mxu0
      %v916 = vadd.f32 0.0, %v915
      %917 = vmatprep.mubr.bf16.mxu0 0
      %918 = vmatmul.mubr.bf16.gmra.mrb[0].mxu0 %v486
      %v919 = vpop.f32.mrb[0].mxu0
      %v920 = vadd.f32 0.0, %v919
      %v921 = vpop.f32.mrb[0].mxu0
      %v922 = vadd.f32 0.0, %v921
      %v923 = vpop.f32.mrb[0].mxu0
      %v924 = vadd.f32 0.0, %v923
      %v925 = vpop.f32.mrb[0].mxu0
      %v926 = vadd.f32 0.0, %v925
      %927 = vmatprep.mubr.bf16.mxu0 0
      %928 = vmatmul.mubr.bf16.gmra.mrb[0].mxu0 %v487
      %v929 = vpop.f32.mrb[0].mxu0
      %v930 = vadd.f32 0.0, %v929
      %v931 = vpop.f32.mrb[0].mxu0
      %v932 = vadd.f32 0.0, %v931
      %v933 = vpop.f32.mrb[0].mxu0
      %v934 = vadd.f32 0.0, %v933
      %v935 = vpop.f32.mrb[0].mxu0
      %v936 = vadd.f32 0.0, %v935
      %937 = vmatprep.mubr.bf16.mxu0 0
      %938 = vmatmul.mubr.bf16.gmra.mrb[0].mxu0 %v488
      %v939 = vpop.f32.mrb[0].mxu0
      %v940 = vadd.f32 0.0, %v939
      %v941 = vpop.f32.mrb[0].mxu0
      %v942 = vadd.f32 0.0, %v941
      %v943 = vpop.f32.mrb[0].mxu0
      %v944 = vadd.f32 0.0, %v943
      %v945 = vpop.f32.mrb[0].mxu0
      %v946 = vadd.f32 0.0, %v945
      %947 = vmatprep.mubr.bf16.mxu0 0
      %948 = vmatmul.mubr.bf16.gmra.mrb[0].mxu0 %v489
      %v949 = vpop.f32.mrb[0].mxu0
      %v950 = vadd.f32 0.0, %v949
      %v951 = vpop.f32.mrb[0].mxu0
      %v952 = vadd.f32 0.0, %v951
      %v953 = vpop.f32.mrb[0].mxu0
      %v954 = vadd.f32 0.0, %v953
      %v955 = vpop.f32.mrb[0].mxu0
      %v956 = vadd.f32 0.0, %v955
      %957 = vdwg.mxu0
      %958 = vmatprep.subr.bf16.mxu0 %v614
      %959 = vmatpush1.bf16.msra.mxu0 %v613
      %960 = vmatprep.subr.bf16.mxu0 %v618
      %961 = vmatpush1.bf16.msra.mxu0 %v617
      %962 = vmatprep.subr.bf16.mxu0 %v622
      %963 = vmatpush1.bf16.msra.mxu0 %v621
      %964 = vmatprep.subr.bf16.mxu0 %v626
      %965 = vmatpush1.bf16.msra.mxu0 %v625
      %966 = vmatprep.subr.bf16.mxu0 %v630
      %967 = vmatpush1.bf16.msra.mxu0 %v629
      %968 = vmatprep.subr.bf16.mxu0 %v634
      %969 = vmatpush1.bf16.msra.mxu0 %v633
      %970 = vmatprep.subr.bf16.mxu0 %v638
      %971 = vmatpush1.bf16.msra.mxu0 %v637
      %972 = vmatprep.subr.bf16.mxu0 %v642
      %973 = vmatpush1.bf16.msra.mxu0 %v641
      %974 = vmatprep.subr.bf16.mxu0 0
      %975 = vmatpush1.bf16.msra.mxu0 0
      %976 = vmatprep.subr.bf16.mxu0 0
      %977 = vmatpush1.bf16.msra.mxu0 0
      %978 = vmatprep.subr.bf16.mxu0 0
      %979 = vmatpush1.bf16.msra.mxu0 0
      %980 = vmatprep.subr.bf16.mxu0 0
      %981 = vmatpush1.bf16.msra.mxu0 0
      %982 = vmatprep.subr.bf16.mxu0 0
      %983 = vmatpush1.bf16.msra.mxu0 0
      %984 = vmatprep.subr.bf16.mxu0 0
      %985 = vmatpush1.bf16.msra.mxu0 0
      %986 = vmatprep.subr.bf16.mxu0 0
      %987 = vmatpush1.bf16.msra.mxu0 0
      %988 = vmatprep.subr.bf16.mxu0 0
      %989 = vmatpush1.bf16.msra.mxu0 0
      %990 = vmatprep.mubr.bf16.mxu0 0
      %991 = vmatmul.mubr.bf16.gmra.mrb[0].mxu0 %v465
      %v992 = vpop.f32.mrb[0].mxu0
      %v993 = vadd.f32 0.0, %v992
      %v994 = vpop.f32.mrb[0].mxu0
      %v995 = vadd.f32 0.0, %v994
      %v996 = vpop.f32.mrb[0].mxu0
      %v997 = vadd.f32 0.0, %v996
      %v998 = vpop.f32.mrb[0].mxu0
      %v999 = vadd.f32 0.0, %v998
      %1000 = vmatprep.mubr.bf16.mxu0 0
      %1001 = vmatmul.mubr.bf16.gmra.mrb[0].mxu0 %v466
      %v1002 = vpop.f32.mrb[0].mxu0
      %v1003 = vadd.f32 0.0, %v1002
      %v1004 = vpop.f32.mrb[0].mxu0
      %v1005 = vadd.f32 0.0, %v1004
      %v1006 = vpop.f32.mrb[0].mxu0
      %v1007 = vadd.f32 0.0, %v1006
      %v1008 = vpop.f32.mrb[0].mxu0
      %v1009 = vadd.f32 0.0, %v1008
      %1010 = vmatprep.mubr.bf16.mxu0 0
      %1011 = vmatmul.mubr.bf16.gmra.mrb[0].mxu0 %v467
      %v1012 = vpop.f32.mrb[0].mxu0
      %v1013 = vadd.f32 0.0, %v1012
      %v1014 = vpop.f32.mrb[0].mxu0
      %v1015 = vadd.f32 0.0, %v1014
      %v1016 = vpop.f32.mrb[0].mxu0
      %v1017 = vadd.f32 0.0, %v1016
      %v1018 = vpop.f32.mrb[0].mxu0
      %v1019 = vadd.f32 0.0, %v1018
      %1020 = vmatprep.mubr.bf16.mxu0 0
      %1021 = vmatmul.mubr.bf16.gmra.mrb[0].mxu0 %v468
      %v1022 = vpop.f32.mrb[0].mxu0
      %v1023 = vadd.f32 0.0, %v1022
      %v1024 = vpop.f32.mrb[0].mxu0
      %v1025 = vadd.f32 0.0, %v1024
      %v1026 = vpop.f32.mrb[0].mxu0
      %v1027 = vadd.f32 0.0, %v1026
      %v1028 = vpop.f32.mrb[0].mxu0
      %v1029 = vadd.f32 0.0, %v1028
      %1030 = vmatprep.mubr.bf16.mxu0 0
      %1031 = vmatmul.mubr.bf16.gmra.mrb[0].mxu0 %v469
      %v1032 = vpop.f32.mrb[0].mxu0
      %v1033 = vadd.f32 0.0, %v1032
      %v1034 = vpop.f32.mrb[0].mxu0
      %v1035 = vadd.f32 0.0, %v1034
      %v1036 = vpop.f32.mrb[0].mxu0
      %v1037 = vadd.f32 0.0, %v1036
      %v1038 = vpop.f32.mrb[0].mxu0
      %v1039 = vadd.f32 0.0, %v1038
      %1040 = vmatprep.mubr.bf16.mxu0 0
      %1041 = vmatmul.mubr.bf16.gmra.mrb[0].mxu0 %v470
      %v1042 = vpop.f32.mrb[0].mxu0
      %v1043 = vadd.f32 0.0, %v1042
      %v1044 = vpop.f32.mrb[0].mxu0
      %v1045 = vadd.f32 0.0, %v1044
      %v1046 = vpop.f32.mrb[0].mxu0
      %v1047 = vadd.f32 0.0, %v1046
      %v1048 = vpop.f32.mrb[0].mxu0
      %v1049 = vadd.f32 0.0, %v1048
      %1050 = vmatprep.mubr.bf16.mxu0 0
      %1051 = vmatmul.mubr.bf16.gmra.mrb[0].mxu0 %v471
      %v1052 = vpop.f32.mrb[0].mxu0
      %v1053 = vadd.f32 0.0, %v1052
      %v1054 = vpop.f32.mrb[0].mxu0
      %v1055 = vadd.f32 0.0, %v1054
      %v1056 = vpop.f32.mrb[0].mxu0
      %v1057 = vadd.f32 0.0, %v1056
      %v1058 = vpop.f32.mrb[0].mxu0
      %v1059 = vadd.f32 0.0, %v1058
      %1060 = vmatprep.mubr.bf16.mxu0 0
      %1061 = vmatmul.mubr.bf16.gmra.mrb[0].mxu0 %v472
      %v1062 = vpop.f32.mrb[0].mxu0
      %v1063 = vadd.f32 0.0, %v1062
      %v1064 = vpop.f32.mrb[0].mxu0
      %v1065 = vadd.f32 0.0, %v1064
      %v1066 = vpop.f32.mrb[0].mxu0
      %v1067 = vadd.f32 0.0, %v1066
      %v1068 = vpop.f32.mrb[0].mxu0
      %v1069 = vadd.f32 0.0, %v1068
      %1070 = vmatprep.mubr.bf16.mxu0 0
      %1071 = vmatmul.mubr.bf16.gmra.mrb[0].mxu0 %v473
      %v1072 = vpop.f32.mrb[0].mxu0
      %v1073 = vadd.f32 0.0, %v1072
      %v1074 = vpop.f32.mrb[0].mxu0
      %v1075 = vadd.f32 0.0, %v1074
      %v1076 = vpop.f32.mrb[0].mxu0
      %v1077 = vadd.f32 0.0, %v1076
      %v1078 = vpop.f32.mrb[0].mxu0
      %v1079 = vadd.f32 0.0, %v1078
      %1080 = vmatprep.mubr.bf16.mxu0 0
      %1081 = vmatmul.mubr.bf16.gmra.mrb[0].mxu0 %v474
      %v1082 = vpop.f32.mrb[0].mxu0
      %v1083 = vadd.f32 0.0, %v1082
      %v1084 = vpop.f32.mrb[0].mxu0
      %v1085 = vadd.f32 0.0, %v1084
      %v1086 = vpop.f32.mrb[0].mxu0
      %v1087 = vadd.f32 0.0, %v1086
      %v1088 = vpop.f32.mrb[0].mxu0
      %v1089 = vadd.f32 0.0, %v1088
      %1090 = vmatprep.mubr.bf16.mxu0 0
      %1091 = vmatmul.mubr.bf16.gmra.mrb[0].mxu0 %v475
      %v1092 = vpop.f32.mrb[0].mxu0
      %v1093 = vadd.f32 0.0, %v1092
      %v1094 = vpop.f32.mrb[0].mxu0
      %v1095 = vadd.f32 0.0, %v1094
      %v1096 = vpop.f32.mrb[0].mxu0
      %v1097 = vadd.f32 0.0, %v1096
      %v1098 = vpop.f32.mrb[0].mxu0
      %v1099 = vadd.f32 0.0, %v1098
      %1100 = vmatprep.mubr.bf16.mxu0 0
      %1101 = vmatmul.mubr.bf16.gmra.mrb[0].mxu0 %v476
      %v1102 = vpop.f32.mrb[0].mxu0
      %v1103 = vadd.f32 0.0, %v1102
      %v1104 = vpop.f32.mrb[0].mxu0
      %v1105 = vadd.f32 0.0, %v1104
      %v1106 = vpop.f32.mrb[0].mxu0
      %v1107 = vadd.f32 0.0, %v1106
      %v1108 = vpop.f32.mrb[0].mxu0
      %v1109 = vadd.f32 0.0, %v1108
      %1110 = vmatprep.mubr.bf16.mxu0 0
      %1111 = vmatmul.mubr.bf16.gmra.mrb[0].mxu0 %v477
      %v1112 = vpop.f32.mrb[0].mxu0
      %v1113 = vadd.f32 0.0, %v1112
      %v1114 = vpop.f32.mrb[0].mxu0
      %v1115 = vadd.f32 0.0, %v1114
      %v1116 = vpop.f32.mrb[0].mxu0
      %v1117 = vadd.f32 0.0, %v1116
      %v1118 = vpop.f32.mrb[0].mxu0
      %v1119 = vadd.f32 0.0, %v1118
      %1120 = vmatprep.mubr.bf16.mxu0 0
      %1121 = vmatmul.mubr.bf16.gmra.mrb[0].mxu0 %v478
      %v1122 = vpop.f32.mrb[0].mxu0
      %v1123 = vadd.f32 0.0, %v1122
      %v1124 = vpop.f32.mrb[0].mxu0
      %v1125 = vadd.f32 0.0, %v1124
      %v1126 = vpop.f32.mrb[0].mxu0
      %v1127 = vadd.f32 0.0, %v1126
      %v1128 = vpop.f32.mrb[0].mxu0
      %v1129 = vadd.f32 0.0, %v1128
      %1130 = vmatprep.mubr.bf16.mxu0 0
      %1131 = vmatmul.mubr.bf16.gmra.mrb[0].mxu0 %v479
      %v1132 = vpop.f32.mrb[0].mxu0
      %v1133 = vadd.f32 0.0, %v1132
      %v1134 = vpop.f32.mrb[0].mxu0
      %v1135 = vadd.f32 0.0, %v1134
      %v1136 = vpop.f32.mrb[0].mxu0
      %v1137 = vadd.f32 0.0, %v1136
      %v1138 = vpop.f32.mrb[0].mxu0
      %v1139 = vadd.f32 0.0, %v1138
      %1140 = vmatprep.mubr.bf16.mxu0 0
      %1141 = vmatmul.mubr.bf16.gmra.mrb[0].mxu0 %v480
      %v1142 = vpop.f32.mrb[0].mxu0
      %v1143 = vadd.f32 0.0, %v1142
      %v1144 = vpop.f32.mrb[0].mxu0
      %v1145 = vadd.f32 0.0, %v1144
      %v1146 = vpop.f32.mrb[0].mxu0
      %v1147 = vadd.f32 0.0, %v1146
      %v1148 = vpop.f32.mrb[0].mxu0
      %v1149 = vadd.f32 0.0, %v1148
      %1150 = vmatprep.mubr.bf16.mxu0 0
      %1151 = vmatmul.mubr.bf16.gmra.mrb[0].mxu0 %v481
      %v1152 = vpop.f32.mrb[0].mxu0
      %v1153 = vadd.f32 0.0, %v1152
      %v1154 = vpop.f32.mrb[0].mxu0
      %v1155 = vadd.f32 0.0, %v1154
      %v1156 = vpop.f32.mrb[0].mxu0
      %v1157 = vadd.f32 0.0, %v1156
      %v1158 = vpop.f32.mrb[0].mxu0
      %v1159 = vadd.f32 0.0, %v1158
      %1160 = vmatprep.mubr.bf16.mxu0 0
      %1161 = vmatmul.mubr.bf16.gmra.mrb[0].mxu0 %v482
      %v1162 = vpop.f32.mrb[0].mxu0
      %v1163 = vadd.f32 0.0, %v1162
      %v1164 = vpop.f32.mrb[0].mxu0
      %v1165 = vadd.f32 0.0, %v1164
      %v1166 = vpop.f32.mrb[0].mxu0
      %v1167 = vadd.f32 0.0, %v1166
      %v1168 = vpop.f32.mrb[0].mxu0
      %v1169 = vadd.f32 0.0, %v1168
      %1170 = vmatprep.mubr.bf16.mxu0 0
      %1171 = vmatmul.mubr.bf16.gmra.mrb[0].mxu0 %v483
      %v1172 = vpop.f32.mrb[0].mxu0
      %v1173 = vadd.f32 0.0, %v1172
      %v1174 = vpop.f32.mrb[0].mxu0
      %v1175 = vadd.f32 0.0, %v1174
      %v1176 = vpop.f32.mrb[0].mxu0
      %v1177 = vadd.f32 0.0, %v1176
      %v1178 = vpop.f32.mrb[0].mxu0
      %v1179 = vadd.f32 0.0, %v1178
      %1180 = vmatprep.mubr.bf16.mxu0 0
      %1181 = vmatmul.mubr.bf16.gmra.mrb[0].mxu0 %v484
      %v1182 = vpop.f32.mrb[0].mxu0
      %v1183 = vadd.f32 0.0, %v1182
      %v1184 = vpop.f32.mrb[0].mxu0
      %v1185 = vadd.f32 0.0, %v1184
      %v1186 = vpop.f32.mrb[0].mxu0
      %v1187 = vadd.f32 0.0, %v1186
      %v1188 = vpop.f32.mrb[0].mxu0
      %v1189 = vadd.f32 0.0, %v1188
      %1190 = vmatprep.mubr.bf16.mxu0 0
      %1191 = vmatmul.mubr.bf16.gmra.mrb[0].mxu0 %v485
      %v1192 = vpop.f32.mrb[0].mxu0
      %v1193 = vadd.f32 0.0, %v1192
      %v1194 = vpop.f32.mrb[0].mxu0
      %v1195 = vadd.f32 0.0, %v1194
      %v1196 = vpop.f32.mrb[0].mxu0
      %v1197 = vadd.f32 0.0, %v1196
      %v1198 = vpop.f32.mrb[0].mxu0
      %v1199 = vadd.f32 0.0, %v1198
      %1200 = vmatprep.mubr.bf16.mxu0 0
      %1201 = vmatmul.mubr.bf16.gmra.mrb[0].mxu0 %v486
      %v1202 = vpop.f32.mrb[0].mxu0
      %v1203 = vadd.f32 0.0, %v1202
      %v1204 = vpop.f32.mrb[0].mxu0
      %v1205 = vadd.f32 0.0, %v1204
      %v1206 = vpop.f32.mrb[0].mxu0
      %v1207 = vadd.f32 0.0, %v1206
      %v1208 = vpop.f32.mrb[0].mxu0
      %v1209 = vadd.f32 0.0, %v1208
      %1210 = vmatprep.mubr.bf16.mxu0 0
      %1211 = vmatmul.mubr.bf16.gmra.mrb[0].mxu0 %v487
      %v1212 = vpop.f32.mrb[0].mxu0
      %v1213 = vadd.f32 0.0, %v1212
      %v1214 = vpop.f32.mrb[0].mxu0
      %v1215 = vadd.f32 0.0, %v1214
      %v1216 = vpop.f32.mrb[0].mxu0
      %v1217 = vadd.f32 0.0, %v1216
      %v1218 = vpop.f32.mrb[0].mxu0
      %v1219 = vadd.f32 0.0, %v1218
      %1220 = vmatprep.mubr.bf16.mxu0 0
      %1221 = vmatmul.mubr.bf16.gmra.mrb[0].mxu0 %v488
      %v1222 = vpop.f32.mrb[0].mxu0
      %v1223 = vadd.f32 0.0, %v1222
      %v1224 = vpop.f32.mrb[0].mxu0
      %v1225 = vadd.f32 0.0, %v1224
      %v1226 = vpop.f32.mrb[0].mxu0
      %v1227 = vadd.f32 0.0, %v1226
      %v1228 = vpop.f32.mrb[0].mxu0
      %v1229 = vadd.f32 0.0, %v1228
      %1230 = vmatprep.mubr.bf16.mxu0 0
      %1231 = vmatmul.mubr.bf16.gmra.mrb[0].mxu0 %v489
      %v1232 = vpop.f32.mrb[0].mxu0
      %v1233 = vadd.f32 0.0, %v1232
      %v1234 = vpop.f32.mrb[0].mxu0
      %v1235 = vadd.f32 0.0, %v1234
      %v1236 = vpop.f32.mrb[0].mxu0
      %v1237 = vadd.f32 0.0, %v1236
      %v1238 = vpop.f32.mrb[0].mxu0
      %v1239 = vadd.f32 0.0, %v1238
      %1240 = vdwg.mxu0
      %v1241 = vpack.c.bf16 %v999, %v995
      %v1242 = vpack.c.bf16 %v1009, %v1005
      %v1243 = vpack.c.bf16 %v1019, %v1015
      %v1244 = vpack.c.bf16 %v1029, %v1025
      %v1245 = vpack.c.bf16 %v1039, %v1035
      %v1246 = vpack.c.bf16 %v1049, %v1045
      %v1247 = vpack.c.bf16 %v1059, %v1055
      %v1248 = vpack.c.bf16 %v1069, %v1065
      %v1249 = vpack.c.bf16 %v1079, %v1075
      %v1250 = vpack.c.bf16 %v1089, %v1085
      %v1251 = vpack.c.bf16 %v1099, %v1095
      %v1252 = vpack.c.bf16 %v1109, %v1105
      %v1253 = vpack.c.bf16 %v1119, %v1115
      %v1254 = vpack.c.bf16 %v1129, %v1125
      %v1255 = vpack.c.bf16 %v1139, %v1135
      %v1256 = vpack.c.bf16 %v1149, %v1145
      %v1257 = vpack.c.bf16 %v1159, %v1155
      %v1258 = vpack.c.bf16 %v1169, %v1165
      %v1259 = vpack.c.bf16 %v1179, %v1175
      %v1260 = vpack.c.bf16 %v1189, %v1185
      %v1261 = vpack.c.bf16 %v1199, %v1195
      %v1262 = vpack.c.bf16 %v1209, %v1205
      %v1263 = vpack.c.bf16 %v1219, %v1215
      %v1264 = vpack.c.bf16 %v1229, %v1225
      %v1265 = vpack.c.bf16 %v1239, %v1235
      %v1266 = vld [vmem:[%s270] sm:$0xff]
      %v1267 = vld [vmem:[%s270 + $0x8] sm:$0xf]
      %v1268 = vld [vmem:[%s270 + $0xc] sm:$0xff]
      %v1269 = vld [vmem:[%s270 + $0x14] sm:$0xf]
      %v1270 = vld [vmem:[%s270 + $0x18] sm:$0xff]
      %v1271 = vld [vmem:[%s270 + $0x20] sm:$0xf]
      %v1272 = vld [vmem:[%s270 + $0x24] sm:$0xff]
      %v1273 = vld [vmem:[%s270 + $0x2c] sm:$0xf]
      %v1274 = vld [vmem:[%s270 + $0x30] sm:$0xff]
      %v1275 = vld [vmem:[%s270 + $0x38] sm:$0xf]
      %v1276 = vld [vmem:[%s270 + $0x3c] sm:$0xff]
      %v1277 = vld [vmem:[%s270 + $0x44] sm:$0xf]
      %v1278 = vld [vmem:[%s270 + $0x48] sm:$0xff]
      %v1279 = vld [vmem:[%s270 + $0x50] sm:$0xf]
      %v1280 = vld [vmem:[%s270 + $0x54] sm:$0xff]
      %v1281 = vld [vmem:[%s270 + $0x5c] sm:$0xf]
      %v1282 = vld [vmem:[%s270 + $0x60] sm:$0xff]
      %v1283 = vld [vmem:[%s270 + $0x68] sm:$0xf]
      %v1284 = vld [vmem:[%s270 + $0x6c] sm:$0xff]
      %v1285 = vld [vmem:[%s270 + $0x74] sm:$0xf]
      %v1286 = vld [vmem:[%s270 + $0x78] sm:$0xff]
      %v1287 = vld [vmem:[%s270 + $0x80] sm:$0xf]
      %v1288 = vld [vmem:[%s270 + $0x84] sm:$0xff]
      %v1289 = vld [vmem:[%s270 + $0x8c] sm:$0xf]
      %v1290 = vld [vmem:[%s270 + $0x90] sm:$0xff]
      %v1291 = vld [vmem:[%s270 + $0x98] sm:$0xf]
      %v1292 = vld [vmem:[%s270 + $0x9c] sm:$0xff]
      %v1293 = vld [vmem:[%s270 + $0xa4] sm:$0xf]
      %v1294 = vld [vmem:[%s270 + $0xa8] sm:$0xff]
      %v1295 = vld [vmem:[%s270 + $0xb0] sm:$0xf]
      %v1296 = vld [vmem:[%s270 + $0xb4] sm:$0xff]
      %v1297 = vld [vmem:[%s270 + $0xbc] sm:$0xf]
      %v1330 = vunpack.c.l.b16 %v1266
      %v1331 = vunpack.c.h.b16 %v1266
      %v1332 = vunpack.c.l.b16 %v1267
      %v1333 = vunpack.c.l.b16 %v1268
      %v1334 = vunpack.c.h.b16 %v1268
      %v1335 = vunpack.c.l.b16 %v1269
      %v1336 = vunpack.c.l.b16 %v1270
      %v1337 = vunpack.c.h.b16 %v1270
      %v1338 = vunpack.c.l.b16 %v1271
      %v1339 = vunpack.c.l.b16 %v1272
      %v1340 = vunpack.c.h.b16 %v1272
      %v1341 = vunpack.c.l.b16 %v1273
      %v1342 = vunpack.c.l.b16 %v1274
      %v1343 = vunpack.c.h.b16 %v1274
      %v1344 = vunpack.c.l.b16 %v1275
      %v1345 = vunpack.c.l.b16 %v1276
      %v1346 = vunpack.c.h.b16 %v1276
      %v1347 = vunpack.c.l.b16 %v1277
      %v1348 = vunpack.c.l.b16 %v1278
      %v1349 = vunpack.c.h.b16 %v1278
      %v1350 = vunpack.c.l.b16 %v1279
      %v1351 = vunpack.c.l.b16 %v1280
      %v1352 = vunpack.c.h.b16 %v1280
      %v1353 = vunpack.c.l.b16 %v1281
      %v1354 = vunpack.c.l.b16 %v1282
      %v1355 = vunpack.c.h.b16 %v1282
      %v1356 = vunpack.c.l.b16 %v1283
      %v1357 = vunpack.c.l.b16 %v1284
      %v1358 = vunpack.c.h.b16 %v1284
      %v1359 = vunpack.c.l.b16 %v1285
      %v1360 = vunpack.c.l.b16 %v1286
      %v1361 = vunpack.c.h.b16 %v1286
      %v1362 = vunpack.c.l.b16 %v1287
      %v1363 = vunpack.c.l.b16 %v1288
      %v1364 = vunpack.c.h.b16 %v1288
      %v1365 = vunpack.c.l.b16 %v1289
      %v1366 = vunpack.c.l.b16 %v1290
      %v1367 = vunpack.c.h.b16 %v1290
      %v1368 = vunpack.c.l.b16 %v1291
      %v1369 = vunpack.c.l.b16 %v1292
      %v1370 = vunpack.c.h.b16 %v1292
      %v1371 = vunpack.c.l.b16 %v1293
      %v1372 = vunpack.c.l.b16 %v1294
      %v1373 = vunpack.c.h.b16 %v1294
      %v1374 = vunpack.c.l.b16 %v1295
      %v1375 = vunpack.c.l.b16 %v1296
      %v1376 = vunpack.c.h.b16 %v1296
      %v1377 = vunpack.c.l.b16 %v1297
      %v1378 = vpack.c.b16 %v1333, %v1330
      %v1379 = vpack.c.b16 %v1334, %v1331
      %v1380 = vpack.c.b16 %v1335, %v1332
      %v1381 = vpack.c.b16 %v1339, %v1336
      %v1382 = vpack.c.b16 %v1340, %v1337
      %v1383 = vpack.c.b16 %v1341, %v1338
      %v1384 = vpack.c.b16 %v1345, %v1342
      %v1385 = vpack.c.b16 %v1346, %v1343
      %v1386 = vpack.c.b16 %v1347, %v1344
      %v1387 = vpack.c.b16 %v1351, %v1348
      %v1388 = vpack.c.b16 %v1352, %v1349
      %v1389 = vpack.c.b16 %v1353, %v1350
      %v1390 = vpack.c.b16 %v1357, %v1354
      %v1391 = vpack.c.b16 %v1358, %v1355
      %v1392 = vpack.c.b16 %v1359, %v1356
      %v1393 = vpack.c.b16 %v1363, %v1360
      %v1394 = vpack.c.b16 %v1364, %v1361
      %v1395 = vpack.c.b16 %v1365, %v1362
      %v1396 = vpack.c.b16 %v1369, %v1366
      %v1397 = vpack.c.b16 %v1370, %v1367
      %v1398 = vpack.c.b16 %v1371, %v1368
      %v1399 = vpack.c.b16 %v1375, %v1372
      %v1400 = vpack.c.b16 %v1376, %v1373
      %v1401 = vpack.c.b16 %v1377, %v1374
      %1426 = vmatprep.subr.bf16.mxu0 %v1379
      %1427 = vmatpush1.bf16.msra.mxu0 %v1378
      %1428 = vmatprep.subr.bf16.mxu0 %v1382
      %1429 = vmatpush1.bf16.msra.mxu0 %v1381
      %1430 = vmatprep.subr.bf16.mxu0 %v1385
      %1431 = vmatpush1.bf16.msra.mxu0 %v1384
      %1432 = vmatprep.subr.bf16.mxu0 %v1388
      %1433 = vmatpush1.bf16.msra.mxu0 %v1387
      %1434 = vmatprep.subr.bf16.mxu0 %v1391
      %1435 = vmatpush1.bf16.msra.mxu0 %v1390
      %1436 = vmatprep.subr.bf16.mxu0 %v1394
      %1437 = vmatpush1.bf16.msra.mxu0 %v1393
      %1438 = vmatprep.subr.bf16.mxu0 %v1397
      %1439 = vmatpush1.bf16.msra.mxu0 %v1396
      %1440 = vmatprep.subr.bf16.mxu0 %v1400
      %1441 = vmatpush1.bf16.msra.mxu0 %v1399
      %1442 = vmatprep.subr.bf16.mxu0 0
      %1443 = vmatpush1.bf16.msra.mxu0 0
      %1444 = vmatprep.subr.bf16.mxu0 0
      %1445 = vmatpush1.bf16.msra.mxu0 0
      %1446 = vmatprep.subr.bf16.mxu0 0
      %1447 = vmatpush1.bf16.msra.mxu0 0
      %1448 = vmatprep.subr.bf16.mxu0 0
      %1449 = vmatpush1.bf16.msra.mxu0 0
      %1450 = vmatprep.subr.bf16.mxu0 0
      %1451 = vmatpush1.bf16.msra.mxu0 0
      %1452 = vmatprep.subr.bf16.mxu0 0
      %1453 = vmatpush1.bf16.msra.mxu0 0
      %1454 = vmatprep.subr.bf16.mxu0 0
      %1455 = vmatpush1.bf16.msra.mxu0 0
      %1456 = vmatprep.subr.bf16.mxu0 0
      %1457 = vmatpush1.bf16.msra.mxu0 0
      %1458 = vmatprep.mubr.bf16.mxu0 0
      %1459 = vmatmul.mubr.bf16.gmra.mrb[0].mxu0 %v1241
      %v1460 = vpop.f32.mrb[0].mxu0
      %v1461 = vadd.f32 0.0, %v1460
      %v1462 = vpop.f32.mrb[0].mxu0
      %v1463 = vadd.f32 0.0, %v1462
      %v1464 = vpop.f32.mrb[0].mxu0
      %v1465 = vadd.f32 0.0, %v1464
      %v1466 = vpop.f32.mrb[0].mxu0
      %v1467 = vadd.f32 0.0, %v1466
      %1468 = vmatprep.mubr.bf16.mxu0 0
      %1469 = vmatmul.mubr.bf16.gmra.mrb[0].mxu0 %v1242
      %v1470 = vpop.f32.mrb[0].mxu0
      %v1471 = vadd.f32 0.0, %v1470
      %v1472 = vpop.f32.mrb[0].mxu0
      %v1473 = vadd.f32 0.0, %v1472
      %v1474 = vpop.f32.mrb[0].mxu0
      %v1475 = vadd.f32 0.0, %v1474
      %v1476 = vpop.f32.mrb[0].mxu0
      %v1477 = vadd.f32 0.0, %v1476
      %1478 = vmatprep.mubr.bf16.mxu0 0
      %1479 = vmatmul.mubr.bf16.gmra.mrb[0].mxu0 %v1243
      %v1480 = vpop.f32.mrb[0].mxu0
      %v1481 = vadd.f32 0.0, %v1480
      %v1482 = vpop.f32.mrb[0].mxu0
      %v1483 = vadd.f32 0.0, %v1482
      %v1484 = vpop.f32.mrb[0].mxu0
      %v1485 = vadd.f32 0.0, %v1484
      %v1486 = vpop.f32.mrb[0].mxu0
      %v1487 = vadd.f32 0.0, %v1486
      %1488 = vmatprep.mubr.bf16.mxu0 0
      %1489 = vmatmul.mubr.bf16.gmra.mrb[0].mxu0 %v1244
      %v1490 = vpop.f32.mrb[0].mxu0
      %v1491 = vadd.f32 0.0, %v1490
      %v1492 = vpop.f32.mrb[0].mxu0
      %v1493 = vadd.f32 0.0, %v1492
      %v1494 = vpop.f32.mrb[0].mxu0
      %v1495 = vadd.f32 0.0, %v1494
      %v1496 = vpop.f32.mrb[0].mxu0
      %v1497 = vadd.f32 0.0, %v1496
      %1498 = vmatprep.mubr.bf16.mxu0 0
      %1499 = vmatmul.mubr.bf16.gmra.mrb[0].mxu0 %v1245
      %v1500 = vpop.f32.mrb[0].mxu0
      %v1501 = vadd.f32 0.0, %v1500
      %v1502 = vpop.f32.mrb[0].mxu0
      %v1503 = vadd.f32 0.0, %v1502
      %v1504 = vpop.f32.mrb[0].mxu0
      %v1505 = vadd.f32 0.0, %v1504
      %v1506 = vpop.f32.mrb[0].mxu0
      %v1507 = vadd.f32 0.0, %v1506
      %1508 = vmatprep.mubr.bf16.mxu0 0
      %1509 = vmatmul.mubr.bf16.gmra.mrb[0].mxu0 %v1246
      %v1510 = vpop.f32.mrb[0].mxu0
      %v1511 = vadd.f32 0.0, %v1510
      %v1512 = vpop.f32.mrb[0].mxu0
      %v1513 = vadd.f32 0.0, %v1512
      %v1514 = vpop.f32.mrb[0].mxu0
      %v1515 = vadd.f32 0.0, %v1514
      %v1516 = vpop.f32.mrb[0].mxu0
      %v1517 = vadd.f32 0.0, %v1516
      %1518 = vmatprep.mubr.bf16.mxu0 0
      %1519 = vmatmul.mubr.bf16.gmra.mrb[0].mxu0 %v1247
      %v1520 = vpop.f32.mrb[0].mxu0
      %v1521 = vadd.f32 0.0, %v1520
      %v1522 = vpop.f32.mrb[0].mxu0
      %v1523 = vadd.f32 0.0, %v1522
      %v1524 = vpop.f32.mrb[0].mxu0
      %v1525 = vadd.f32 0.0, %v1524
      %v1526 = vpop.f32.mrb[0].mxu0
      %v1527 = vadd.f32 0.0, %v1526
      %1528 = vmatprep.mubr.bf16.mxu0 0
      %1529 = vmatmul.mubr.bf16.gmra.mrb[0].mxu0 %v1248
      %v1530 = vpop.f32.mrb[0].mxu0
      %v1531 = vadd.f32 0.0, %v1530
      %v1532 = vpop.f32.mrb[0].mxu0
      %v1533 = vadd.f32 0.0, %v1532
      %v1534 = vpop.f32.mrb[0].mxu0
      %v1535 = vadd.f32 0.0, %v1534
      %v1536 = vpop.f32.mrb[0].mxu0
      %v1537 = vadd.f32 0.0, %v1536
      %1538 = vmatprep.mubr.bf16.mxu0 0
      %1539 = vmatmul.mubr.bf16.gmra.mrb[0].mxu0 %v1249
      %v1540 = vpop.f32.mrb[0].mxu0
      %v1541 = vadd.f32 0.0, %v1540
      %v1542 = vpop.f32.mrb[0].mxu0
      %v1543 = vadd.f32 0.0, %v1542
      %v1544 = vpop.f32.mrb[0].mxu0
      %v1545 = vadd.f32 0.0, %v1544
      %v1546 = vpop.f32.mrb[0].mxu0
      %v1547 = vadd.f32 0.0, %v1546
      %1548 = vmatprep.mubr.bf16.mxu0 0
      %1549 = vmatmul.mubr.bf16.gmra.mrb[0].mxu0 %v1250
      %v1550 = vpop.f32.mrb[0].mxu0
      %v1551 = vadd.f32 0.0, %v1550
      %v1552 = vpop.f32.mrb[0].mxu0
      %v1553 = vadd.f32 0.0, %v1552
      %v1554 = vpop.f32.mrb[0].mxu0
      %v1555 = vadd.f32 0.0, %v1554
      %v1556 = vpop.f32.mrb[0].mxu0
      %v1557 = vadd.f32 0.0, %v1556
      %1558 = vmatprep.mubr.bf16.mxu0 0
      %1559 = vmatmul.mubr.bf16.gmra.mrb[0].mxu0 %v1251
      %v1560 = vpop.f32.mrb[0].mxu0
      %v1561 = vadd.f32 0.0, %v1560
      %v1562 = vpop.f32.mrb[0].mxu0
      %v1563 = vadd.f32 0.0, %v1562
      %v1564 = vpop.f32.mrb[0].mxu0
      %v1565 = vadd.f32 0.0, %v1564
      %v1566 = vpop.f32.mrb[0].mxu0
      %v1567 = vadd.f32 0.0, %v1566
      %1568 = vmatprep.mubr.bf16.mxu0 0
      %1569 = vmatmul.mubr.bf16.gmra.mrb[0].mxu0 %v1252
      %v1570 = vpop.f32.mrb[0].mxu0
      %v1571 = vadd.f32 0.0, %v1570
      %v1572 = vpop.f32.mrb[0].mxu0
      %v1573 = vadd.f32 0.0, %v1572
      %v1574 = vpop.f32.mrb[0].mxu0
      %v1575 = vadd.f32 0.0, %v1574
      %v1576 = vpop.f32.mrb[0].mxu0
      %v1577 = vadd.f32 0.0, %v1576
      %1578 = vmatprep.mubr.bf16.mxu0 0
      %1579 = vmatmul.mubr.bf16.gmra.mrb[0].mxu0 %v1253
      %v1580 = vpop.f32.mrb[0].mxu0
      %v1581 = vadd.f32 0.0, %v1580
      %v1582 = vpop.f32.mrb[0].mxu0
      %v1583 = vadd.f32 0.0, %v1582
      %v1584 = vpop.f32.mrb[0].mxu0
      %v1585 = vadd.f32 0.0, %v1584
      %v1586 = vpop.f32.mrb[0].mxu0
      %v1587 = vadd.f32 0.0, %v1586
      %1588 = vmatprep.mubr.bf16.mxu0 0
      %1589 = vmatmul.mubr.bf16.gmra.mrb[0].mxu0 %v1254
      %v1590 = vpop.f32.mrb[0].mxu0
      %v1591 = vadd.f32 0.0, %v1590
      %v1592 = vpop.f32.mrb[0].mxu0
      %v1593 = vadd.f32 0.0, %v1592
      %v1594 = vpop.f32.mrb[0].mxu0
      %v1595 = vadd.f32 0.0, %v1594
      %v1596 = vpop.f32.mrb[0].mxu0
      %v1597 = vadd.f32 0.0, %v1596
      %1598 = vmatprep.mubr.bf16.mxu0 0
      %1599 = vmatmul.mubr.bf16.gmra.mrb[0].mxu0 %v1255
      %v1600 = vpop.f32.mrb[0].mxu0
      %v1601 = vadd.f32 0.0, %v1600
      %v1602 = vpop.f32.mrb[0].mxu0
      %v1603 = vadd.f32 0.0, %v1602
      %v1604 = vpop.f32.mrb[0].mxu0
      %v1605 = vadd.f32 0.0, %v1604
      %v1606 = vpop.f32.mrb[0].mxu0
      %v1607 = vadd.f32 0.0, %v1606
      %1608 = vmatprep.mubr.bf16.mxu0 0
      %1609 = vmatmul.mubr.bf16.gmra.mrb[0].mxu0 %v1256
      %v1610 = vpop.f32.mrb[0].mxu0
      %v1611 = vadd.f32 0.0, %v1610
      %v1612 = vpop.f32.mrb[0].mxu0
      %v1613 = vadd.f32 0.0, %v1612
      %v1614 = vpop.f32.mrb[0].mxu0
      %v1615 = vadd.f32 0.0, %v1614
      %v1616 = vpop.f32.mrb[0].mxu0
      %v1617 = vadd.f32 0.0, %v1616
      %1618 = vmatprep.mubr.bf16.mxu0 0
      %1619 = vmatmul.mubr.bf16.gmra.mrb[0].mxu0 %v1257
      %v1620 = vpop.f32.mrb[0].mxu0
      %v1621 = vadd.f32 0.0, %v1620
      %v1622 = vpop.f32.mrb[0].mxu0
      %v1623 = vadd.f32 0.0, %v1622
      %v1624 = vpop.f32.mrb[0].mxu0
      %v1625 = vadd.f32 0.0, %v1624
      %v1626 = vpop.f32.mrb[0].mxu0
      %v1627 = vadd.f32 0.0, %v1626
      %1628 = vmatprep.mubr.bf16.mxu0 0
      %1629 = vmatmul.mubr.bf16.gmra.mrb[0].mxu0 %v1258
      %v1630 = vpop.f32.mrb[0].mxu0
      %v1631 = vadd.f32 0.0, %v1630
      %v1632 = vpop.f32.mrb[0].mxu0
      %v1633 = vadd.f32 0.0, %v1632
      %v1634 = vpop.f32.mrb[0].mxu0
      %v1635 = vadd.f32 0.0, %v1634
      %v1636 = vpop.f32.mrb[0].mxu0
      %v1637 = vadd.f32 0.0, %v1636
      %1638 = vmatprep.mubr.bf16.mxu0 0
      %1639 = vmatmul.mubr.bf16.gmra.mrb[0].mxu0 %v1259
      %v1640 = vpop.f32.mrb[0].mxu0
      %v1641 = vadd.f32 0.0, %v1640
      %v1642 = vpop.f32.mrb[0].mxu0
      %v1643 = vadd.f32 0.0, %v1642
      %v1644 = vpop.f32.mrb[0].mxu0
      %v1645 = vadd.f32 0.0, %v1644
      %v1646 = vpop.f32.mrb[0].mxu0
      %v1647 = vadd.f32 0.0, %v1646
      %1648 = vmatprep.mubr.bf16.mxu0 0
      %1649 = vmatmul.mubr.bf16.gmra.mrb[0].mxu0 %v1260
      %v1650 = vpop.f32.mrb[0].mxu0
      %v1651 = vadd.f32 0.0, %v1650
      %v1652 = vpop.f32.mrb[0].mxu0
      %v1653 = vadd.f32 0.0, %v1652
      %v1654 = vpop.f32.mrb[0].mxu0
      %v1655 = vadd.f32 0.0, %v1654
      %v1656 = vpop.f32.mrb[0].mxu0
      %v1657 = vadd.f32 0.0, %v1656
      %1658 = vmatprep.mubr.bf16.mxu0 0
      %1659 = vmatmul.mubr.bf16.gmra.mrb[0].mxu0 %v1261
      %v1660 = vpop.f32.mrb[0].mxu0
      %v1661 = vadd.f32 0.0, %v1660
      %v1662 = vpop.f32.mrb[0].mxu0
      %v1663 = vadd.f32 0.0, %v1662
      %v1664 = vpop.f32.mrb[0].mxu0
      %v1665 = vadd.f32 0.0, %v1664
      %v1666 = vpop.f32.mrb[0].mxu0
      %v1667 = vadd.f32 0.0, %v1666
      %1668 = vmatprep.mubr.bf16.mxu0 0
      %1669 = vmatmul.mubr.bf16.gmra.mrb[0].mxu0 %v1262
      %v1670 = vpop.f32.mrb[0].mxu0
      %v1671 = vadd.f32 0.0, %v1670
      %v1672 = vpop.f32.mrb[0].mxu0
      %v1673 = vadd.f32 0.0, %v1672
      %v1674 = vpop.f32.mrb[0].mxu0
      %v1675 = vadd.f32 0.0, %v1674
      %v1676 = vpop.f32.mrb[0].mxu0
      %v1677 = vadd.f32 0.0, %v1676
      %1678 = vmatprep.mubr.bf16.mxu0 0
      %1679 = vmatmul.mubr.bf16.gmra.mrb[0].mxu0 %v1263
      %v1680 = vpop.f32.mrb[0].mxu0
      %v1681 = vadd.f32 0.0, %v1680
      %v1682 = vpop.f32.mrb[0].mxu0
      %v1683 = vadd.f32 0.0, %v1682
      %v1684 = vpop.f32.mrb[0].mxu0
      %v1685 = vadd.f32 0.0, %v1684
      %v1686 = vpop.f32.mrb[0].mxu0
      %v1687 = vadd.f32 0.0, %v1686
      %1688 = vmatprep.mubr.bf16.mxu0 0
      %1689 = vmatmul.mubr.bf16.gmra.mrb[0].mxu0 %v1264
      %v1690 = vpop.f32.mrb[0].mxu0
      %v1691 = vadd.f32 0.0, %v1690
      %v1692 = vpop.f32.mrb[0].mxu0
      %v1693 = vadd.f32 0.0, %v1692
      %v1694 = vpop.f32.mrb[0].mxu0
      %v1695 = vadd.f32 0.0, %v1694
      %v1696 = vpop.f32.mrb[0].mxu0
      %v1697 = vadd.f32 0.0, %v1696
      %1698 = vmatprep.mubr.bf16.mxu0 0
      %1699 = vmatmul.mubr.bf16.gmra.mrb[0].mxu0 %v1265
      %v1700 = vpop.f32.mrb[0].mxu0
      %v1701 = vadd.f32 0.0, %v1700
      %v1702 = vpop.f32.mrb[0].mxu0
      %v1703 = vadd.f32 0.0, %v1702
      %v1704 = vpop.f32.mrb[0].mxu0
      %v1705 = vadd.f32 0.0, %v1704
      %v1706 = vpop.f32.mrb[0].mxu0
      %v1707 = vadd.f32 0.0, %v1706
      %1708 = vdwg.mxu0
      %1709 = vmatprep.subr.bf16.mxu0 0
      %1710 = vmatpush1.bf16.msra.mxu0 %v1380
      %1711 = vmatprep.subr.bf16.mxu0 0
      %1712 = vmatpush1.bf16.msra.mxu0 %v1383
      %1713 = vmatprep.subr.bf16.mxu0 0
      %1714 = vmatpush1.bf16.msra.mxu0 %v1386
      %1715 = vmatprep.subr.bf16.mxu0 0
      %1716 = vmatpush1.bf16.msra.mxu0 %v1389
      %1717 = vmatprep.subr.bf16.mxu0 0
      %1718 = vmatpush1.bf16.msra.mxu0 %v1392
      %1719 = vmatprep.subr.bf16.mxu0 0
      %1720 = vmatpush1.bf16.msra.mxu0 %v1395
      %1721 = vmatprep.subr.bf16.mxu0 0
      %1722 = vmatpush1.bf16.msra.mxu0 %v1398
      %1723 = vmatprep.subr.bf16.mxu0 0
      %1724 = vmatpush1.bf16.msra.mxu0 %v1401
      %1725 = vmatprep.subr.bf16.mxu0 0
      %1726 = vmatpush1.bf16.msra.mxu0 0
      %1727 = vmatprep.subr.bf16.mxu0 0
      %1728 = vmatpush1.bf16.msra.mxu0 0
      %1729 = vmatprep.subr.bf16.mxu0 0
      %1730 = vmatpush1.bf16.msra.mxu0 0
      %1731 = vmatprep.subr.bf16.mxu0 0
      %1732 = vmatpush1.bf16.msra.mxu0 0
      %1733 = vmatprep.subr.bf16.mxu0 0
      %1734 = vmatpush1.bf16.msra.mxu0 0
      %1735 = vmatprep.subr.bf16.mxu0 0
      %1736 = vmatpush1.bf16.msra.mxu0 0
      %1737 = vmatprep.subr.bf16.mxu0 0
      %1738 = vmatpush1.bf16.msra.mxu0 0
      %1739 = vmatprep.subr.bf16.mxu0 0
      %1740 = vmatpush1.bf16.msra.mxu0 0
      %1741 = vmatprep.mubr.bf16.mxu0 0
      %1742 = vmatmul.mubr.bf16.gmra.mrb[0].mxu0 %v1241
      %v1743 = vpop.f32.mrb[0].mxu0
      %v1744 = vadd.f32 0.0, %v1743
      %v1745 = vpop.f32.mrb[0].mxu0
      %v1746 = vpop.f32.mrb[0].mxu0
      %v1747 = vadd.f32 0.0, %v1746
      %v1748 = vpop.f32.mrb[0].mxu0
      %1749 = vmatprep.mubr.bf16.mxu0 0
      %1750 = vmatmul.mubr.bf16.gmra.mrb[0].mxu0 %v1242
      %v1751 = vpop.f32.mrb[0].mxu0
      %v1752 = vadd.f32 0.0, %v1751
      %v1753 = vpop.f32.mrb[0].mxu0
      %v1754 = vpop.f32.mrb[0].mxu0
      %v1755 = vadd.f32 0.0, %v1754
      %v1756 = vpop.f32.mrb[0].mxu0
      %1757 = vmatprep.mubr.bf16.mxu0 0
      %1758 = vmatmul.mubr.bf16.gmra.mrb[0].mxu0 %v1243
      %v1759 = vpop.f32.mrb[0].mxu0
      %v1760 = vadd.f32 0.0, %v1759
      %v1761 = vpop.f32.mrb[0].mxu0
      %v1762 = vpop.f32.mrb[0].mxu0
      %v1763 = vadd.f32 0.0, %v1762
      %v1764 = vpop.f32.mrb[0].mxu0
      %1765 = vmatprep.mubr.bf16.mxu0 0
      %1766 = vmatmul.mubr.bf16.gmra.mrb[0].mxu0 %v1244
      %v1767 = vpop.f32.mrb[0].mxu0
      %v1768 = vadd.f32 0.0, %v1767
      %v1769 = vpop.f32.mrb[0].mxu0
      %v1770 = vpop.f32.mrb[0].mxu0
      %v1771 = vadd.f32 0.0, %v1770
      %v1772 = vpop.f32.mrb[0].mxu0
      %1773 = vmatprep.mubr.bf16.mxu0 0
      %1774 = vmatmul.mubr.bf16.gmra.mrb[0].mxu0 %v1245
      %v1775 = vpop.f32.mrb[0].mxu0
      %v1776 = vadd.f32 0.0, %v1775
      %v1777 = vpop.f32.mrb[0].mxu0
      %v1778 = vpop.f32.mrb[0].mxu0
      %v1779 = vadd.f32 0.0, %v1778
      %v1780 = vpop.f32.mrb[0].mxu0
      %1781 = vmatprep.mubr.bf16.mxu0 0
      %1782 = vmatmul.mubr.bf16.gmra.mrb[0].mxu0 %v1246
      %v1783 = vpop.f32.mrb[0].mxu0
      %v1784 = vadd.f32 0.0, %v1783
      %v1785 = vpop.f32.mrb[0].mxu0
      %v1786 = vpop.f32.mrb[0].mxu0
      %v1787 = vadd.f32 0.0, %v1786
      %v1788 = vpop.f32.mrb[0].mxu0
      %1789 = vmatprep.mubr.bf16.mxu0 0
      %1790 = vmatmul.mubr.bf16.gmra.mrb[0].mxu0 %v1247
      %v1791 = vpop.f32.mrb[0].mxu0
      %v1792 = vadd.f32 0.0, %v1791
      %v1793 = vpop.f32.mrb[0].mxu0
      %v1794 = vpop.f32.mrb[0].mxu0
      %v1795 = vadd.f32 0.0, %v1794
      %v1796 = vpop.f32.mrb[0].mxu0
      %1797 = vmatprep.mubr.bf16.mxu0 0
      %1798 = vmatmul.mubr.bf16.gmra.mrb[0].mxu0 %v1248
      %v1799 = vpop.f32.mrb[0].mxu0
      %v1800 = vadd.f32 0.0, %v1799
      %v1801 = vpop.f32.mrb[0].mxu0
      %v1802 = vpop.f32.mrb[0].mxu0
      %v1803 = vadd.f32 0.0, %v1802
      %v1804 = vpop.f32.mrb[0].mxu0
      %1805 = vmatprep.mubr.bf16.mxu0 0
      %1806 = vmatmul.mubr.bf16.gmra.mrb[0].mxu0 %v1249
      %v1807 = vpop.f32.mrb[0].mxu0
      %v1808 = vadd.f32 0.0, %v1807
      %v1809 = vpop.f32.mrb[0].mxu0
      %v1810 = vpop.f32.mrb[0].mxu0
      %v1811 = vadd.f32 0.0, %v1810
      %v1812 = vpop.f32.mrb[0].mxu0
      %1813 = vmatprep.mubr.bf16.mxu0 0
      %1814 = vmatmul.mubr.bf16.gmra.mrb[0].mxu0 %v1250
      %v1815 = vpop.f32.mrb[0].mxu0
      %v1816 = vadd.f32 0.0, %v1815
      %v1817 = vpop.f32.mrb[0].mxu0
      %v1818 = vpop.f32.mrb[0].mxu0
      %v1819 = vadd.f32 0.0, %v1818
      %v1820 = vpop.f32.mrb[0].mxu0
      %1821 = vmatprep.mubr.bf16.mxu0 0
      %1822 = vmatmul.mubr.bf16.gmra.mrb[0].mxu0 %v1251
      %v1823 = vpop.f32.mrb[0].mxu0
      %v1824 = vadd.f32 0.0, %v1823
      %v1825 = vpop.f32.mrb[0].mxu0
      %v1826 = vpop.f32.mrb[0].mxu0
      %v1827 = vadd.f32 0.0, %v1826
      %v1828 = vpop.f32.mrb[0].mxu0
      %1829 = vmatprep.mubr.bf16.mxu0 0
      %1830 = vmatmul.mubr.bf16.gmra.mrb[0].mxu0 %v1252
      %v1831 = vpop.f32.mrb[0].mxu0
      %v1832 = vadd.f32 0.0, %v1831
      %v1833 = vpop.f32.mrb[0].mxu0
      %v1834 = vpop.f32.mrb[0].mxu0
      %v1835 = vadd.f32 0.0, %v1834
      %v1836 = vpop.f32.mrb[0].mxu0
      %1837 = vmatprep.mubr.bf16.mxu0 0
      %1838 = vmatmul.mubr.bf16.gmra.mrb[0].mxu0 %v1253
      %v1839 = vpop.f32.mrb[0].mxu0
      %v1840 = vadd.f32 0.0, %v1839
      %v1841 = vpop.f32.mrb[0].mxu0
      %v1842 = vpop.f32.mrb[0].mxu0
      %v1843 = vadd.f32 0.0, %v1842
      %v1844 = vpop.f32.mrb[0].mxu0
      %1845 = vmatprep.mubr.bf16.mxu0 0
      %1846 = vmatmul.mubr.bf16.gmra.mrb[0].mxu0 %v1254
      %v1847 = vpop.f32.mrb[0].mxu0
      %v1848 = vadd.f32 0.0, %v1847
      %v1849 = vpop.f32.mrb[0].mxu0
      %v1850 = vpop.f32.mrb[0].mxu0
      %v1851 = vadd.f32 0.0, %v1850
      %v1852 = vpop.f32.mrb[0].mxu0
      %1853 = vmatprep.mubr.bf16.mxu0 0
      %1854 = vmatmul.mubr.bf16.gmra.mrb[0].mxu0 %v1255
      %v1855 = vpop.f32.mrb[0].mxu0
      %v1856 = vadd.f32 0.0, %v1855
      %v1857 = vpop.f32.mrb[0].mxu0
      %v1858 = vpop.f32.mrb[0].mxu0
      %v1859 = vadd.f32 0.0, %v1858
      %v1860 = vpop.f32.mrb[0].mxu0
      %1861 = vmatprep.mubr.bf16.mxu0 0
      %1862 = vmatmul.mubr.bf16.gmra.mrb[0].mxu0 %v1256
      %v1863 = vpop.f32.mrb[0].mxu0
      %v1864 = vadd.f32 0.0, %v1863
      %v1865 = vpop.f32.mrb[0].mxu0
      %v1866 = vpop.f32.mrb[0].mxu0
      %v1867 = vadd.f32 0.0, %v1866
      %v1868 = vpop.f32.mrb[0].mxu0
      %1869 = vmatprep.mubr.bf16.mxu0 0
      %1870 = vmatmul.mubr.bf16.gmra.mrb[0].mxu0 %v1257
      %v1871 = vpop.f32.mrb[0].mxu0
      %v1872 = vadd.f32 0.0, %v1871
      %v1873 = vpop.f32.mrb[0].mxu0
      %v1874 = vpop.f32.mrb[0].mxu0
      %v1875 = vadd.f32 0.0, %v1874
      %v1876 = vpop.f32.mrb[0].mxu0
      %1877 = vmatprep.mubr.bf16.mxu0 0
      %1878 = vmatmul.mubr.bf16.gmra.mrb[0].mxu0 %v1258
      %v1879 = vpop.f32.mrb[0].mxu0
      %v1880 = vadd.f32 0.0, %v1879
      %v1881 = vpop.f32.mrb[0].mxu0
      %v1882 = vpop.f32.mrb[0].mxu0
      %v1883 = vadd.f32 0.0, %v1882
      %v1884 = vpop.f32.mrb[0].mxu0
      %1885 = vmatprep.mubr.bf16.mxu0 0
      %1886 = vmatmul.mubr.bf16.gmra.mrb[0].mxu0 %v1259
      %v1887 = vpop.f32.mrb[0].mxu0
      %v1888 = vadd.f32 0.0, %v1887
      %v1889 = vpop.f32.mrb[0].mxu0
      %v1890 = vpop.f32.mrb[0].mxu0
      %v1891 = vadd.f32 0.0, %v1890
      %v1892 = vpop.f32.mrb[0].mxu0
      %1893 = vmatprep.mubr.bf16.mxu0 0
      %1894 = vmatmul.mubr.bf16.gmra.mrb[0].mxu0 %v1260
      %v1895 = vpop.f32.mrb[0].mxu0
      %v1896 = vadd.f32 0.0, %v1895
      %v1897 = vpop.f32.mrb[0].mxu0
      %v1898 = vpop.f32.mrb[0].mxu0
      %v1899 = vadd.f32 0.0, %v1898
      %v1900 = vpop.f32.mrb[0].mxu0
      %1901 = vmatprep.mubr.bf16.mxu0 0
      %1902 = vmatmul.mubr.bf16.gmra.mrb[0].mxu0 %v1261
      %v1903 = vpop.f32.mrb[0].mxu0
      %v1904 = vadd.f32 0.0, %v1903
      %v1905 = vpop.f32.mrb[0].mxu0
      %v1906 = vpop.f32.mrb[0].mxu0
      %v1907 = vadd.f32 0.0, %v1906
      %v1908 = vpop.f32.mrb[0].mxu0
      %1909 = vmatprep.mubr.bf16.mxu0 0
      %1910 = vmatmul.mubr.bf16.gmra.mrb[0].mxu0 %v1262
      %v1911 = vpop.f32.mrb[0].mxu0
      %v1912 = vadd.f32 0.0, %v1911
      %v1913 = vpop.f32.mrb[0].mxu0
      %v1914 = vpop.f32.mrb[0].mxu0
      %v1915 = vadd.f32 0.0, %v1914
      %v1916 = vpop.f32.mrb[0].mxu0
      %1917 = vmatprep.mubr.bf16.mxu0 0
      %1918 = vmatmul.mubr.bf16.gmra.mrb[0].mxu0 %v1263
      %v1919 = vpop.f32.mrb[0].mxu0
      %v1920 = vadd.f32 0.0, %v1919
      %v1921 = vpop.f32.mrb[0].mxu0
      %v1922 = vpop.f32.mrb[0].mxu0
      %v1923 = vadd.f32 0.0, %v1922
      %v1924 = vpop.f32.mrb[0].mxu0
      %1925 = vmatprep.mubr.bf16.mxu0 0
      %1926 = vmatmul.mubr.bf16.gmra.mrb[0].mxu0 %v1264
      %v1927 = vpop.f32.mrb[0].mxu0
      %v1928 = vadd.f32 0.0, %v1927
      %v1929 = vpop.f32.mrb[0].mxu0
      %v1930 = vpop.f32.mrb[0].mxu0
      %v1931 = vadd.f32 0.0, %v1930
      %v1932 = vpop.f32.mrb[0].mxu0
      %1933 = vmatprep.mubr.bf16.mxu0 0
      %1934 = vmatmul.mubr.bf16.gmra.mrb[0].mxu0 %v1265
      %v1935 = vpop.f32.mrb[0].mxu0
      %v1936 = vadd.f32 0.0, %v1935
      %v1937 = vpop.f32.mrb[0].mxu0
      %v1938 = vpop.f32.mrb[0].mxu0
      %v1939 = vadd.f32 0.0, %v1938
      %v1940 = vpop.f32.mrb[0].mxu0
      %1941 = vdwg.mxu0
      %v1942 = vadd.f32 %v710, %v1461
      %v1943 = vadd.f32 %v712, %v1463
      %v1944 = vadd.f32 %v993, %v1744
      %v1945 = vadd.f32 %v714, %v1465
      %v1946 = vadd.f32 %v716, %v1467
      %v1947 = vadd.f32 %v997, %v1747
      %v1948 = vadd.f32 %v720, %v1471
      %v1949 = vadd.f32 %v722, %v1473
      %v1950 = vadd.f32 %v1003, %v1752
      %v1951 = vadd.f32 %v724, %v1475
      %v1952 = vadd.f32 %v726, %v1477
      %v1953 = vadd.f32 %v1007, %v1755
      %v1954 = vadd.f32 %v730, %v1481
      %v1955 = vadd.f32 %v732, %v1483
      %v1956 = vadd.f32 %v1013, %v1760
      %v1957 = vadd.f32 %v734, %v1485
      %v1958 = vadd.f32 %v736, %v1487
      %v1959 = vadd.f32 %v1017, %v1763
      %v1960 = vadd.f32 %v740, %v1491
      %v1961 = vadd.f32 %v742, %v1493
      %v1962 = vadd.f32 %v1023, %v1768
      %v1963 = vadd.f32 %v744, %v1495
      %v1964 = vadd.f32 %v746, %v1497
      %v1965 = vadd.f32 %v1027, %v1771
      %v1966 = vadd.f32 %v750, %v1501
      %v1967 = vadd.f32 %v752, %v1503
      %v1968 = vadd.f32 %v1033, %v1776
      %v1969 = vadd.f32 %v754, %v1505
      %v1970 = vadd.f32 %v756, %v1507
      %v1971 = vadd.f32 %v1037, %v1779
      %v1972 = vadd.f32 %v760, %v1511
      %v1973 = vadd.f32 %v762, %v1513
      %v1974 = vadd.f32 %v1043, %v1784
      %v1975 = vadd.f32 %v764, %v1515
      %v1976 = vadd.f32 %v766, %v1517
      %v1977 = vadd.f32 %v1047, %v1787
      %v1978 = vadd.f32 %v770, %v1521
      %v1979 = vadd.f32 %v772, %v1523
      %v1980 = vadd.f32 %v1053, %v1792
      %v1981 = vadd.f32 %v774, %v1525
      %v1982 = vadd.f32 %v776, %v1527
      %v1983 = vadd.f32 %v1057, %v1795
      %v1984 = vadd.f32 %v780, %v1531
      %v1985 = vadd.f32 %v782, %v1533
      %v1986 = vadd.f32 %v1063, %v1800
      %v1987 = vadd.f32 %v784, %v1535
      %v1988 = vadd.f32 %v786, %v1537
      %v1989 = vadd.f32 %v1067, %v1803
      %v1990 = vadd.f32 %v790, %v1541
      %v1991 = vadd.f32 %v792, %v1543
      %v1992 = vadd.f32 %v1073, %v1808
      %v1993 = vadd.f32 %v794, %v1545
      %v1994 = vadd.f32 %v796, %v1547
      %v1995 = vadd.f32 %v1077, %v1811
      %v1996 = vadd.f32 %v800, %v1551
      %v1997 = vadd.f32 %v802, %v1553
      %v1998 = vadd.f32 %v1083, %v1816
      %v1999 = vadd.f32 %v804, %v1555
      %v2000 = vadd.f32 %v806, %v1557
      %v2001 = vadd.f32 %v1087, %v1819
      %v2002 = vadd.f32 %v810, %v1561
      %v2003 = vadd.f32 %v812, %v1563
      %v2004 = vadd.f32 %v1093, %v1824
      %v2005 = vadd.f32 %v814, %v1565
      %v2006 = vadd.f32 %v816, %v1567
      %v2007 = vadd.f32 %v1097, %v1827
      %v2008 = vadd.f32 %v820, %v1571
      %v2009 = vadd.f32 %v822, %v1573
      %v2010 = vadd.f32 %v1103, %v1832
      %v2011 = vadd.f32 %v824, %v1575
      %v2012 = vadd.f32 %v826, %v1577
      %v2013 = vadd.f32 %v1107, %v1835
      %v2014 = vadd.f32 %v830, %v1581
      %v2015 = vadd.f32 %v832, %v1583
      %v2016 = vadd.f32 %v1113, %v1840
      %v2017 = vadd.f32 %v834, %v1585
      %v2018 = vadd.f32 %v836, %v1587
      %v2019 = vadd.f32 %v1117, %v1843
      %v2020 = vadd.f32 %v840, %v1591
      %v2021 = vadd.f32 %v842, %v1593
      %v2022 = vadd.f32 %v1123, %v1848
      %v2023 = vadd.f32 %v844, %v1595
      %v2024 = vadd.f32 %v846, %v1597
      %v2025 = vadd.f32 %v1127, %v1851
      %v2026 = vadd.f32 %v850, %v1601
      %v2027 = vadd.f32 %v852, %v1603
      %v2028 = vadd.f32 %v1133, %v1856
      %v2029 = vadd.f32 %v854, %v1605
      %v2030 = vadd.f32 %v856, %v1607
      %v2031 = vadd.f32 %v1137, %v1859
      %v2032 = vadd.f32 %v860, %v1611
      %v2033 = vadd.f32 %v862, %v1613
      %v2034 = vadd.f32 %v1143, %v1864
      %v2035 = vadd.f32 %v864, %v1615
      %v2036 = vadd.f32 %v866, %v1617
      %v2037 = vadd.f32 %v1147, %v1867
      %v2038 = vadd.f32 %v870, %v1621
      %v2039 = vadd.f32 %v872, %v1623
      %v2040 = vadd.f32 %v1153, %v1872
      %v2041 = vadd.f32 %v874, %v1625
      %v2042 = vadd.f32 %v876, %v1627
      %v2043 = vadd.f32 %v1157, %v1875
      %v2044 = vadd.f32 %v880, %v1631
      %v2045 = vadd.f32 %v882, %v1633
      %v2046 = vadd.f32 %v1163, %v1880
      %v2047 = vadd.f32 %v884, %v1635
      %v2048 = vadd.f32 %v886, %v1637
      %v2049 = vadd.f32 %v1167, %v1883
      %v2050 = vadd.f32 %v890, %v1641
      %v2051 = vadd.f32 %v892, %v1643
      %v2052 = vadd.f32 %v1173, %v1888
      %v2053 = vadd.f32 %v894, %v1645
      %v2054 = vadd.f32 %v896, %v1647
      %v2055 = vadd.f32 %v1177, %v1891
      %v2056 = vadd.f32 %v900, %v1651
      %v2057 = vadd.f32 %v902, %v1653
      %v2058 = vadd.f32 %v1183, %v1896
      %v2059 = vadd.f32 %v904, %v1655
      %v2060 = vadd.f32 %v906, %v1657
      %v2061 = vadd.f32 %v1187, %v1899
      %v2062 = vadd.f32 %v910, %v1661
      %v2063 = vadd.f32 %v912, %v1663
      %v2064 = vadd.f32 %v1193, %v1904
      %v2065 = vadd.f32 %v914, %v1665
      %v2066 = vadd.f32 %v916, %v1667
      %v2067 = vadd.f32 %v1197, %v1907
      %v2068 = vadd.f32 %v920, %v1671
      %v2069 = vadd.f32 %v922, %v1673
      %v2070 = vadd.f32 %v1203, %v1912
      %v2071 = vadd.f32 %v924, %v1675
      %v2072 = vadd.f32 %v926, %v1677
      %v2073 = vadd.f32 %v1207, %v1915
      %v2074 = vadd.f32 %v930, %v1681
      %v2075 = vadd.f32 %v932, %v1683
      %v2076 = vadd.f32 %v1213, %v1920
      %v2077 = vadd.f32 %v934, %v1685
      %v2078 = vadd.f32 %v936, %v1687
      %v2079 = vadd.f32 %v1217, %v1923
      %v2080 = vadd.f32 %v940, %v1691
      %v2081 = vadd.f32 %v942, %v1693
      %v2082 = vadd.f32 %v1223, %v1928
      %v2083 = vadd.f32 %v944, %v1695
      %v2084 = vadd.f32 %v946, %v1697
      %v2085 = vadd.f32 %v1227, %v1931
      %v2086 = vadd.f32 %v950, %v1701
      %v2087 = vadd.f32 %v952, %v1703
      %v2088 = vadd.f32 %v1233, %v1936
      %v2089 = vadd.f32 %v954, %v1705
      %v2090 = vadd.f32 %v956, %v1707
      %v2091 = vadd.f32 %v1237, %v1939
      %v2092 = vld [vmem:[%s265] sm:$0x7]
      %v2094 = vlaneseq
      %v2095 = vshrl.u32 %v2094, 7
      %v2096 = vsub.s32 0, %v2095
      %v2097 = vrot.slane %v2092, %v2096
      %v2098 = vlaneseq
      %v2099 = vshrl.u32 %v2098, 7
      %v2100 = vsub.s32 1, %v2099
      %v2101 = vrot.slane %v2092, %v2100
      %v2102 = vlaneseq
      %v2103 = vshrl.u32 %v2102, 7
      %v2104 = vsub.s32 2, %v2103
      %v2105 = vrot.slane %v2092, %v2104
      %v2109 = vadd.f32 %v1942, %v2097
      %v2110 = vadd.f32 %v1943, %v2101
      %v2111 = vadd.f32 %v1944, %v2105
      %v2112 = vadd.f32 %v1945, %v2097
      %v2113 = vadd.f32 %v1946, %v2101
      %v2114 = vadd.f32 %v1947, %v2105
      %v2115 = vadd.f32 %v1948, %v2097
      %v2116 = vadd.f32 %v1949, %v2101
      %v2117 = vadd.f32 %v1950, %v2105
      %v2118 = vadd.f32 %v1951, %v2097
      %v2119 = vadd.f32 %v1952, %v2101
      %v2120 = vadd.f32 %v1953, %v2105
      %v2121 = vadd.f32 %v1954, %v2097
      %v2122 = vadd.f32 %v1955, %v2101
      %v2123 = vadd.f32 %v1956, %v2105
      %v2124 = vadd.f32 %v1957, %v2097
      %v2125 = vadd.f32 %v1958, %v2101
      %v2126 = vadd.f32 %v1959, %v2105
      %v2127 = vadd.f32 %v1960, %v2097
      %v2128 = vadd.f32 %v1961, %v2101
      %v2129 = vadd.f32 %v1962, %v2105
      %v2130 = vadd.f32 %v1963, %v2097
      %v2131 = vadd.f32 %v1964, %v2101
      %v2132 = vadd.f32 %v1965, %v2105
      %v2133 = vadd.f32 %v1966, %v2097
      %v2134 = vadd.f32 %v1967, %v2101
      %v2135 = vadd.f32 %v1968, %v2105
      %v2136 = vadd.f32 %v1969, %v2097
      %v2137 = vadd.f32 %v1970, %v2101
      %v2138 = vadd.f32 %v1971, %v2105
      %v2139 = vadd.f32 %v1972, %v2097
      %v2140 = vadd.f32 %v1973, %v2101
      %v2141 = vadd.f32 %v1974, %v2105
      %v2142 = vadd.f32 %v1975, %v2097
      %v2143 = vadd.f32 %v1976, %v2101
      %v2144 = vadd.f32 %v1977, %v2105
      %v2145 = vadd.f32 %v1978, %v2097
      %v2146 = vadd.f32 %v1979, %v2101
      %v2147 = vadd.f32 %v1980, %v2105
      %v2148 = vadd.f32 %v1981, %v2097
      %v2149 = vadd.f32 %v1982, %v2101
      %v2150 = vadd.f32 %v1983, %v2105
      %v2151 = vadd.f32 %v1984, %v2097
      %v2152 = vadd.f32 %v1985, %v2101
      %v2153 = vadd.f32 %v1986, %v2105
      %v2154 = vadd.f32 %v1987, %v2097
      %v2155 = vadd.f32 %v1988, %v2101
      %v2156 = vadd.f32 %v1989, %v2105
      %v2157 = vadd.f32 %v1990, %v2097
      %v2158 = vadd.f32 %v1991, %v2101
      %v2159 = vadd.f32 %v1992, %v2105
      %v2160 = vadd.f32 %v1993, %v2097
      %v2161 = vadd.f32 %v1994, %v2101
      %v2162 = vadd.f32 %v1995, %v2105
      %v2163 = vadd.f32 %v1996, %v2097
      %v2164 = vadd.f32 %v1997, %v2101
      %v2165 = vadd.f32 %v1998, %v2105
      %v2166 = vadd.f32 %v1999, %v2097
      %v2167 = vadd.f32 %v2000, %v2101
      %v2168 = vadd.f32 %v2001, %v2105
      %v2169 = vadd.f32 %v2002, %v2097
      %v2170 = vadd.f32 %v2003, %v2101
      %v2171 = vadd.f32 %v2004, %v2105
      %v2172 = vadd.f32 %v2005, %v2097
      %v2173 = vadd.f32 %v2006, %v2101
      %v2174 = vadd.f32 %v2007, %v2105
      %v2175 = vadd.f32 %v2008, %v2097
      %v2176 = vadd.f32 %v2009, %v2101
      %v2177 = vadd.f32 %v2010, %v2105
      %v2178 = vadd.f32 %v2011, %v2097
      %v2179 = vadd.f32 %v2012, %v2101
      %v2180 = vadd.f32 %v2013, %v2105
      %v2181 = vadd.f32 %v2014, %v2097
      %v2182 = vadd.f32 %v2015, %v2101
      %v2183 = vadd.f32 %v2016, %v2105
      %v2184 = vadd.f32 %v2017, %v2097
      %v2185 = vadd.f32 %v2018, %v2101
      %v2186 = vadd.f32 %v2019, %v2105
      %v2187 = vadd.f32 %v2020, %v2097
      %v2188 = vadd.f32 %v2021, %v2101
      %v2189 = vadd.f32 %v2022, %v2105
      %v2190 = vadd.f32 %v2023, %v2097
      %v2191 = vadd.f32 %v2024, %v2101
      %v2192 = vadd.f32 %v2025, %v2105
      %v2193 = vadd.f32 %v2026, %v2097
      %v2194 = vadd.f32 %v2027, %v2101
      %v2195 = vadd.f32 %v2028, %v2105
      %v2196 = vadd.f32 %v2029, %v2097
      %v2197 = vadd.f32 %v2030, %v2101
      %v2198 = vadd.f32 %v2031, %v2105
      %v2199 = vadd.f32 %v2032, %v2097
      %v2200 = vadd.f32 %v2033, %v2101
      %v2201 = vadd.f32 %v2034, %v2105
      %v2202 = vadd.f32 %v2035, %v2097
      %v2203 = vadd.f32 %v2036, %v2101
      %v2204 = vadd.f32 %v2037, %v2105
      %v2205 = vadd.f32 %v2038, %v2097
      %v2206 = vadd.f32 %v2039, %v2101
      %v2207 = vadd.f32 %v2040, %v2105
      %v2208 = vadd.f32 %v2041, %v2097
      %v2209 = vadd.f32 %v2042, %v2101
      %v2210 = vadd.f32 %v2043, %v2105
      %v2211 = vadd.f32 %v2044, %v2097
      %v2212 = vadd.f32 %v2045, %v2101
      %v2213 = vadd.f32 %v2046, %v2105
      %v2214 = vadd.f32 %v2047, %v2097
      %v2215 = vadd.f32 %v2048, %v2101
      %v2216 = vadd.f32 %v2049, %v2105
      %v2217 = vadd.f32 %v2050, %v2097
      %v2218 = vadd.f32 %v2051, %v2101
      %v2219 = vadd.f32 %v2052, %v2105
      %v2220 = vadd.f32 %v2053, %v2097
      %v2221 = vadd.f32 %v2054, %v2101
      %v2222 = vadd.f32 %v2055, %v2105
      %v2223 = vadd.f32 %v2056, %v2097
      %v2224 = vadd.f32 %v2057, %v2101
      %v2225 = vadd.f32 %v2058, %v2105
      %v2226 = vadd.f32 %v2059, %v2097
      %v2227 = vadd.f32 %v2060, %v2101
      %v2228 = vadd.f32 %v2061, %v2105
      %v2229 = vadd.f32 %v2062, %v2097
      %v2230 = vadd.f32 %v2063, %v2101
      %v2231 = vadd.f32 %v2064, %v2105
      %v2232 = vadd.f32 %v2065, %v2097
      %v2233 = vadd.f32 %v2066, %v2101
      %v2234 = vadd.f32 %v2067, %v2105
      %v2235 = vadd.f32 %v2068, %v2097
      %v2236 = vadd.f32 %v2069, %v2101
      %v2237 = vadd.f32 %v2070, %v2105
      %v2238 = vadd.f32 %v2071, %v2097
      %v2239 = vadd.f32 %v2072, %v2101
      %v2240 = vadd.f32 %v2073, %v2105
      %v2241 = vadd.f32 %v2074, %v2097
      %v2242 = vadd.f32 %v2075, %v2101
      %v2243 = vadd.f32 %v2076, %v2105
      %v2244 = vadd.f32 %v2077, %v2097
      %v2245 = vadd.f32 %v2078, %v2101
      %v2246 = vadd.f32 %v2079, %v2105
      %v2247 = vadd.f32 %v2080, %v2097
      %v2248 = vadd.f32 %v2081, %v2101
      %v2249 = vadd.f32 %v2082, %v2105
      %v2250 = vadd.f32 %v2083, %v2097
      %v2251 = vadd.f32 %v2084, %v2101
      %v2252 = vadd.f32 %v2085, %v2105
      %v2253 = vadd.f32 %v2086, %v2097
      %v2254 = vadd.f32 %v2087, %v2101
      %v2255 = vadd.f32 %v2088, %v2105
      %v2256 = vadd.f32 %v2089, %v2097
      %v2257 = vadd.f32 %v2090, %v2101
      %v2258 = vadd.f32 %v2091, %v2105
      %v2259 = vpack.c.bf16 %v2112, %v2109
      %v2260 = vpack.c.bf16 %v2113, %v2110
      %v2261 = vpack.c.bf16 %v2114, %v2111
      %v2262 = vpack.c.bf16 %v2118, %v2115
      %v2263 = vpack.c.bf16 %v2119, %v2116
      %v2264 = vpack.c.bf16 %v2120, %v2117
      %v2265 = vpack.c.bf16 %v2124, %v2121
      %v2266 = vpack.c.bf16 %v2125, %v2122
      %v2267 = vpack.c.bf16 %v2126, %v2123
      %v2268 = vpack.c.bf16 %v2130, %v2127
      %v2269 = vpack.c.bf16 %v2131, %v2128
      %v2270 = vpack.c.bf16 %v2132, %v2129
      %v2271 = vpack.c.bf16 %v2136, %v2133
      %v2272 = vpack.c.bf16 %v2137, %v2134
      %v2273 = vpack.c.bf16 %v2138, %v2135
      %v2274 = vpack.c.bf16 %v2142, %v2139
      %v2275 = vpack.c.bf16 %v2143, %v2140
      %v2276 = vpack.c.bf16 %v2144, %v2141
      %v2277 = vpack.c.bf16 %v2148, %v2145
      %v2278 = vpack.c.bf16 %v2149, %v2146
      %v2279 = vpack.c.bf16 %v2150, %v2147
      %v2280 = vpack.c.bf16 %v2154, %v2151
      %v2281 = vpack.c.bf16 %v2155, %v2152
      %v2282 = vpack.c.bf16 %v2156, %v2153
      %v2283 = vpack.c.bf16 %v2160, %v2157
      %v2284 = vpack.c.bf16 %v2161, %v2158
      %v2285 = vpack.c.bf16 %v2162, %v2159
      %v2286 = vpack.c.bf16 %v2166, %v2163
      %v2287 = vpack.c.bf16 %v2167, %v2164
      %v2288 = vpack.c.bf16 %v2168, %v2165
      %v2289 = vpack.c.bf16 %v2172, %v2169
      %v2290 = vpack.c.bf16 %v2173, %v2170
      %v2291 = vpack.c.bf16 %v2174, %v2171
      %v2292 = vpack.c.bf16 %v2178, %v2175
      %v2293 = vpack.c.bf16 %v2179, %v2176
      %v2294 = vpack.c.bf16 %v2180, %v2177
      %v2295 = vpack.c.bf16 %v2184, %v2181
      %v2296 = vpack.c.bf16 %v2185, %v2182
      %v2297 = vpack.c.bf16 %v2186, %v2183
      %v2298 = vpack.c.bf16 %v2190, %v2187
      %v2299 = vpack.c.bf16 %v2191, %v2188
      %v2300 = vpack.c.bf16 %v2192, %v2189
      %v2301 = vpack.c.bf16 %v2196, %v2193
      %v2302 = vpack.c.bf16 %v2197, %v2194
      %v2303 = vpack.c.bf16 %v2198, %v2195
      %v2304 = vpack.c.bf16 %v2202, %v2199
      %v2305 = vpack.c.bf16 %v2203, %v2200
      %v2306 = vpack.c.bf16 %v2204, %v2201
      %v2307 = vpack.c.bf16 %v2208, %v2205
      %v2308 = vpack.c.bf16 %v2209, %v2206
      %v2309 = vpack.c.bf16 %v2210, %v2207
      %v2310 = vpack.c.bf16 %v2214, %v2211
      %v2311 = vpack.c.bf16 %v2215, %v2212
      %v2312 = vpack.c.bf16 %v2216, %v2213
      %v2313 = vpack.c.bf16 %v2220, %v2217
      %v2314 = vpack.c.bf16 %v2221, %v2218
      %v2315 = vpack.c.bf16 %v2222, %v2219
      %v2316 = vpack.c.bf16 %v2226, %v2223
      %v2317 = vpack.c.bf16 %v2227, %v2224
      %v2318 = vpack.c.bf16 %v2228, %v2225
      %v2319 = vpack.c.bf16 %v2232, %v2229
      %v2320 = vpack.c.bf16 %v2233, %v2230
      %v2321 = vpack.c.bf16 %v2234, %v2231
      %v2322 = vpack.c.bf16 %v2238, %v2235
      %v2323 = vpack.c.bf16 %v2239, %v2236
      %v2324 = vpack.c.bf16 %v2240, %v2237
      %v2325 = vpack.c.bf16 %v2244, %v2241
      %v2326 = vpack.c.bf16 %v2245, %v2242
      %v2327 = vpack.c.bf16 %v2246, %v2243
      %v2328 = vpack.c.bf16 %v2250, %v2247
      %v2329 = vpack.c.bf16 %v2251, %v2248
      %v2330 = vpack.c.bf16 %v2252, %v2249
      %v2331 = vpack.c.bf16 %v2256, %v2253
      %v2332 = vpack.c.bf16 %v2257, %v2254
      %v2333 = vpack.c.bf16 %v2258, %v2255
      %v2409 = vunpack.c.l.b16 %v2259
      %v2410 = vunpack.c.l.b16 %v2260
      %v2411 = vunpack.c.l.b16 %v2261
      %v2412 = vunpack.c.h.b16 %v2259
      %v2413 = vunpack.c.h.b16 %v2260
      %v2414 = vunpack.c.h.b16 %v2261
      %v2415 = vunpack.c.l.b16 %v2262
      %v2416 = vunpack.c.l.b16 %v2263
      %v2417 = vunpack.c.l.b16 %v2264
      %v2418 = vunpack.c.h.b16 %v2262
      %v2419 = vunpack.c.h.b16 %v2263
      %v2420 = vunpack.c.h.b16 %v2264
      %v2421 = vunpack.c.l.b16 %v2265
      %v2422 = vunpack.c.l.b16 %v2266
      %v2423 = vunpack.c.l.b16 %v2267
      %v2424 = vunpack.c.h.b16 %v2265
      %v2425 = vunpack.c.h.b16 %v2266
      %v2426 = vunpack.c.h.b16 %v2267
      %v2427 = vunpack.c.l.b16 %v2268
      %v2428 = vunpack.c.l.b16 %v2269
      %v2429 = vunpack.c.l.b16 %v2270
      %v2430 = vunpack.c.h.b16 %v2268
      %v2431 = vunpack.c.h.b16 %v2269
      %v2432 = vunpack.c.h.b16 %v2270
      %v2433 = vunpack.c.l.b16 %v2271
      %v2434 = vunpack.c.l.b16 %v2272
      %v2435 = vunpack.c.l.b16 %v2273
      %v2436 = vunpack.c.h.b16 %v2271
      %v2437 = vunpack.c.h.b16 %v2272
      %v2438 = vunpack.c.h.b16 %v2273
      %v2439 = vunpack.c.l.b16 %v2274
      %v2440 = vunpack.c.l.b16 %v2275
      %v2441 = vunpack.c.l.b16 %v2276
      %v2442 = vunpack.c.h.b16 %v2274
      %v2443 = vunpack.c.h.b16 %v2275
      %v2444 = vunpack.c.h.b16 %v2276
      %v2445 = vunpack.c.l.b16 %v2277
      %v2446 = vunpack.c.l.b16 %v2278
      %v2447 = vunpack.c.l.b16 %v2279
      %v2448 = vunpack.c.h.b16 %v2277
      %v2449 = vunpack.c.h.b16 %v2278
      %v2450 = vunpack.c.h.b16 %v2279
      %v2451 = vunpack.c.l.b16 %v2280
      %v2452 = vunpack.c.l.b16 %v2281
      %v2453 = vunpack.c.l.b16 %v2282
      %v2454 = vunpack.c.h.b16 %v2280
      %v2455 = vunpack.c.h.b16 %v2281
      %v2456 = vunpack.c.h.b16 %v2282
      %v2457 = vunpack.c.l.b16 %v2283
      %v2458 = vunpack.c.l.b16 %v2284
      %v2459 = vunpack.c.l.b16 %v2285
      %v2460 = vunpack.c.h.b16 %v2283
      %v2461 = vunpack.c.h.b16 %v2284
      %v2462 = vunpack.c.h.b16 %v2285
      %v2463 = vunpack.c.l.b16 %v2286
      %v2464 = vunpack.c.l.b16 %v2287
      %v2465 = vunpack.c.l.b16 %v2288
      %v2466 = vunpack.c.h.b16 %v2286
      %v2467 = vunpack.c.h.b16 %v2287
      %v2468 = vunpack.c.h.b16 %v2288
      %v2469 = vunpack.c.l.b16 %v2289
      %v2470 = vunpack.c.l.b16 %v2290
      %v2471 = vunpack.c.l.b16 %v2291
      %v2472 = vunpack.c.h.b16 %v2289
      %v2473 = vunpack.c.h.b16 %v2290
      %v2474 = vunpack.c.h.b16 %v2291
      %v2475 = vunpack.c.l.b16 %v2292
      %v2476 = vunpack.c.l.b16 %v2293
      %v2477 = vunpack.c.l.b16 %v2294
      %v2478 = vunpack.c.h.b16 %v2292
      %v2479 = vunpack.c.h.b16 %v2293
      %v2480 = vunpack.c.h.b16 %v2294
      %v2481 = vunpack.c.l.b16 %v2295
      %v2482 = vunpack.c.l.b16 %v2296
      %v2483 = vunpack.c.l.b16 %v2297
      %v2484 = vunpack.c.h.b16 %v2295
      %v2485 = vunpack.c.h.b16 %v2296
      %v2486 = vunpack.c.h.b16 %v2297
      %v2487 = vunpack.c.l.b16 %v2298
      %v2488 = vunpack.c.l.b16 %v2299
      %v2489 = vunpack.c.l.b16 %v2300
      %v2490 = vunpack.c.h.b16 %v2298
      %v2491 = vunpack.c.h.b16 %v2299
      %v2492 = vunpack.c.h.b16 %v2300
      %v2493 = vunpack.c.l.b16 %v2301
      %v2494 = vunpack.c.l.b16 %v2302
      %v2495 = vunpack.c.l.b16 %v2303
      %v2496 = vunpack.c.h.b16 %v2301
      %v2497 = vunpack.c.h.b16 %v2302
      %v2498 = vunpack.c.h.b16 %v2303
      %v2499 = vunpack.c.l.b16 %v2304
      %v2500 = vunpack.c.l.b16 %v2305
      %v2501 = vunpack.c.l.b16 %v2306
      %v2502 = vunpack.c.h.b16 %v2304
      %v2503 = vunpack.c.h.b16 %v2305
      %v2504 = vunpack.c.h.b16 %v2306
      %v2505 = vunpack.c.l.b16 %v2307
      %v2506 = vunpack.c.l.b16 %v2308
      %v2507 = vunpack.c.l.b16 %v2309
      %v2508 = vunpack.c.h.b16 %v2307
      %v2509 = vunpack.c.h.b16 %v2308
      %v2510 = vunpack.c.h.b16 %v2309
      %v2511 = vunpack.c.l.b16 %v2310
      %v2512 = vunpack.c.l.b16 %v2311
      %v2513 = vunpack.c.l.b16 %v2312
      %v2514 = vunpack.c.h.b16 %v2310
      %v2515 = vunpack.c.h.b16 %v2311
      %v2516 = vunpack.c.h.b16 %v2312
      %v2517 = vunpack.c.l.b16 %v2313
      %v2518 = vunpack.c.l.b16 %v2314
      %v2519 = vunpack.c.l.b16 %v2315
      %v2520 = vunpack.c.h.b16 %v2313
      %v2521 = vunpack.c.h.b16 %v2314
      %v2522 = vunpack.c.h.b16 %v2315
      %v2523 = vunpack.c.l.b16 %v2316
      %v2524 = vunpack.c.l.b16 %v2317
      %v2525 = vunpack.c.l.b16 %v2318
      %v2526 = vunpack.c.h.b16 %v2316
      %v2527 = vunpack.c.h.b16 %v2317
      %v2528 = vunpack.c.h.b16 %v2318
      %v2529 = vunpack.c.l.b16 %v2319
      %v2530 = vunpack.c.l.b16 %v2320
      %v2531 = vunpack.c.l.b16 %v2321
      %v2532 = vunpack.c.h.b16 %v2319
      %v2533 = vunpack.c.h.b16 %v2320
      %v2534 = vunpack.c.h.b16 %v2321
      %v2535 = vunpack.c.l.b16 %v2322
      %v2536 = vunpack.c.l.b16 %v2323
      %v2537 = vunpack.c.l.b16 %v2324
      %v2538 = vunpack.c.h.b16 %v2322
      %v2539 = vunpack.c.h.b16 %v2323
      %v2540 = vunpack.c.h.b16 %v2324
      %v2541 = vunpack.c.l.b16 %v2325
      %v2542 = vunpack.c.l.b16 %v2326
      %v2543 = vunpack.c.l.b16 %v2327
      %v2544 = vunpack.c.h.b16 %v2325
      %v2545 = vunpack.c.h.b16 %v2326
      %v2546 = vunpack.c.h.b16 %v2327
      %v2547 = vunpack.c.l.b16 %v2328
      %v2548 = vunpack.c.l.b16 %v2329
      %v2549 = vunpack.c.l.b16 %v2330
      %v2550 = vunpack.c.h.b16 %v2328
      %v2551 = vunpack.c.h.b16 %v2329
      %v2552 = vunpack.c.h.b16 %v2330
      %v2553 = vunpack.c.l.b16 %v2331
      %v2554 = vunpack.c.l.b16 %v2332
      %v2555 = vunpack.c.l.b16 %v2333
      %v2556 = vunpack.c.h.b16 %v2331
      %v2557 = vunpack.c.h.b16 %v2332
      %v2558 = vunpack.c.h.b16 %v2333
      %v2559 = vpack.c.b16 %v2410, %v2409
      %v2560 = vpack.c.b16 %v2411, %v2411
      %v2561 = vpack.c.b16 %v2413, %v2412
      %v2562 = vpack.c.b16 %v2414, %v2414
      %v2563 = vpack.c.b16 %v2416, %v2415
      %v2564 = vpack.c.b16 %v2417, %v2417
      %v2565 = vpack.c.b16 %v2419, %v2418
      %v2566 = vpack.c.b16 %v2420, %v2420
      %v2567 = vpack.c.b16 %v2422, %v2421
      %v2568 = vpack.c.b16 %v2423, %v2423
      %v2569 = vpack.c.b16 %v2425, %v2424
      %v2570 = vpack.c.b16 %v2426, %v2426
      %v2571 = vpack.c.b16 %v2428, %v2427
      %v2572 = vpack.c.b16 %v2429, %v2429
      %v2573 = vpack.c.b16 %v2431, %v2430
      %v2574 = vpack.c.b16 %v2432, %v2432
      %v2575 = vpack.c.b16 %v2434, %v2433
      %v2576 = vpack.c.b16 %v2435, %v2435
      %v2577 = vpack.c.b16 %v2437, %v2436
      %v2578 = vpack.c.b16 %v2438, %v2438
      %v2579 = vpack.c.b16 %v2440, %v2439
      %v2580 = vpack.c.b16 %v2441, %v2441
      %v2581 = vpack.c.b16 %v2443, %v2442
      %v2582 = vpack.c.b16 %v2444, %v2444
      %v2583 = vpack.c.b16 %v2446, %v2445
      %v2584 = vpack.c.b16 %v2447, %v2447
      %v2585 = vpack.c.b16 %v2449, %v2448
      %v2586 = vpack.c.b16 %v2450, %v2450
      %v2587 = vpack.c.b16 %v2452, %v2451
      %v2588 = vpack.c.b16 %v2453, %v2453
      %v2589 = vpack.c.b16 %v2455, %v2454
      %v2590 = vpack.c.b16 %v2456, %v2456
      %v2591 = vpack.c.b16 %v2458, %v2457
      %v2592 = vpack.c.b16 %v2459, %v2459
      %v2593 = vpack.c.b16 %v2461, %v2460
      %v2594 = vpack.c.b16 %v2462, %v2462
      %v2595 = vpack.c.b16 %v2464, %v2463
      %v2596 = vpack.c.b16 %v2465, %v2465
      %v2597 = vpack.c.b16 %v2467, %v2466
      %v2598 = vpack.c.b16 %v2468, %v2468
      %v2599 = vpack.c.b16 %v2470, %v2469
      %v2600 = vpack.c.b16 %v2471, %v2471
      %v2601 = vpack.c.b16 %v2473, %v2472
      %v2602 = vpack.c.b16 %v2474, %v2474
      %v2603 = vpack.c.b16 %v2476, %v2475
      %v2604 = vpack.c.b16 %v2477, %v2477
      %v2605 = vpack.c.b16 %v2479, %v2478
      %v2606 = vpack.c.b16 %v2480, %v2480
      %v2607 = vpack.c.b16 %v2482, %v2481
      %v2608 = vpack.c.b16 %v2483, %v2483
      %v2609 = vpack.c.b16 %v2485, %v2484
      %v2610 = vpack.c.b16 %v2486, %v2486
      %v2611 = vpack.c.b16 %v2488, %v2487
      %v2612 = vpack.c.b16 %v2489, %v2489
      %v2613 = vpack.c.b16 %v2491, %v2490
      %v2614 = vpack.c.b16 %v2492, %v2492
      %v2615 = vpack.c.b16 %v2494, %v2493
      %v2616 = vpack.c.b16 %v2495, %v2495
      %v2617 = vpack.c.b16 %v2497, %v2496
      %v2618 = vpack.c.b16 %v2498, %v2498
      %v2619 = vpack.c.b16 %v2500, %v2499
      %v2620 = vpack.c.b16 %v2501, %v2501
      %v2621 = vpack.c.b16 %v2503, %v2502
      %v2622 = vpack.c.b16 %v2504, %v2504
      %v2623 = vpack.c.b16 %v2506, %v2505
      %v2624 = vpack.c.b16 %v2507, %v2507
      %v2625 = vpack.c.b16 %v2509, %v2508
      %v2626 = vpack.c.b16 %v2510, %v2510
      %v2627 = vpack.c.b16 %v2512, %v2511
      %v2628 = vpack.c.b16 %v2513, %v2513
      %v2629 = vpack.c.b16 %v2515, %v2514
      %v2630 = vpack.c.b16 %v2516, %v2516
      %v2631 = vpack.c.b16 %v2518, %v2517
      %v2632 = vpack.c.b16 %v2519, %v2519
      %v2633 = vpack.c.b16 %v2521, %v2520
      %v2634 = vpack.c.b16 %v2522, %v2522
      %v2635 = vpack.c.b16 %v2524, %v2523
      %v2636 = vpack.c.b16 %v2525, %v2525
      %v2637 = vpack.c.b16 %v2527, %v2526
      %v2638 = vpack.c.b16 %v2528, %v2528
      %v2639 = vpack.c.b16 %v2530, %v2529
      %v2640 = vpack.c.b16 %v2531, %v2531
      %v2641 = vpack.c.b16 %v2533, %v2532
      %v2642 = vpack.c.b16 %v2534, %v2534
      %v2643 = vpack.c.b16 %v2536, %v2535
      %v2644 = vpack.c.b16 %v2537, %v2537
      %v2645 = vpack.c.b16 %v2539, %v2538
      %v2646 = vpack.c.b16 %v2540, %v2540
      %v2647 = vpack.c.b16 %v2542, %v2541
      %v2648 = vpack.c.b16 %v2543, %v2543
      %v2649 = vpack.c.b16 %v2545, %v2544
      %v2650 = vpack.c.b16 %v2546, %v2546
      %v2651 = vpack.c.b16 %v2548, %v2547
      %v2652 = vpack.c.b16 %v2549, %v2549
      %v2653 = vpack.c.b16 %v2551, %v2550
      %v2654 = vpack.c.b16 %v2552, %v2552
      %v2655 = vpack.c.b16 %v2554, %v2553
      %v2656 = vpack.c.b16 %v2555, %v2555
      %v2657 = vpack.c.b16 %v2557, %v2556
      %v2658 = vpack.c.b16 %v2558, %v2558
      %2759 = vst [vmem:[%s280] sm:$0xff] %v2559
      %vm2760 = vcmask 257024
      %2761 = vst.msk [vmem:[%s280 + $0x8] sm:$0xf] %vm2760, %v2560
      %2762 = vst [vmem:[%s280 + $0xc] sm:$0xff] %v2561
      %2763 = vst.msk [vmem:[%s280 + $0x14] sm:$0xf] %vm2760, %v2562
      %2764 = vst [vmem:[%s280 + $0x18] sm:$0xff] %v2563
      %2765 = vst.msk [vmem:[%s280 + $0x20] sm:$0xf] %vm2760, %v2564
      %2766 = vst [vmem:[%s280 + $0x24] sm:$0xff] %v2565
      %2767 = vst.msk [vmem:[%s280 + $0x2c] sm:$0xf] %vm2760, %v2566
      %2768 = vst [vmem:[%s280 + $0x30] sm:$0xff] %v2567
      %2769 = vst.msk [vmem:[%s280 + $0x38] sm:$0xf] %vm2760, %v2568
      %2770 = vst [vmem:[%s280 + $0x3c] sm:$0xff] %v2569
      %2771 = vst.msk [vmem:[%s280 + $0x44] sm:$0xf] %vm2760, %v2570
      %2772 = vst [vmem:[%s280 + $0x48] sm:$0xff] %v2571
      %2773 = vst.msk [vmem:[%s280 + $0x50] sm:$0xf] %vm2760, %v2572
      %2774 = vst [vmem:[%s280 + $0x54] sm:$0xff] %v2573
      %2775 = vst.msk [vmem:[%s280 + $0x5c] sm:$0xf] %vm2760, %v2574
      %2776 = vst [vmem:[%s280 + $0x60] sm:$0xff] %v2575
      %2777 = vst.msk [vmem:[%s280 + $0x68] sm:$0xf] %vm2760, %v2576
      %2778 = vst [vmem:[%s280 + $0x6c] sm:$0xff] %v2577
      %2779 = vst.msk [vmem:[%s280 + $0x74] sm:$0xf] %vm2760, %v2578
      %2780 = vst [vmem:[%s280 + $0x78] sm:$0xff] %v2579
      %2781 = vst.msk [vmem:[%s280 + $0x80] sm:$0xf] %vm2760, %v2580
      %2782 = vst [vmem:[%s280 + $0x84] sm:$0xff] %v2581
      %2783 = vst.msk [vmem:[%s280 + $0x8c] sm:$0xf] %vm2760, %v2582
      %2784 = vst [vmem:[%s280 + $0x90] sm:$0xff] %v2583
      %2785 = vst.msk [vmem:[%s280 + $0x98] sm:$0xf] %vm2760, %v2584
      %2786 = vst [vmem:[%s280 + $0x9c] sm:$0xff] %v2585
      %2787 = vst.msk [vmem:[%s280 + $0xa4] sm:$0xf] %vm2760, %v2586
      %2788 = vst [vmem:[%s280 + $0xa8] sm:$0xff] %v2587
      %2789 = vst.msk [vmem:[%s280 + $0xb0] sm:$0xf] %vm2760, %v2588
      %2790 = vst [vmem:[%s280 + $0xb4] sm:$0xff] %v2589
      %2791 = vst.msk [vmem:[%s280 + $0xbc] sm:$0xf] %vm2760, %v2590
      %2792 = vst [vmem:[%s280 + $0xc0] sm:$0xff] %v2591
      %2793 = vst.msk [vmem:[%s280 + $0xc8] sm:$0xf] %vm2760, %v2592
      %2794 = vst [vmem:[%s280 + $0xcc] sm:$0xff] %v2593
      %2795 = vst.msk [vmem:[%s280 + $0xd4] sm:$0xf] %vm2760, %v2594
      %2796 = vst [vmem:[%s280 + $0xd8] sm:$0xff] %v2595
      %2797 = vst.msk [vmem:[%s280 + $0xe0] sm:$0xf] %vm2760, %v2596
      %2798 = vst [vmem:[%s280 + $0xe4] sm:$0xff] %v2597
      %2799 = vst.msk [vmem:[%s280 + $0xec] sm:$0xf] %vm2760, %v2598
      %2800 = vst [vmem:[%s280 + $0xf0] sm:$0xff] %v2599
      %2801 = vst.msk [vmem:[%s280 + $0xf8] sm:$0xf] %vm2760, %v2600
      %2802 = vst [vmem:[%s280 + $0xfc] sm:$0xff] %v2601
      %2803 = vst.msk [vmem:[%s280 + $0x104] sm:$0xf] %vm2760, %v2602
      %2804 = vst [vmem:[%s280 + $0x108] sm:$0xff] %v2603
      %2805 = vst.msk [vmem:[%s280 + $0x110] sm:$0xf] %vm2760, %v2604
      %2806 = vst [vmem:[%s280 + $0x114] sm:$0xff] %v2605
      %2807 = vst.msk [vmem:[%s280 + $0x11c] sm:$0xf] %vm2760, %v2606
      %2808 = vst [vmem:[%s280 + $0x120] sm:$0xff] %v2607
      %2809 = vst.msk [vmem:[%s280 + $0x128] sm:$0xf] %vm2760, %v2608
      %2810 = vst [vmem:[%s280 + $0x12c] sm:$0xff] %v2609
      %2811 = vst.msk [vmem:[%s280 + $0x134] sm:$0xf] %vm2760, %v2610
      %2812 = vst [vmem:[%s280 + $0x138] sm:$0xff] %v2611
      %2813 = vst.msk [vmem:[%s280 + $0x140] sm:$0xf] %vm2760, %v2612
      %2814 = vst [vmem:[%s280 + $0x144] sm:$0xff] %v2613
      %2815 = vst.msk [vmem:[%s280 + $0x14c] sm:$0xf] %vm2760, %v2614
      %2816 = vst [vmem:[%s280 + $0x150] sm:$0xff] %v2615
      %2817 = vst.msk [vmem:[%s280 + $0x158] sm:$0xf] %vm2760, %v2616
      %2818 = vst [vmem:[%s280 + $0x15c] sm:$0xff] %v2617
      %2819 = vst.msk [vmem:[%s280 + $0x164] sm:$0xf] %vm2760, %v2618
      %2820 = vst [vmem:[%s280 + $0x168] sm:$0xff] %v2619
      %2821 = vst.msk [vmem:[%s280 + $0x170] sm:$0xf] %vm2760, %v2620
      %2822 = vst [vmem:[%s280 + $0x174] sm:$0xff] %v2621
      %2823 = vst.msk [vmem:[%s280 + $0x17c] sm:$0xf] %vm2760, %v2622
      %2824 = vst [vmem:[%s280 + $0x180] sm:$0xff] %v2623
      %2825 = vst.msk [vmem:[%s280 + $0x188] sm:$0xf] %vm2760, %v2624
      %2826 = vst [vmem:[%s280 + $0x18c] sm:$0xff] %v2625
      %2827 = vst.msk [vmem:[%s280 + $0x194] sm:$0xf] %vm2760, %v2626
      %2828 = vst [vmem:[%s280 + $0x198] sm:$0xff] %v2627
      %2829 = vst.msk [vmem:[%s280 + $0x1a0] sm:$0xf] %vm2760, %v2628
      %2830 = vst [vmem:[%s280 + $0x1a4] sm:$0xff] %v2629
      %2831 = vst.msk [vmem:[%s280 + $0x1ac] sm:$0xf] %vm2760, %v2630
      %2832 = vst [vmem:[%s280 + $0x1b0] sm:$0xff] %v2631
      %2833 = vst.msk [vmem:[%s280 + $0x1b8] sm:$0xf] %vm2760, %v2632
      %2834 = vst [vmem:[%s280 + $0x1bc] sm:$0xff] %v2633
      %2835 = vst.msk [vmem:[%s280 + $0x1c4] sm:$0xf] %vm2760, %v2634
      %2836 = vst [vmem:[%s280 + $0x1c8] sm:$0xff] %v2635
      %2837 = vst.msk [vmem:[%s280 + $0x1d0] sm:$0xf] %vm2760, %v2636
      %2838 = vst [vmem:[%s280 + $0x1d4] sm:$0xff] %v2637
      %2839 = vst.msk [vmem:[%s280 + $0x1dc] sm:$0xf] %vm2760, %v2638
      %2840 = vst [vmem:[%s280 + $0x1e0] sm:$0xff] %v2639
      %2841 = vst.msk [vmem:[%s280 + $0x1e8] sm:$0xf] %vm2760, %v2640
      %2842 = vst [vmem:[%s280 + $0x1ec] sm:$0xff] %v2641
      %2843 = vst.msk [vmem:[%s280 + $0x1f4] sm:$0xf] %vm2760, %v2642
      %2844 = vst [vmem:[%s280 + $0x1f8] sm:$0xff] %v2643
      %2845 = vst.msk [vmem:[%s280 + $0x200] sm:$0xf] %vm2760, %v2644
      %2846 = vst [vmem:[%s280 + $0x204] sm:$0xff] %v2645
      %2847 = vst.msk [vmem:[%s280 + $0x20c] sm:$0xf] %vm2760, %v2646
      %2848 = vst [vmem:[%s280 + $0x210] sm:$0xff] %v2647
      %2849 = vst.msk [vmem:[%s280 + $0x218] sm:$0xf] %vm2760, %v2648
      %2850 = vst [vmem:[%s280 + $0x21c] sm:$0xff] %v2649
      %2851 = vst.msk [vmem:[%s280 + $0x224] sm:$0xf] %vm2760, %v2650
      %2852 = vst [vmem:[%s280 + $0x228] sm:$0xff] %v2651
      %2853 = vst.msk [vmem:[%s280 + $0x230] sm:$0xf] %vm2760, %v2652
      %2854 = vst [vmem:[%s280 + $0x234] sm:$0xff] %v2653
      %2855 = vst.msk [vmem:[%s280 + $0x23c] sm:$0xf] %vm2760, %v2654
      %2856 = vst [vmem:[%s280 + $0x240] sm:$0xff] %v2655
      %2857 = vst.msk [vmem:[%s280 + $0x248] sm:$0xf] %vm2760, %v2656
      %2858 = vst [vmem:[%s280 + $0x24c] sm:$0xff] %v2657
      %2859 = vst.msk [vmem:[%s280 + $0x254] sm:$0xf] %vm2760, %v2658
      %s2860 = smul.u32 50, %s20
      %p2861 = scmp.lt.s32.totalorder %s19, 2
      %s2862 = scalar_select %p2861, %s19, 2
      %p2863 = scmp.lt.s32.totalorder %s2860, 49
      %s2864 = scalar_select %p2863, %s2860, 49
      %s2865 = smul.addr %s2864, 3
      %s2866 = smul.addr %s2862, 150
      %s2867 = sadd.s32 %s2865, %s2866
      %s2868 = smul.addr %s2867, 4
      %s2869 = scalar_lea.vmem %s4, %s2868
      // Predicated region
      $region37: #{_forward_impl.1} parent=35 // pred_check
        %p2870 = pneg %p151
      $region38: #{_forward_impl.1} parent=35 // pred_check_branch
        %2872 = sbr.rel (%p2870) target = $region40
      $region39: #{_forward_impl.1} parent=35 // pred_region
        %s2873 = smul.u32 50, %s20
      $region40: #{_forward_impl.1} parent=35 // pred_fallthru
        _
    $region36: #{_forward_impl.1} parent=5 // pred_fallthru
      _
    %p2874 = scmp.le.s32.totalorder 2, %s10
    // Predicated region
    $region41: #{_forward_impl.1} parent=5 // pred_check
      %p2875 = pneg %p2874
    $region42: #{_forward_impl.1} parent=5 // pred_check_branch
      %2877 = sbr.rel (%p2875) target = $region44
    $region43: #{_forward_impl.1} parent=5 // pred_region
      %s2878 = ssub.s32 %s10, 2
      // Predicated region
      $region45: #{_forward_impl.1} parent=43 // pred_check
        %p2879 = pneg %p157
      $region46: #{_forward_impl.1} parent=43 // pred_check_branch
        %2881 = sbr.rel (%p2879) target = $region48
      $region47: #{_forward_impl.1} parent=43 // pred_region
        %s2882 = smul.u32 50, %s22
        %p2883 = scmp.lt.s32.totalorder %s21, 2
        %s2884 = scalar_select %p2883, %s21, 2
        %p2885 = scmp.lt.s32.totalorder %s2882, 49
        %s2886 = scalar_select %p2885, %s2882, 49
        %s2887 = smul.addr %s2886, 3
        %s2888 = smul.addr %s2884, 150
        %s2889 = sadd.s32 %s2887, %s2888
        %s2890 = smul.addr %s2889, 4
        %s2891 = scalar_lea.vmem %s4, %s2890
      $region48: #{_forward_impl.1} parent=43 // pred_fallthru
        _
    $region44: #{_forward_impl.1} parent=5 // pred_fallthru
      _
  $region6: #{_forward_impl.1} parent=0 // loop_footer
    %s14 = sadd.s32 1, %s10
  $region7: #{_forward_impl.1} parent=0 // loop_footer_branch
    %9 = sbr.rel target = $region3
  $region8: #{_forward_impl.1} parent=0 // loop_exit
    _

// kernel: _forward_impl.1
$region0: #{_forward_impl.1}
  #allocation0 [shape = 'u32[]', space=smem, size = 0x4, offset = 0x4, fixed_abs, tag = 'smem constant byte address 0x4 - core index']
  #allocation1 [shape = 'u32[144,128]{1,0:T(1,128)}', space=vmem, size = 0x12000, scoped, tag = 'internal scratch']
  %s0 = inlined_call_operand.vmem [shape: bf16[400,128], index: 0, kind: input, shape index: {}]
  %s1 = inlined_call_operand.vmem [shape: bf16[3,128,512], index: 1, kind: input, shape index: {}]
  %s2 = inlined_call_operand.vmem [shape: f32[3,1,288], index: 2, kind: input, shape index: {}]
  %s3 = inlined_call_operand.vmem [shape: bf16[3,128,384], index: 3, kind: input, shape index: {}]
  %s4 = inlined_call_operand.vmem [shape: bf16[3,400,288], index: 4, kind: output, shape index: {}]
  %s5 = sld [smem:[#allocation0]]
  $region49: #{_forward_impl.1} parent=0
    _
  %s7 = ssub.s32 1, %s5
  %s8 = scalar_select 0, %s7, %s5
  loop: start=0, step=1, limit=5
  $region2: #{_forward_impl.1} parent=0 // loop_pre_header
    _
  $region3: #{_forward_impl.1} parent=0 // loop_header
    %s10 = sphi 0, %s14
    %p11 = scmp.ge.s32.totalorder %s10, 5
    %s17 = sphi 0, %s29
    %s18 = sphi 0, %s25
    %s19 = sphi 0, %s17
    %s20 = sphi 0, %s18
    %s21 = sphi 0, %s19
    %s22 = sphi 0, %s20
    %s32 = sphi 0, %s34
    %s35 = sphi 0, %s32
    %s36 = sphi 0, %s35
    %s52 = sphi 0, %s36
    %s58 = sphi 0, %s60
    %s61 = sphi 0, %s58
    %s62 = sphi 0, %s61
    %s78 = sphi 0, %s62
    %s84 = sphi 0, %s86
    %s87 = sphi 0, %s84
    %s88 = sphi 0, %s87
    %s104 = sphi 0, %s88
    %s110 = sphi 0, %s112
    %s113 = sphi 0, %s110
    %s114 = sphi 0, %s113
    %s130 = sphi 0, %s114
    %s138 = sphi 0, %s140
    %s141 = sphi 0, %s138
    %s142 = sphi 0, %s141
    %s158 = sphi 0, %s142
  $region4: #{_forward_impl.1} parent=0 // loop_header_branch
    %13 = sbr.rel (%p11) target = $region8
  $region5: #{_forward_impl.1} parent=0 // loop_body
    %s15 = ssub.s32 %s10, 1
    %s16 = ssub.s32 %s10, 2
    %s23 = sadd.s32 1, %s18
    %p24 = scmp.ge.s32.totalorder %s23, 1
    %s25 = scalar_select %p24, 0, %s23
    %s26 = sadd.s32 1, %s17
    %s27 = scalar_select %p24, %s26, %s17
    %p28 = scmp.ge.s32.totalorder %s27, 3
    %s29 = scalar_select %p28, 0, %s27
    %s30 = ssub.s32 %s18, %s25
    %p31 = scmp.eq.s32.totalorder %s30, 0
    %s33 = sadd.s32 %s32, 1
    %s34 = scalar_select %p31, %s32, %s33
    %p37 = pneg %p31
    %p38 = scmp.eq.s32.totalorder %s10, 2
    %p39 = por %p37, %p38
    %p40 = scmp.ne.s32.totalorder %s32, %s35
    %p41 = scmp.eq.s32.totalorder %s10, 0
    %p42 = por %p40, %p41
    %p43 = scmp.ne.s32.totalorder %s32, %s35
    %p44 = scmp.eq.s32.totalorder %s15, 2
    %p45 = por %p43, %p44
    %p46 = scmp.ne.s32.totalorder %s35, %s36
    %p47 = scmp.eq.s32.totalorder %s15, 0
    %p48 = por %p46, %p47
    %p49 = scmp.ne.s32.totalorder %s35, %s36
    %p50 = scmp.eq.s32.totalorder %s16, 2
    %p51 = por %p49, %p50
    %p53 = scmp.ne.s32.totalorder %s36, %s52
    %p54 = scmp.eq.s32.totalorder %s16, 0
    %p55 = por %p53, %p54
    %s56 = ssub.s32 %s17, %s29
    %p57 = scmp.eq.s32.totalorder %s56, 0
    %s59 = sadd.s32 %s58, 1
    %s60 = scalar_select %p57, %s58, %s59
    %p63 = pneg %p57
    %p64 = scmp.eq.s32.totalorder %s10, 2
    %p65 = por %p63, %p64
    %p66 = scmp.ne.s32.totalorder %s58, %s61
    %p67 = scmp.eq.s32.totalorder %s10, 0
    %p68 = por %p66, %p67
    %p69 = scmp.ne.s32.totalorder %s58, %s61
    %p70 = scmp.eq.s32.totalorder %s15, 2
    %p71 = por %p69, %p70
    %p72 = scmp.ne.s32.totalorder %s61, %s62
    %p73 = scmp.eq.s32.totalorder %s15, 0
    %p74 = por %p72, %p73
    %p75 = scmp.ne.s32.totalorder %s61, %s62
    %p76 = scmp.eq.s32.totalorder %s16, 2
    %p77 = por %p75, %p76
    %p79 = scmp.ne.s32.totalorder %s62, %s78
    %p80 = scmp.eq.s32.totalorder %s16, 0
    %p81 = por %p79, %p80
    %s82 = ssub.s32 %s17, %s29
    %p83 = scmp.eq.s32.totalorder %s82, 0
    %s85 = sadd.s32 %s84, 1
    %s86 = scalar_select %p83, %s84, %s85
    %p89 = pneg %p83
    %p90 = scmp.eq.s32.totalorder %s10, 2
    %p91 = por %p89, %p90
    %p92 = scmp.ne.s32.totalorder %s84, %s87
    %p93 = scmp.eq.s32.totalorder %s10, 0
    %p94 = por %p92, %p93
    %p95 = scmp.ne.s32.totalorder %s84, %s87
    %p96 = scmp.eq.s32.totalorder %s15, 2
    %p97 = por %p95, %p96
    %p98 = scmp.ne.s32.totalorder %s87, %s88
    %p99 = scmp.eq.s32.totalorder %s15, 0
    %p100 = por %p98, %p99
    %p101 = scmp.ne.s32.totalorder %s87, %s88
    %p102 = scmp.eq.s32.totalorder %s16, 2
    %p103 = por %p101, %p102
    %p105 = scmp.ne.s32.totalorder %s88, %s104
    %p106 = scmp.eq.s32.totalorder %s16, 0
    %p107 = por %p105, %p106
    %s108 = ssub.s32 %s17, %s29
    %p109 = scmp.eq.s32.totalorder %s108, 0
    %s111 = sadd.s32 %s110, 1
    %s112 = scalar_select %p109, %s110, %s111
    %p115 = pneg %p109
    %p116 = scmp.eq.s32.totalorder %s10, 2
    %p117 = por %p115, %p116
    %p118 = scmp.ne.s32.totalorder %s110, %s113
    %p119 = scmp.eq.s32.totalorder %s10, 0
    %p120 = por %p118, %p119
    %p121 = scmp.ne.s32.totalorder %s110, %s113
    %p122 = scmp.eq.s32.totalorder %s15, 2
    %p123 = por %p121, %p122
    %p124 = scmp.ne.s32.totalorder %s113, %s114
    %p125 = scmp.eq.s32.totalorder %s15, 0
    %p126 = por %p124, %p125
    %p127 = scmp.ne.s32.totalorder %s113, %s114
    %p128 = scmp.eq.s32.totalorder %s16, 2
    %p129 = por %p127, %p128
    %p131 = scmp.ne.s32.totalorder %s114, %s130
    %p132 = scmp.eq.s32.totalorder %s16, 0
    %p133 = por %p131, %p132
    %s134 = ssub.s32 %s17, %s29
    %s135 = ssub.s32 %s18, %s25
    %s136 = sor.u32 %s134, %s135
    %p137 = scmp.eq.s32.totalorder %s136, 0
    %s139 = sadd.s32 %s138, 1
    %s140 = scalar_select %p137, %s138, %s139
    %p143 = pneg %p137
    %p144 = scmp.eq.s32.totalorder %s10, 2
    %p145 = por %p143, %p144
    %p146 = scmp.ne.s32.totalorder %s138, %s141
    %p147 = scmp.eq.s32.totalorder %s10, 0
    %p148 = por %p146, %p147
    %p149 = scmp.ne.s32.totalorder %s138, %s141
    %p150 = scmp.eq.s32.totalorder %s15, 2
    %p151 = por %p149, %p150
    %p152 = scmp.ne.s32.totalorder %s141, %s142
    %p153 = scmp.eq.s32.totalorder %s15, 0
    %p154 = por %p152, %p153
    %p155 = scmp.ne.s32.totalorder %s141, %s142
    %p156 = scmp.eq.s32.totalorder %s16, 2
    %p157 = por %p155, %p156
    %p159 = scmp.ne.s32.totalorder %s142, %s158
    %p160 = scmp.eq.s32.totalorder %s16, 0
    %p161 = por %p159, %p160
    %p162 = scmp.le.s32.totalorder 1, %s10
    %p163 = scmp.lt.s32.totalorder %s10, 4
    %p164 = pnand %p162, %p163
    %p165 = pneg %p164
    // Predicated region
    $region9: #{_forward_impl.1} parent=5 // pred_check
      _
    $region10: #{_forward_impl.1} parent=5 // pred_check_branch
      %167 = sbr.rel (%p164) target = $region12
    $region11: #{_forward_impl.1} parent=5 // pred_region
      %s168 = ssub.s32 %s10, 1
      // Predicated region
      $region13: #{_forward_impl.1} parent=11 // pred_check
        %p169 = pneg %p48
      $region14: #{_forward_impl.1} parent=11 // pred_check_branch
        %171 = sbr.rel (%p169) target = $region16
      $region15: #{_forward_impl.1} parent=11 // pred_region
        %s172 = smul.u32 50, %s20
        %p173 = scmp.lt.s32.totalorder %s172, 49
        %s174 = scalar_select %p173, %s172, 49
        %s175 = smul.addr %s174, 4
        %s176 = scalar_lea.vmem %s0, %s175
        %s177 = smul.u32 50, %s20
      $region16: #{_forward_impl.1} parent=11 // pred_fallthru
        _
    $region12: #{_forward_impl.1} parent=5 // pred_fallthru
      _
    %p178 = scmp.lt.s32.totalorder %s10, 3
    // Predicated region
    $region17: #{_forward_impl.1} parent=5 // pred_check
      %p179 = pneg %p178
    $region18: #{_forward_impl.1} parent=5 // pred_check_branch
      %181 = sbr.rel (%p179) target = $region20
    $region19: #{_forward_impl.1} parent=5 // pred_region
      // Predicated region
      $region21: #{_forward_impl.1} parent=19 // pred_check
        %p182 = pneg %p68
      $region22: #{_forward_impl.1} parent=19 // pred_check_branch
        %184 = sbr.rel (%p182) target = $region24
      $region23: #{_forward_impl.1} parent=19 // pred_region
        %p185 = scmp.lt.s32.totalorder %s17, 2
        %s186 = scalar_select %p185, %s17, 2
        %s187 = smul.addr %s186, 64
        %s188 = smul.addr %s187, 4
        %s189 = scalar_lea.vmem %s1, %s188
      $region24: #{_forward_impl.1} parent=19 // pred_fallthru
        _
      // Predicated region
      $region25: #{_forward_impl.1} parent=19 // pred_check
        %p190 = pneg %p94
      $region26: #{_forward_impl.1} parent=19 // pred_check_branch
        %192 = sbr.rel (%p190) target = $region28
      $region27: #{_forward_impl.1} parent=19 // pred_region
        %p193 = scmp.lt.s32.totalorder %s17, 2
        %s194 = scalar_select %p193, %s17, 2
        %s195 = smul.addr %s194, 3
        %s196 = scalar_lea.vmem %s2, %s195
      $region28: #{_forward_impl.1} parent=19 // pred_fallthru
        _
      // Predicated region
      $region29: #{_forward_impl.1} parent=19 // pred_check
        %p197 = pneg %p120
      $region30: #{_forward_impl.1} parent=19 // pred_check_branch
        %199 = sbr.rel (%p197) target = $region32
      $region31: #{_forward_impl.1} parent=19 // pred_region
        %p200 = scmp.lt.s32.totalorder %s17, 2
        %s201 = scalar_select %p200, %s17, 2
        %s202 = smul.addr %s201, 48
        %s203 = smul.addr %s202, 4
        %s204 = scalar_lea.vmem %s3, %s203
      $region32: #{_forward_impl.1} parent=19 // pred_fallthru
        _
    $region20: #{_forward_impl.1} parent=5 // pred_fallthru
      _
    %p205 = scmp.le.s32.totalorder 1, %s10
    %p206 = scmp.lt.s32.totalorder %s10, 4
    %p207 = pnand %p205, %p206
    %p208 = pneg %p207
    // Predicated region
    $region33: #{_forward_impl.1} parent=5 // pred_check
      _
    $region34: #{_forward_impl.1} parent=5 // pred_check_branch
      %210 = sbr.rel (%p207) target = $region36
    $region35: #{_forward_impl.1} parent=5 // pred_region
      %s211 = ssub.s32 %s10, 1
      %s212 = smul.u32 50, %s20
      %p213 = scmp.lt.s32.totalorder %s212, 49
      %s214 = scalar_select %p213, %s212, 49
      %s215 = smul.addr %s214, 4
      %s216 = scalar_lea.vmem %s0, %s215
      %p217 = pneg %p48
      %p218 = pneg %p45
      %p219 = scmp.lt.s32.totalorder %s19, 2
      %s220 = scalar_select %p219, %s19, 2
      %s221 = smul.addr %s220, 64
      %s222 = smul.addr %s221, 4
      %s223 = scalar_lea.vmem %s1, %s222
      %p224 = pneg %p74
      %p225 = pneg %p71
      %p226 = scmp.lt.s32.totalorder %s19, 2
      %s227 = scalar_select %p226, %s19, 2
      %s228 = smul.addr %s227, 3
      %s229 = scalar_lea.vmem %s2, %s228
      %p230 = pneg %p100
      %p231 = pneg %p97
      %p232 = scmp.lt.s32.totalorder %s19, 2
      %s233 = scalar_select %p232, %s19, 2
      %s234 = smul.addr %s233, 48
      %s235 = smul.addr %s234, 4
      %s236 = scalar_lea.vmem %s3, %s235
      %p237 = pneg %p126
      %p238 = pneg %p123
      %p239 = pneg %p154
      %p240 = pneg %p151
      %s241 = smul.u32 50, %s20
      %p242 = scmp.lt.s32.totalorder %s19, 2
      %s243 = scalar_select %p242, %s19, 2
      %p244 = scmp.lt.s32.totalorder %s241, 49
      %s245 = scalar_select %p244, %s241, 49
      %s246 = smul.addr %s245, 3
      %s247 = smul.addr %s243, 150
      %s248 = sadd.s32 %s246, %s247
      %s249 = smul.addr %s248, 4
      %s250 = scalar_lea.vmem %s4, %s249
      %s251 = smul.u32 50, %s20
      %p252 = scmp.lt.s32.totalorder %s251, 49
      %s253 = scalar_select %p252, %s251, 49
      %s254 = smul.addr %s253, 4
      %s255 = scalar_lea.vmem %s0, %s254
      %s256 = smul.u32 50, %s20
      %p257 = scmp.lt.s32.totalorder %s19, 2
      %s258 = scalar_select %p257, %s19, 2
      %s259 = smul.addr %s258, 64
      %s260 = smul.addr %s259, 4
      %s261 = scalar_lea.vmem %s1, %s260
      %p262 = scmp.lt.s32.totalorder %s19, 2
      %s263 = scalar_select %p262, %s19, 2
      %s264 = smul.addr %s263, 3
      %s265 = scalar_lea.vmem %s2, %s264
      %p266 = scmp.lt.s32.totalorder %s19, 2
      %s267 = scalar_select %p266, %s19, 2
      %s268 = smul.addr %s267, 48
      %s269 = smul.addr %s268, 4
      %s270 = scalar_lea.vmem %s3, %s269
      %s271 = smul.u32 50, %s20
      %p272 = scmp.lt.s32.totalorder %s19, 2
      %s273 = scalar_select %p272, %s19, 2
      %p274 = scmp.lt.s32.totalorder %s271, 49
      %s275 = scalar_select %p274, %s271, 49
      %s276 = smul.addr %s275, 3
      %s277 = smul.addr %s273, 150
      %s278 = sadd.s32 %s276, %s277
      %s279 = smul.addr %s278, 4
      %s280 = scalar_lea.vmem %s4, %s279
      %s281 = smul.u32 50, %s20
      %v283 = vld [vmem:[%s255] sm:$0xf]
      %v284 = vld [vmem:[%s255 + $0x4] sm:$0xf]
      %v285 = vld [vmem:[%s255 + $0x8] sm:$0xf]
      %v286 = vld [vmem:[%s255 + $0xc] sm:$0xf]
      %v287 = vld [vmem:[%s255 + $0x10] sm:$0xf]
      %v288 = vld [vmem:[%s255 + $0x14] sm:$0xf]
      %v289 = vld [vmem:[%s255 + $0x18] sm:$0xf]
      %v290 = vld [vmem:[%s255 + $0x1c] sm:$0xf]
      %v291 = vld [vmem:[%s255 + $0x20] sm:$0xf]
      %v292 = vld [vmem:[%s255 + $0x24] sm:$0xf]
      %v293 = vld [vmem:[%s255 + $0x28] sm:$0xf]
      %v294 = vld [vmem:[%s255 + $0x2c] sm:$0xf]
      %v295 = vld [vmem:[%s255 + $0x30] sm:$0xf]
      %v296 = vld [vmem:[%s255 + $0x34] sm:$0xf]
      %v297 = vld [vmem:[%s255 + $0x38] sm:$0xf]
      %v298 = vld [vmem:[%s255 + $0x3c] sm:$0xf]
      %v299 = vld [vmem:[%s255 + $0x40] sm:$0xf]
      %v300 = vld [vmem:[%s255 + $0x44] sm:$0xf]
      %v301 = vld [vmem:[%s255 + $0x48] sm:$0xf]
      %v302 = vld [vmem:[%s255 + $0x4c] sm:$0xf]
      %v303 = vld [vmem:[%s255 + $0x50] sm:$0xf]
      %v304 = vld [vmem:[%s255 + $0x54] sm:$0xf]
      %v305 = vld [vmem:[%s255 + $0x58] sm:$0xf]
      %v306 = vld [vmem:[%s255 + $0x5c] sm:$0xf]
      %v307 = vld [vmem:[%s255 + $0x60] sm:$0xf]
      %v308 = vld [vmem:[%s255 + $0x64] sm:$0xf]
      %v309 = vld [vmem:[%s255 + $0x68] sm:$0xf]
      %v310 = vld [vmem:[%s255 + $0x6c] sm:$0xf]
      %v311 = vld [vmem:[%s255 + $0x70] sm:$0xf]
      %v312 = vld [vmem:[%s255 + $0x74] sm:$0xf]
      %v313 = vld [vmem:[%s255 + $0x78] sm:$0xf]
      %v314 = vld [vmem:[%s255 + $0x7c] sm:$0xf]
      %v315 = vld [vmem:[%s255 + $0x80] sm:$0xf]
      %v316 = vld [vmem:[%s255 + $0x84] sm:$0xf]
      %v317 = vld [vmem:[%s255 + $0x88] sm:$0xf]
      %v318 = vld [vmem:[%s255 + $0x8c] sm:$0xf]
      %v319 = vld [vmem:[%s255 + $0x90] sm:$0xf]
      %v320 = vld [vmem:[%s255 + $0x94] sm:$0xf]
      %v321 = vld [vmem:[%s255 + $0x98] sm:$0xf]
      %v322 = vld [vmem:[%s255 + $0x9c] sm:$0xf]
      %v323 = vld [vmem:[%s255 + $0xa0] sm:$0xf]
      %v324 = vld [vmem:[%s255 + $0xa4] sm:$0xf]
      %v325 = vld [vmem:[%s255 + $0xa8] sm:$0xf]
      %v326 = vld [vmem:[%s255 + $0xac] sm:$0xf]
      %v327 = vld [vmem:[%s255 + $0xb0] sm:$0xf]
      %v328 = vld [vmem:[%s255 + $0xb4] sm:$0xf]
      %v329 = vld [vmem:[%s255 + $0xb8] sm:$0xf]
      %v330 = vld [vmem:[%s255 + $0xbc] sm:$0xf]
      %v331 = vld [vmem:[%s255 + $0xc0] sm:$0xf]
      %v332 = vld [vmem:[%s255 + $0xc4] sm:$0xf]
      %v333 = vld [vmem:[%s261] sm:$0xff]
      %v334 = vld [vmem:[%s261 + $0x8] sm:$0xff]
      %v335 = vld [vmem:[%s261 + $0x10] sm:$0xff]
      %v336 = vld [vmem:[%s261 + $0x18] sm:$0xff]
      %v337 = vld [vmem:[%s261 + $0x20] sm:$0xff]
      %v338 = vld [vmem:[%s261 + $0x28] sm:$0xff]
      %v339 = vld [vmem:[%s261 + $0x30] sm:$0xff]
      %v340 = vld [vmem:[%s261 + $0x38] sm:$0xff]
      %v341 = vld [vmem:[%s261 + $0x40] sm:$0xff]
      %v342 = vld [vmem:[%s261 + $0x48] sm:$0xff]
      %v343 = vld [vmem:[%s261 + $0x50] sm:$0xff]
      %v344 = vld [vmem:[%s261 + $0x58] sm:$0xff]
      %v345 = vld [vmem:[%s261 + $0x60] sm:$0xff]
      %v346 = vld [vmem:[%s261 + $0x68] sm:$0xff]
      %v347 = vld [vmem:[%s261 + $0x70] sm:$0xff]
      %v348 = vld [vmem:[%s261 + $0x78] sm:$0xff]
      %v349 = vld [vmem:[%s261 + $0x80] sm:$0xff]
      %v350 = vld [vmem:[%s261 + $0x88] sm:$0xff]
      %v351 = vld [vmem:[%s261 + $0x90] sm:$0xff]
      %v352 = vld [vmem:[%s261 + $0x98] sm:$0xff]
      %v353 = vld [vmem:[%s261 + $0xa0] sm:$0xff]
      %v354 = vld [vmem:[%s261 + $0xa8] sm:$0xff]
      %v355 = vld [vmem:[%s261 + $0xb0] sm:$0xff]
      %v356 = vld [vmem:[%s261 + $0xb8] sm:$0xff]
      %v357 = vld [vmem:[%s261 + $0xc0] sm:$0xff]
      %v358 = vld [vmem:[%s261 + $0xc8] sm:$0xff]
      %v359 = vld [vmem:[%s261 + $0xd0] sm:$0xff]
      %v360 = vld [vmem:[%s261 + $0xd8] sm:$0xff]
      %v361 = vld [vmem:[%s261 + $0xe0] sm:$0xff]
      %v362 = vld [vmem:[%s261 + $0xe8] sm:$0xff]
      %v363 = vld [vmem:[%s261 + $0xf0] sm:$0xff]
      %v364 = vld [vmem:[%s261 + $0xf8] sm:$0xff]
      %v415 = vunpack.c.l.b16 %v283
      %v416 = vunpack.c.l.b16 %v284
      %v417 = vunpack.c.l.b16 %v285
      %v418 = vunpack.c.l.b16 %v286
      %v419 = vunpack.c.l.b16 %v287
      %v420 = vunpack.c.l.b16 %v288
      %v421 = vunpack.c.l.b16 %v289
      %v422 = vunpack.c.l.b16 %v290
      %v423 = vunpack.c.l.b16 %v291
      %v424 = vunpack.c.l.b16 %v292
      %v425 = vunpack.c.l.b16 %v293
      %v426 = vunpack.c.l.b16 %v294
      %v427 = vunpack.c.l.b16 %v295
      %v428 = vunpack.c.l.b16 %v296
      %v429 = vunpack.c.l.b16 %v297
      %v430 = vunpack.c.l.b16 %v298
      %v431 = vunpack.c.l.b16 %v299
      %v432 = vunpack.c.l.b16 %v300
      %v433 = vunpack.c.l.b16 %v301
      %v434 = vunpack.c.l.b16 %v302
      %v435 = vunpack.c.l.b16 %v303
      %v436 = vunpack.c.l.b16 %v304
      %v437 = vunpack.c.l.b16 %v305
      %v438 = vunpack.c.l.b16 %v306
      %v439 = vunpack.c.l.b16 %v307
      %v440 = vunpack.c.l.b16 %v308
      %v441 = vunpack.c.l.b16 %v309
      %v442 = vunpack.c.l.b16 %v310
      %v443 = vunpack.c.l.b16 %v311
      %v444 = vunpack.c.l.b16 %v312
      %v445 = vunpack.c.l.b16 %v313
      %v446 = vunpack.c.l.b16 %v314
      %v447 = vunpack.c.l.b16 %v315
      %v448 = vunpack.c.l.b16 %v316
      %v449 = vunpack.c.l.b16 %v317
      %v450 = vunpack.c.l.b16 %v318
      %v451 = vunpack.c.l.b16 %v319
      %v452 = vunpack.c.l.b16 %v320
      %v453 = vunpack.c.l.b16 %v321
      %v454 = vunpack.c.l.b16 %v322
      %v455 = vunpack.c.l.b16 %v323
      %v456 = vunpack.c.l.b16 %v324
      %v457 = vunpack.c.l.b16 %v325
      %v458 = vunpack.c.l.b16 %v326
      %v459 = vunpack.c.l.b16 %v327
      %v460 = vunpack.c.l.b16 %v328
      %v461 = vunpack.c.l.b16 %v329
      %v462 = vunpack.c.l.b16 %v330
      %v463 = vunpack.c.l.b16 %v331
      %v464 = vunpack.c.l.b16 %v332
      %v465 = vpack.c.b16 %v416, %v415
      %v466 = vpack.c.b16 %v418, %v417
      %v467 = vpack.c.b16 %v420, %v419
      %v468 = vpack.c.b16 %v422, %v421
      %v469 = vpack.c.b16 %v424, %v423
      %v470 = vpack.c.b16 %v426, %v425
      %v471 = vpack.c.b16 %v428, %v427
      %v472 = vpack.c.b16 %v430, %v429
      %v473 = vpack.c.b16 %v432, %v431
      %v474 = vpack.c.b16 %v434, %v433
      %v475 = vpack.c.b16 %v436, %v435
      %v476 = vpack.c.b16 %v438, %v437
      %v477 = vpack.c.b16 %v440, %v439
      %v478 = vpack.c.b16 %v442, %v441
      %v479 = vpack.c.b16 %v444, %v443
      %v480 = vpack.c.b16 %v446, %v445
      %v481 = vpack.c.b16 %v448, %v447
      %v482 = vpack.c.b16 %v450, %v449
      %v483 = vpack.c.b16 %v452, %v451
      %v484 = vpack.c.b16 %v454, %v453
      %v485 = vpack.c.b16 %v456, %v455
      %v486 = vpack.c.b16 %v458, %v457
      %v487 = vpack.c.b16 %v460, %v459
      %v488 = vpack.c.b16 %v462, %v461
      %v489 = vpack.c.b16 %v464, %v463
      %v547 = vunpack.c.l.b16 %v333
      %v548 = vunpack.c.h.b16 %v333
      %v549 = vunpack.c.l.b16 %v334
      %v550 = vunpack.c.h.b16 %v334
      %v551 = vunpack.c.l.b16 %v335
      %v552 = vunpack.c.h.b16 %v335
      %v553 = vunpack.c.l.b16 %v336
      %v554 = vunpack.c.h.b16 %v336
      %v555 = vunpack.c.l.b16 %v337
      %v556 = vunpack.c.h.b16 %v337
      %v557 = vunpack.c.l.b16 %v338
      %v558 = vunpack.c.h.b16 %v338
      %v559 = vunpack.c.l.b16 %v339
      %v560 = vunpack.c.h.b16 %v339
      %v561 = vunpack.c.l.b16 %v340
      %v562 = vunpack.c.h.b16 %v340
      %v563 = vunpack.c.l.b16 %v341
      %v564 = vunpack.c.h.b16 %v341
      %v565 = vunpack.c.l.b16 %v342
      %v566 = vunpack.c.h.b16 %v342
      %v567 = vunpack.c.l.b16 %v343
      %v568 = vunpack.c.h.b16 %v343
      %v569 = vunpack.c.l.b16 %v344
      %v570 = vunpack.c.h.b16 %v344
      %v571 = vunpack.c.l.b16 %v345
      %v572 = vunpack.c.h.b16 %v345
      %v573 = vunpack.c.l.b16 %v346
      %v574 = vunpack.c.h.b16 %v346
      %v575 = vunpack.c.l.b16 %v347
      %v576 = vunpack.c.h.b16 %v347
      %v577 = vunpack.c.l.b16 %v348
      %v578 = vunpack.c.h.b16 %v348
      %v579 = vunpack.c.l.b16 %v349
      %v580 = vunpack.c.h.b16 %v349
      %v581 = vunpack.c.l.b16 %v350
      %v582 = vunpack.c.h.b16 %v350
      %v583 = vunpack.c.l.b16 %v351
      %v584 = vunpack.c.h.b16 %v351
      %v585 = vunpack.c.l.b16 %v352
      %v586 = vunpack.c.h.b16 %v352
      %v587 = vunpack.c.l.b16 %v353
      %v588 = vunpack.c.h.b16 %v353
      %v589 = vunpack.c.l.b16 %v354
      %v590 = vunpack.c.h.b16 %v354
      %v591 = vunpack.c.l.b16 %v355
      %v592 = vunpack.c.h.b16 %v355
      %v593 = vunpack.c.l.b16 %v356
      %v594 = vunpack.c.h.b16 %v356
      %v595 = vunpack.c.l.b16 %v357
      %v596 = vunpack.c.h.b16 %v357
      %v597 = vunpack.c.l.b16 %v358
      %v598 = vunpack.c.h.b16 %v358
      %v599 = vunpack.c.l.b16 %v359
      %v600 = vunpack.c.h.b16 %v359
      %v601 = vunpack.c.l.b16 %v360
      %v602 = vunpack.c.h.b16 %v360
      %v603 = vunpack.c.l.b16 %v361
      %v604 = vunpack.c.h.b16 %v361
      %v605 = vunpack.c.l.b16 %v362
      %v606 = vunpack.c.h.b16 %v362
      %v607 = vunpack.c.l.b16 %v363
      %v608 = vunpack.c.h.b16 %v363
      %v609 = vunpack.c.l.b16 %v364
      %v610 = vunpack.c.h.b16 %v364
      %v611 = vpack.c.b16 %v551, %v547
      %v612 = vpack.c.b16 %v552, %v548
      %v613 = vpack.c.b16 %v553, %v549
      %v614 = vpack.c.b16 %v554, %v550
      %v615 = vpack.c.b16 %v559, %v555
      %v616 = vpack.c.b16 %v560, %v556
      %v617 = vpack.c.b16 %v561, %v557
      %v618 = vpack.c.b16 %v562, %v558
      %v619 = vpack.c.b16 %v567, %v563
      %v620 = vpack.c.b16 %v568, %v564
      %v621 = vpack.c.b16 %v569, %v565
      %v622 = vpack.c.b16 %v570, %v566
      %v623 = vpack.c.b16 %v575, %v571
      %v624 = vpack.c.b16 %v576, %v572
      %v625 = vpack.c.b16 %v577, %v573
      %v626 = vpack.c.b16 %v578, %v574
      %v627 = vpack.c.b16 %v583, %v579
      %v628 = vpack.c.b16 %v584, %v580
      %v629 = vpack.c.b16 %v585, %v581
      %v630 = vpack.c.b16 %v586, %v582
      %v631 = vpack.c.b16 %v591, %v587
      %v632 = vpack.c.b16 %v592, %v588
      %v633 = vpack.c.b16 %v593, %v589
      %v634 = vpack.c.b16 %v594, %v590
      %v635 = vpack.c.b16 %v599, %v595
      %v636 = vpack.c.b16 %v600, %v596
      %v637 = vpack.c.b16 %v601, %v597
      %v638 = vpack.c.b16 %v602, %v598
      %v639 = vpack.c.b16 %v607, %v603
      %v640 = vpack.c.b16 %v608, %v604
      %v641 = vpack.c.b16 %v609, %v605
      %v642 = vpack.c.b16 %v610, %v606
      %675 = vmatprep.subr.bf16.mxu0 %v612
      %676 = vmatpush1.bf16.msra.mxu0 %v611
      %677 = vmatprep.subr.bf16.mxu0 %v616
      %678 = vmatpush1.bf16.msra.mxu0 %v615
      %679 = vmatprep.subr.bf16.mxu0 %v620
      %680 = vmatpush1.bf16.msra.mxu0 %v619
      %681 = vmatprep.subr.bf16.mxu0 %v624
      %682 = vmatpush1.bf16.msra.mxu0 %v623
      %683 = vmatprep.subr.bf16.mxu0 %v628
      %684 = vmatpush1.bf16.msra.mxu0 %v627
      %685 = vmatprep.subr.bf16.mxu0 %v632
      %686 = vmatpush1.bf16.msra.mxu0 %v631
      %687 = vmatprep.subr.bf16.mxu0 %v636
      %688 = vmatpush1.bf16.msra.mxu0 %v635
      %689 = vmatprep.subr.bf16.mxu0 %v640
      %690 = vmatpush1.bf16.msra.mxu0 %v639
      %691 = vmatprep.subr.bf16.mxu0 0
      %692 = vmatpush1.bf16.msra.mxu0 0
      %693 = vmatprep.subr.bf16.mxu0 0
      %694 = vmatpush1.bf16.msra.mxu0 0
      %695 = vmatprep.subr.bf16.mxu0 0
      %696 = vmatpush1.bf16.msra.mxu0 0
      %697 = vmatprep.subr.bf16.mxu0 0
      %698 = vmatpush1.bf16.msra.mxu0 0
      %699 = vmatprep.subr.bf16.mxu0 0
      %700 = vmatpush1.bf16.msra.mxu0 0
      %701 = vmatprep.subr.bf16.mxu0 0
      %702 = vmatpush1.bf16.msra.mxu0 0
      %703 = vmatprep.subr.bf16.mxu0 0
      %704 = vmatpush1.bf16.msra.mxu0 0
      %705 = vmatprep.subr.bf16.mxu0 0
      %706 = vmatpush1.bf16.msra.mxu0 0
      %707 = vmatprep.mubr.bf16.mxu0 0
      %708 = vmatmul.mubr.bf16.gmra.mrb[0].mxu0 %v465
      %v709 = vpop.f32.mrb[0].mxu0
      %v710 = vadd.f32 0.0, %v709
      %v711 = vpop.f32.mrb[0].mxu0
      %v712 = vadd.f32 0.0, %v711
      %v713 = vpop.f32.mrb[0].mxu0
      %v714 = vadd.f32 0.0, %v713
      %v715 = vpop.f32.mrb[0].mxu0
      %v716 = vadd.f32 0.0, %v715
      %717 = vmatprep.mubr.bf16.mxu0 0
      %718 = vmatmul.mubr.bf16.gmra.mrb[0].mxu0 %v466
      %v719 = vpop.f32.mrb[0].mxu0
      %v720 = vadd.f32 0.0, %v719
      %v721 = vpop.f32.mrb[0].mxu0
      %v722 = vadd.f32 0.0, %v721
      %v723 = vpop.f32.mrb[0].mxu0
      %v724 = vadd.f32 0.0, %v723
      %v725 = vpop.f32.mrb[0].mxu0
      %v726 = vadd.f32 0.0, %v725
      %727 = vmatprep.mubr.bf16.mxu0 0
      %728 = vmatmul.mubr.bf16.gmra.mrb[0].mxu0 %v467
      %v729 = vpop.f32.mrb[0].mxu0
      %v730 = vadd.f32 0.0, %v729
      %v731 = vpop.f32.mrb[0].mxu0
      %v732 = vadd.f32 0.0, %v731
      %v733 = vpop.f32.mrb[0].mxu0
      %v734 = vadd.f32 0.0, %v733
      %v735 = vpop.f32.mrb[0].mxu0
      %v736 = vadd.f32 0.0, %v735
      %737 = vmatprep.mubr.bf16.mxu0 0
      %738 = vmatmul.mubr.bf16.gmra.mrb[0].mxu0 %v468
      %v739 = vpop.f32.mrb[0].mxu0
      %v740 = vadd.f32 0.0, %v739
      %v741 = vpop.f32.mrb[0].mxu0
      %v742 = vadd.f32 0.0, %v741
      %v743 = vpop.f32.mrb[0].mxu0
      %v744 = vadd.f32 0.0, %v743
      %v745 = vpop.f32.mrb[0].mxu0
      %v746 = vadd.f32 0.0, %v745
      %747 = vmatprep.mubr.bf16.mxu0 0
      %748 = vmatmul.mubr.bf16.gmra.mrb[0].mxu0 %v469
      %v749 = vpop.f32.mrb[0].mxu0
      %v750 = vadd.f32 0.0, %v749
      %v751 = vpop.f32.mrb[0].mxu0
      %v752 = vadd.f32 0.0, %v751
      %v753 = vpop.f32.mrb[0].mxu0
      %v754 = vadd.f32 0.0, %v753
      %v755 = vpop.f32.mrb[0].mxu0
      %v756 = vadd.f32 0.0, %v755
      %757 = vmatprep.mubr.bf16.mxu0 0
      %758 = vmatmul.mubr.bf16.gmra.mrb[0].mxu0 %v470
      %v759 = vpop.f32.mrb[0].mxu0
      %v760 = vadd.f32 0.0, %v759
      %v761 = vpop.f32.mrb[0].mxu0
      %v762 = vadd.f32 0.0, %v761
      %v763 = vpop.f32.mrb[0].mxu0
      %v764 = vadd.f32 0.0, %v763
      %v765 = vpop.f32.mrb[0].mxu0
      %v766 = vadd.f32 0.0, %v765
      %767 = vmatprep.mubr.bf16.mxu0 0
      %768 = vmatmul.mubr.bf16.gmra.mrb[0].mxu0 %v471
      %v769 = vpop.f32.mrb[0].mxu0
      %v770 = vadd.f32 0.0, %v769
      %v771 = vpop.f32.mrb[0].mxu0
      %v772 = vadd.f32 0.0, %v771
      %v773 = vpop.f32.mrb[0].mxu0
      %v774 = vadd.f32 0.0, %v773
      %v775 = vpop.f32.mrb[0].mxu0
      %v776 = vadd.f32 0.0, %v775
      %777 = vmatprep.mubr.bf16.mxu0 0
      %778 = vmatmul.mubr.bf16.gmra.mrb[0].mxu0 %v472
      %v779 = vpop.f32.mrb[0].mxu0
      %v780 = vadd.f32 0.0, %v779
      %v781 = vpop.f32.mrb[0].mxu0
      %v782 = vadd.f32 0.0, %v781
      %v783 = vpop.f32.mrb[0].mxu0
      %v784 = vadd.f32 0.0, %v783
      %v785 = vpop.f32.mrb[0].mxu0
      %v786 = vadd.f32 0.0, %v785
      %787 = vmatprep.mubr.bf16.mxu0 0
      %788 = vmatmul.mubr.bf16.gmra.mrb[0].mxu0 %v473
      %v789 = vpop.f32.mrb[0].mxu0
      %v790 = vadd.f32 0.0, %v789
      %v791 = vpop.f32.mrb[0].mxu0
      %v792 = vadd.f32 0.0, %v791
      %v793 = vpop.f32.mrb[0].mxu0
      %v794 = vadd.f32 0.0, %v793
      %v795 = vpop.f32.mrb[0].mxu0
      %v796 = vadd.f32 0.0, %v795
      %797 = vmatprep.mubr.bf16.mxu0 0
      %798 = vmatmul.mubr.bf16.gmra.mrb[0].mxu0 %v474
      %v799 = vpop.f32.mrb[0].mxu0
      %v800 = vadd.f32 0.0, %v799
      %v801 = vpop.f32.mrb[0].mxu0
      %v802 = vadd.f32 0.0, %v801
      %v803 = vpop.f32.mrb[0].mxu0
      %v804 = vadd.f32 0.0, %v803
      %v805 = vpop.f32.mrb[0].mxu0
      %v806 = vadd.f32 0.0, %v805
      %807 = vmatprep.mubr.bf16.mxu0 0
      %808 = vmatmul.mubr.bf16.gmra.mrb[0].mxu0 %v475
      %v809 = vpop.f32.mrb[0].mxu0
      %v810 = vadd.f32 0.0, %v809
      %v811 = vpop.f32.mrb[0].mxu0
      %v812 = vadd.f32 0.0, %v811
      %v813 = vpop.f32.mrb[0].mxu0
      %v814 = vadd.f32 0.0, %v813
      %v815 = vpop.f32.mrb[0].mxu0
      %v816 = vadd.f32 0.0, %v815
      %817 = vmatprep.mubr.bf16.mxu0 0
      %818 = vmatmul.mubr.bf16.gmra.mrb[0].mxu0 %v476
      %v819 = vpop.f32.mrb[0].mxu0
      %v820 = vadd.f32 0.0, %v819
      %v821 = vpop.f32.mrb[0].mxu0
      %v822 = vadd.f32 0.0, %v821
      %v823 = vpop.f32.mrb[0].mxu0
      %v824 = vadd.f32 0.0, %v823
      %v825 = vpop.f32.mrb[0].mxu0
      %v826 = vadd.f32 0.0, %v825
      %827 = vmatprep.mubr.bf16.mxu0 0
      %828 = vmatmul.mubr.bf16.gmra.mrb[0].mxu0 %v477
      %v829 = vpop.f32.mrb[0].mxu0
      %v830 = vadd.f32 0.0, %v829
      %v831 = vpop.f32.mrb[0].mxu0
      %v832 = vadd.f32 0.0, %v831
      %v833 = vpop.f32.mrb[0].mxu0
      %v834 = vadd.f32 0.0, %v833
      %v835 = vpop.f32.mrb[0].mxu0
      %v836 = vadd.f32 0.0, %v835
      %837 = vmatprep.mubr.bf16.mxu0 0
      %838 = vmatmul.mubr.bf16.gmra.mrb[0].mxu0 %v478
      %v839 = vpop.f32.mrb[0].mxu0
      %v840 = vadd.f32 0.0, %v839
      %v841 = vpop.f32.mrb[0].mxu0
      %v842 = vadd.f32 0.0, %v841
      %v843 = vpop.f32.mrb[0].mxu0
      %v844 = vadd.f32 0.0, %v843
      %v845 = vpop.f32.mrb[0].mxu0
      %v846 = vadd.f32 0.0, %v845
      %847 = vmatprep.mubr.bf16.mxu0 0
      %848 = vmatmul.mubr.bf16.gmra.mrb[0].mxu0 %v479
      %v849 = vpop.f32.mrb[0].mxu0
      %v850 = vadd.f32 0.0, %v849
      %v851 = vpop.f32.mrb[0].mxu0
      %v852 = vadd.f32 0.0, %v851
      %v853 = vpop.f32.mrb[0].mxu0
      %v854 = vadd.f32 0.0, %v853
      %v855 = vpop.f32.mrb[0].mxu0
      %v856 = vadd.f32 0.0, %v855
      %857 = vmatprep.mubr.bf16.mxu0 0
      %858 = vmatmul.mubr.bf16.gmra.mrb[0].mxu0 %v480
      %v859 = vpop.f32.mrb[0].mxu0
      %v860 = vadd.f32 0.0, %v859
      %v861 = vpop.f32.mrb[0].mxu0
      %v862 = vadd.f32 0.0, %v861
      %v863 = vpop.f32.mrb[0].mxu0
      %v864 = vadd.f32 0.0, %v863
      %v865 = vpop.f32.mrb[0].mxu0
      %v866 = vadd.f32 0.0, %v865
      %867 = vmatprep.mubr.bf16.mxu0 0
      %868 = vmatmul.mubr.bf16.gmra.mrb[0].mxu0 %v481
      %v869 = vpop.f32.mrb[0].mxu0
      %v870 = vadd.f32 0.0, %v869
      %v871 = vpop.f32.mrb[0].mxu0
      %v872 = vadd.f32 0.0, %v871
      %v873 = vpop.f32.mrb[0].mxu0
      %v874 = vadd.f32 0.0, %v873
      %v875 = vpop.f32.mrb[0].mxu0
      %v876 = vadd.f32 0.0, %v875
      %877 = vmatprep.mubr.bf16.mxu0 0
      %878 = vmatmul.mubr.bf16.gmra.mrb[0].mxu0 %v482
      %v879 = vpop.f32.mrb[0].mxu0
      %v880 = vadd.f32 0.0, %v879
      %v881 = vpop.f32.mrb[0].mxu0
      %v882 = vadd.f32 0.0, %v881
      %v883 = vpop.f32.mrb[0].mxu0
      %v884 = vadd.f32 0.0, %v883
      %v885 = vpop.f32.mrb[0].mxu0
      %v886 = vadd.f32 0.0, %v885
      %887 = vmatprep.mubr.bf16.mxu0 0
      %888 = vmatmul.mubr.bf16.gmra.mrb[0].mxu0 %v483
      %v889 = vpop.f32.mrb[0].mxu0
      %v890 = vadd.f32 0.0, %v889
      %v891 = vpop.f32.mrb[0].mxu0
      %v892 = vadd.f32 0.0, %v891
      %v893 = vpop.f32.mrb[0].mxu0
      %v894 = vadd.f32 0.0, %v893
      %v895 = vpop.f32.mrb[0].mxu0
      %v896 = vadd.f32 0.0, %v895
      %897 = vmatprep.mubr.bf16.mxu0 0
      %898 = vmatmul.mubr.bf16.gmra.mrb[0].mxu0 %v484
      %v899 = vpop.f32.mrb[0].mxu0
      %v900 = vadd.f32 0.0, %v899
      %v901 = vpop.f32.mrb[0].mxu0
      %v902 = vadd.f32 0.0, %v901
      %v903 = vpop.f32.mrb[0].mxu0
      %v904 = vadd.f32 0.0, %v903
      %v905 = vpop.f32.mrb[0].mxu0
      %v906 = vadd.f32 0.0, %v905
      %907 = vmatprep.mubr.bf16.mxu0 0
      %908 = vmatmul.mubr.bf16.gmra.mrb[0].mxu0 %v485
      %v909 = vpop.f32.mrb[0].mxu0
      %v910 = vadd.f32 0.0, %v909
      %v911 = vpop.f32.mrb[0].mxu0
      %v912 = vadd.f32 0.0, %v911
      %v913 = vpop.f32.mrb[0].mxu0
      %v914 = vadd.f32 0.0, %v913
      %v915 = vpop.f32.mrb[0].mxu0
      %v916 = vadd.f32 0.0, %v915
      %917 = vmatprep.mubr.bf16.mxu0 0
      %918 = vmatmul.mubr.bf16.gmra.mrb[0].mxu0 %v486
      %v919 = vpop.f32.mrb[0].mxu0
      %v920 = vadd.f32 0.0, %v919
      %v921 = vpop.f32.mrb[0].mxu0
      %v922 = vadd.f32 0.0, %v921
      %v923 = vpop.f32.mrb[0].mxu0
      %v924 = vadd.f32 0.0, %v923
      %v925 = vpop.f32.mrb[0].mxu0
      %v926 = vadd.f32 0.0, %v925
      %927 = vmatprep.mubr.bf16.mxu0 0
      %928 = vmatmul.mubr.bf16.gmra.mrb[0].mxu0 %v487
      %v929 = vpop.f32.mrb[0].mxu0
      %v930 = vadd.f32 0.0, %v929
      %v931 = vpop.f32.mrb[0].mxu0
      %v932 = vadd.f32 0.0, %v931
      %v933 = vpop.f32.mrb[0].mxu0
      %v934 = vadd.f32 0.0, %v933
      %v935 = vpop.f32.mrb[0].mxu0
      %v936 = vadd.f32 0.0, %v935
      %937 = vmatprep.mubr.bf16.mxu0 0
      %938 = vmatmul.mubr.bf16.gmra.mrb[0].mxu0 %v488
      %v939 = vpop.f32.mrb[0].mxu0
      %v940 = vadd.f32 0.0, %v939
      %v941 = vpop.f32.mrb[0].mxu0
      %v942 = vadd.f32 0.0, %v941
      %v943 = vpop.f32.mrb[0].mxu0
      %v944 = vadd.f32 0.0, %v943
      %v945 = vpop.f32.mrb[0].mxu0
      %v946 = vadd.f32 0.0, %v945
      %947 = vmatprep.mubr.bf16.mxu0 0
      %948 = vmatmul.mubr.bf16.gmra.mrb[0].mxu0 %v489
      %v949 = vpop.f32.mrb[0].mxu0
      %v950 = vadd.f32 0.0, %v949
      %v951 = vpop.f32.mrb[0].mxu0
      %v952 = vadd.f32 0.0, %v951
      %v953 = vpop.f32.mrb[0].mxu0
      %v954 = vadd.f32 0.0, %v953
      %v955 = vpop.f32.mrb[0].mxu0
      %v956 = vadd.f32 0.0, %v955
      %957 = vdwg.mxu0
      %958 = vmatprep.subr.bf16.mxu0 %v614
      %959 = vmatpush1.bf16.msra.mxu0 %v613
      %960 = vmatprep.subr.bf16.mxu0 %v618
      %961 = vmatpush1.bf16.msra.mxu0 %v617
      %962 = vmatprep.subr.bf16.mxu0 %v622
      %963 = vmatpush1.bf16.msra.mxu0 %v621
      %964 = vmatprep.subr.bf16.mxu0 %v626
      %965 = vmatpush1.bf16.msra.mxu0 %v625
      %966 = vmatprep.subr.bf16.mxu0 %v630
      %967 = vmatpush1.bf16.msra.mxu0 %v629
      %968 = vmatprep.subr.bf16.mxu0 %v634
      %969 = vmatpush1.bf16.msra.mxu0 %v633
      %970 = vmatprep.subr.bf16.mxu0 %v638
      %971 = vmatpush1.bf16.msra.mxu0 %v637
      %972 = vmatprep.subr.bf16.mxu0 %v642
      %973 = vmatpush1.bf16.msra.mxu0 %v641
      %974 = vmatprep.subr.bf16.mxu0 0
      %975 = vmatpush1.bf16.msra.mxu0 0
      %976 = vmatprep.subr.bf16.mxu0 0
      %977 = vmatpush1.bf16.msra.mxu0 0
      %978 = vmatprep.subr.bf16.mxu0 0
      %979 = vmatpush1.bf16.msra.mxu0 0
      %980 = vmatprep.subr.bf16.mxu0 0
      %981 = vmatpush1.bf16.msra.mxu0 0
      %982 = vmatprep.subr.bf16.mxu0 0
      %983 = vmatpush1.bf16.msra.mxu0 0
      %984 = vmatprep.subr.bf16.mxu0 0
      %985 = vmatpush1.bf16.msra.mxu0 0
      %986 = vmatprep.subr.bf16.mxu0 0
      %987 = vmatpush1.bf16.msra.mxu0 0
      %988 = vmatprep.subr.bf16.mxu0 0
      %989 = vmatpush1.bf16.msra.mxu0 0
      %990 = vmatprep.mubr.bf16.mxu0 0
      %991 = vmatmul.mubr.bf16.gmra.mrb[0].mxu0 %v465
      %v992 = vpop.f32.mrb[0].mxu0
      %v993 = vadd.f32 0.0, %v992
      %v994 = vpop.f32.mrb[0].mxu0
      %v995 = vadd.f32 0.0, %v994
      %v996 = vpop.f32.mrb[0].mxu0
      %v997 = vadd.f32 0.0, %v996
      %v998 = vpop.f32.mrb[0].mxu0
      %v999 = vadd.f32 0.0, %v998
      %1000 = vmatprep.mubr.bf16.mxu0 0
      %1001 = vmatmul.mubr.bf16.gmra.mrb[0].mxu0 %v466
      %v1002 = vpop.f32.mrb[0].mxu0
      %v1003 = vadd.f32 0.0, %v1002
      %v1004 = vpop.f32.mrb[0].mxu0
      %v1005 = vadd.f32 0.0, %v1004
      %v1006 = vpop.f32.mrb[0].mxu0
      %v1007 = vadd.f32 0.0, %v1006
      %v1008 = vpop.f32.mrb[0].mxu0
      %v1009 = vadd.f32 0.0, %v1008
      %1010 = vmatprep.mubr.bf16.mxu0 0
      %1011 = vmatmul.mubr.bf16.gmra.mrb[0].mxu0 %v467
      %v1012 = vpop.f32.mrb[0].mxu0
      %v1013 = vadd.f32 0.0, %v1012
      %v1014 = vpop.f32.mrb[0].mxu0
      %v1015 = vadd.f32 0.0, %v1014
      %v1016 = vpop.f32.mrb[0].mxu0
      %v1017 = vadd.f32 0.0, %v1016
      %v1018 = vpop.f32.mrb[0].mxu0
      %v1019 = vadd.f32 0.0, %v1018
      %1020 = vmatprep.mubr.bf16.mxu0 0
      %1021 = vmatmul.mubr.bf16.gmra.mrb[0].mxu0 %v468
      %v1022 = vpop.f32.mrb[0].mxu0
      %v1023 = vadd.f32 0.0, %v1022
      %v1024 = vpop.f32.mrb[0].mxu0
      %v1025 = vadd.f32 0.0, %v1024
      %v1026 = vpop.f32.mrb[0].mxu0
      %v1027 = vadd.f32 0.0, %v1026
      %v1028 = vpop.f32.mrb[0].mxu0
      %v1029 = vadd.f32 0.0, %v1028
      %1030 = vmatprep.mubr.bf16.mxu0 0
      %1031 = vmatmul.mubr.bf16.gmra.mrb[0].mxu0 %v469
      %v1032 = vpop.f32.mrb[0].mxu0
      %v1033 = vadd.f32 0.0, %v1032
      %v1034 = vpop.f32.mrb[0].mxu0
      %v1035 = vadd.f32 0.0, %v1034
      %v1036 = vpop.f32.mrb[0].mxu0
      %v1037 = vadd.f32 0.0, %v1036
      %v1038 = vpop.f32.mrb[0].mxu0
      %v1039 = vadd.f32 0.0, %v1038
      %1040 = vmatprep.mubr.bf16.mxu0 0
      %1041 = vmatmul.mubr.bf16.gmra.mrb[0].mxu0 %v470
      %v1042 = vpop.f32.mrb[0].mxu0
      %v1043 = vadd.f32 0.0, %v1042
      %v1044 = vpop.f32.mrb[0].mxu0
      %v1045 = vadd.f32 0.0, %v1044
      %v1046 = vpop.f32.mrb[0].mxu0
      %v1047 = vadd.f32 0.0, %v1046
      %v1048 = vpop.f32.mrb[0].mxu0
      %v1049 = vadd.f32 0.0, %v1048
      %1050 = vmatprep.mubr.bf16.mxu0 0
      %1051 = vmatmul.mubr.bf16.gmra.mrb[0].mxu0 %v471
      %v1052 = vpop.f32.mrb[0].mxu0
      %v1053 = vadd.f32 0.0, %v1052
      %v1054 = vpop.f32.mrb[0].mxu0
      %v1055 = vadd.f32 0.0, %v1054
      %v1056 = vpop.f32.mrb[0].mxu0
      %v1057 = vadd.f32 0.0, %v1056
      %v1058 = vpop.f32.mrb[0].mxu0
      %v1059 = vadd.f32 0.0, %v1058
      %1060 = vmatprep.mubr.bf16.mxu0 0
      %1061 = vmatmul.mubr.bf16.gmra.mrb[0].mxu0 %v472
      %v1062 = vpop.f32.mrb[0].mxu0
      %v1063 = vadd.f32 0.0, %v1062
      %v1064 = vpop.f32.mrb[0].mxu0
      %v1065 = vadd.f32 0.0, %v1064
      %v1066 = vpop.f32.mrb[0].mxu0
      %v1067 = vadd.f32 0.0, %v1066
      %v1068 = vpop.f32.mrb[0].mxu0
      %v1069 = vadd.f32 0.0, %v1068
      %1070 = vmatprep.mubr.bf16.mxu0 0
      %1071 = vmatmul.mubr.bf16.gmra.mrb[0].mxu0 %v473
      %v1072 = vpop.f32.mrb[0].mxu0
      %v1073 = vadd.f32 0.0, %v1072
      %v1074 = vpop.f32.mrb[0].mxu0
      %v1075 = vadd.f32 0.0, %v1074
      %v1076 = vpop.f32.mrb[0].mxu0
      %v1077 = vadd.f32 0.0, %v1076
      %v1078 = vpop.f32.mrb[0].mxu0
      %v1079 = vadd.f32 0.0, %v1078
      %1080 = vmatprep.mubr.bf16.mxu0 0
      %1081 = vmatmul.mubr.bf16.gmra.mrb[0].mxu0 %v474
      %v1082 = vpop.f32.mrb[0].mxu0
      %v1083 = vadd.f32 0.0, %v1082
      %v1084 = vpop.f32.mrb[0].mxu0
      %v1085 = vadd.f32 0.0, %v1084
      %v1086 = vpop.f32.mrb[0].mxu0
      %v1087 = vadd.f32 0.0, %v1086
      %v1088 = vpop.f32.mrb[0].mxu0
      %v1089 = vadd.f32 0.0, %v1088
      %1090 = vmatprep.mubr.bf16.mxu0 0
      %1091 = vmatmul.mubr.bf16.gmra.mrb[0].mxu0 %v475
      %v1092 = vpop.f32.mrb[0].mxu0
      %v1093 = vadd.f32 0.0, %v1092
      %v1094 = vpop.f32.mrb[0].mxu0
      %v1095 = vadd.f32 0.0, %v1094
      %v1096 = vpop.f32.mrb[0].mxu0
      %v1097 = vadd.f32 0.0, %v1096
      %v1098 = vpop.f32.mrb[0].mxu0
      %v1099 = vadd.f32 0.0, %v1098
      %1100 = vmatprep.mubr.bf16.mxu0 0
      %1101 = vmatmul.mubr.bf16.gmra.mrb[0].mxu0 %v476
      %v1102 = vpop.f32.mrb[0].mxu0
      %v1103 = vadd.f32 0.0, %v1102
      %v1104 = vpop.f32.mrb[0].mxu0
      %v1105 = vadd.f32 0.0, %v1104
      %v1106 = vpop.f32.mrb[0].mxu0
      %v1107 = vadd.f32 0.0, %v1106
      %v1108 = vpop.f32.mrb[0].mxu0
      %v1109 = vadd.f32 0.0, %v1108
      %1110 = vmatprep.mubr.bf16.mxu0 0
      %1111 = vmatmul.mubr.bf16.gmra.mrb[0].mxu0 %v477
      %v1112 = vpop.f32.mrb[0].mxu0
      %v1113 = vadd.f32 0.0, %v1112
      %v1114 = vpop.f32.mrb[0].mxu0
      %v1115 = vadd.f32 0.0, %v1114
      %v1116 = vpop.f32.mrb[0].mxu0
      %v1117 = vadd.f32 0.0, %v1116
      %v1118 = vpop.f32.mrb[0].mxu0
      %v1119 = vadd.f32 0.0, %v1118
      %1120 = vmatprep.mubr.bf16.mxu0 0
      %1121 = vmatmul.mubr.bf16.gmra.mrb[0].mxu0 %v478
      %v1122 = vpop.f32.mrb[0].mxu0
      %v1123 = vadd.f32 0.0, %v1122
      %v1124 = vpop.f32.mrb[0].mxu0
      %v1125 = vadd.f32 0.0, %v1124
      %v1126 = vpop.f32.mrb[0].mxu0
      %v1127 = vadd.f32 0.0, %v1126
      %v1128 = vpop.f32.mrb[0].mxu0
      %v1129 = vadd.f32 0.0, %v1128
      %1130 = vmatprep.mubr.bf16.mxu0 0
      %1131 = vmatmul.mubr.bf16.gmra.mrb[0].mxu0 %v479
      %v1132 = vpop.f32.mrb[0].mxu0
      %v1133 = vadd.f32 0.0, %v1132
      %v1134 = vpop.f32.mrb[0].mxu0
      %v1135 = vadd.f32 0.0, %v1134
      %v1136 = vpop.f32.mrb[0].mxu0
      %v1137 = vadd.f32 0.0, %v1136
      %v1138 = vpop.f32.mrb[0].mxu0
      %v1139 = vadd.f32 0.0, %v1138
      %1140 = vmatprep.mubr.bf16.mxu0 0
      %1141 = vmatmul.mubr.bf16.gmra.mrb[0].mxu0 %v480
      %v1142 = vpop.f32.mrb[0].mxu0
      %v1143 = vadd.f32 0.0, %v1142
      %v1144 = vpop.f32.mrb[0].mxu0
      %v1145 = vadd.f32 0.0, %v1144
      %v1146 = vpop.f32.mrb[0].mxu0
      %v1147 = vadd.f32 0.0, %v1146
      %v1148 = vpop.f32.mrb[0].mxu0
      %v1149 = vadd.f32 0.0, %v1148
      %1150 = vmatprep.mubr.bf16.mxu0 0
      %1151 = vmatmul.mubr.bf16.gmra.mrb[0].mxu0 %v481
      %v1152 = vpop.f32.mrb[0].mxu0
      %v1153 = vadd.f32 0.0, %v1152
      %v1154 = vpop.f32.mrb[0].mxu0
      %v1155 = vadd.f32 0.0, %v1154
      %v1156 = vpop.f32.mrb[0].mxu0
      %v1157 = vadd.f32 0.0, %v1156
      %v1158 = vpop.f32.mrb[0].mxu0
      %v1159 = vadd.f32 0.0, %v1158
      %1160 = vmatprep.mubr.bf16.mxu0 0
      %1161 = vmatmul.mubr.bf16.gmra.mrb[0].mxu0 %v482
      %v1162 = vpop.f32.mrb[0].mxu0
      %v1163 = vadd.f32 0.0, %v1162
      %v1164 = vpop.f32.mrb[0].mxu0
      %v1165 = vadd.f32 0.0, %v1164
      %v1166 = vpop.f32.mrb[0].mxu0
      %v1167 = vadd.f32 0.0, %v1166
      %v1168 = vpop.f32.mrb[0].mxu0
      %v1169 = vadd.f32 0.0, %v1168
      %1170 = vmatprep.mubr.bf16.mxu0 0
      %1171 = vmatmul.mubr.bf16.gmra.mrb[0].mxu0 %v483
      %v1172 = vpop.f32.mrb[0].mxu0
      %v1173 = vadd.f32 0.0, %v1172
      %v1174 = vpop.f32.mrb[0].mxu0
      %v1175 = vadd.f32 0.0, %v1174
      %v1176 = vpop.f32.mrb[0].mxu0
      %v1177 = vadd.f32 0.0, %v1176
      %v1178 = vpop.f32.mrb[0].mxu0
      %v1179 = vadd.f32 0.0, %v1178
      %1180 = vmatprep.mubr.bf16.mxu0 0
      %1181 = vmatmul.mubr.bf16.gmra.mrb[0].mxu0 %v484
      %v1182 = vpop.f32.mrb[0].mxu0
      %v1183 = vadd.f32 0.0, %v1182
      %v1184 = vpop.f32.mrb[0].mxu0
      %v1185 = vadd.f32 0.0, %v1184
      %v1186 = vpop.f32.mrb[0].mxu0
      %v1187 = vadd.f32 0.0, %v1186
      %v1188 = vpop.f32.mrb[0].mxu0
      %v1189 = vadd.f32 0.0, %v1188
      %1190 = vmatprep.mubr.bf16.mxu0 0
      %1191 = vmatmul.mubr.bf16.gmra.mrb[0].mxu0 %v485
      %v1192 = vpop.f32.mrb[0].mxu0
      %v1193 = vadd.f32 0.0, %v1192
      %v1194 = vpop.f32.mrb[0].mxu0
      %v1195 = vadd.f32 0.0, %v1194
      %v1196 = vpop.f32.mrb[0].mxu0
      %v1197 = vadd.f32 0.0, %v1196
      %v1198 = vpop.f32.mrb[0].mxu0
      %v1199 = vadd.f32 0.0, %v1198
      %1200 = vmatprep.mubr.bf16.mxu0 0
      %1201 = vmatmul.mubr.bf16.gmra.mrb[0].mxu0 %v486
      %v1202 = vpop.f32.mrb[0].mxu0
      %v1203 = vadd.f32 0.0, %v1202
      %v1204 = vpop.f32.mrb[0].mxu0
      %v1205 = vadd.f32 0.0, %v1204
      %v1206 = vpop.f32.mrb[0].mxu0
      %v1207 = vadd.f32 0.0, %v1206
      %v1208 = vpop.f32.mrb[0].mxu0
      %v1209 = vadd.f32 0.0, %v1208
      %1210 = vmatprep.mubr.bf16.mxu0 0
      %1211 = vmatmul.mubr.bf16.gmra.mrb[0].mxu0 %v487
      %v1212 = vpop.f32.mrb[0].mxu0
      %v1213 = vadd.f32 0.0, %v1212
      %v1214 = vpop.f32.mrb[0].mxu0
      %v1215 = vadd.f32 0.0, %v1214
      %v1216 = vpop.f32.mrb[0].mxu0
      %v1217 = vadd.f32 0.0, %v1216
      %v1218 = vpop.f32.mrb[0].mxu0
      %v1219 = vadd.f32 0.0, %v1218
      %1220 = vmatprep.mubr.bf16.mxu0 0
      %1221 = vmatmul.mubr.bf16.gmra.mrb[0].mxu0 %v488
      %v1222 = vpop.f32.mrb[0].mxu0
      %v1223 = vadd.f32 0.0, %v1222
      %v1224 = vpop.f32.mrb[0].mxu0
      %v1225 = vadd.f32 0.0, %v1224
      %v1226 = vpop.f32.mrb[0].mxu0
      %v1227 = vadd.f32 0.0, %v1226
      %v1228 = vpop.f32.mrb[0].mxu0
      %v1229 = vadd.f32 0.0, %v1228
      %1230 = vmatprep.mubr.bf16.mxu0 0
      %1231 = vmatmul.mubr.bf16.gmra.mrb[0].mxu0 %v489
      %v1232 = vpop.f32.mrb[0].mxu0
      %v1233 = vadd.f32 0.0, %v1232
      %v1234 = vpop.f32.mrb[0].mxu0
      %v1235 = vadd.f32 0.0, %v1234
      %v1236 = vpop.f32.mrb[0].mxu0
      %v1237 = vadd.f32 0.0, %v1236
      %v1238 = vpop.f32.mrb[0].mxu0
      %v1239 = vadd.f32 0.0, %v1238
      %1240 = vdwg.mxu0
      %v1241 = vpack.c.bf16 %v999, %v995
      %v1242 = vpack.c.bf16 %v1009, %v1005
      %v1243 = vpack.c.bf16 %v1019, %v1015
      %v1244 = vpack.c.bf16 %v1029, %v1025
      %v1245 = vpack.c.bf16 %v1039, %v1035
      %v1246 = vpack.c.bf16 %v1049, %v1045
      %v1247 = vpack.c.bf16 %v1059, %v1055
      %v1248 = vpack.c.bf16 %v1069, %v1065
      %v1249 = vpack.c.bf16 %v1079, %v1075
      %v1250 = vpack.c.bf16 %v1089, %v1085
      %v1251 = vpack.c.bf16 %v1099, %v1095
      %v1252 = vpack.c.bf16 %v1109, %v1105
      %v1253 = vpack.c.bf16 %v1119, %v1115
      %v1254 = vpack.c.bf16 %v1129, %v1125
      %v1255 = vpack.c.bf16 %v1139, %v1135
      %v1256 = vpack.c.bf16 %v1149, %v1145
      %v1257 = vpack.c.bf16 %v1159, %v1155
      %v1258 = vpack.c.bf16 %v1169, %v1165
      %v1259 = vpack.c.bf16 %v1179, %v1175
      %v1260 = vpack.c.bf16 %v1189, %v1185
      %v1261 = vpack.c.bf16 %v1199, %v1195
      %v1262 = vpack.c.bf16 %v1209, %v1205
      %v1263 = vpack.c.bf16 %v1219, %v1215
      %v1264 = vpack.c.bf16 %v1229, %v1225
      %v1265 = vpack.c.bf16 %v1239, %v1235
      %v1266 = vld [vmem:[%s270] sm:$0xff]
      %v1267 = vld [vmem:[%s270 + $0x8] sm:$0xf]
      %v1268 = vld [vmem:[%s270 + $0xc] sm:$0xff]
      %v1269 = vld [vmem:[%s270 + $0x14] sm:$0xf]
      %v1270 = vld [vmem:[%s270 + $0x18] sm:$0xff]
      %v1271 = vld [vmem:[%s270 + $0x20] sm:$0xf]
      %v1272 = vld [vmem:[%s270 + $0x24] sm:$0xff]
      %v1273 = vld [vmem:[%s270 + $0x2c] sm:$0xf]
      %v1274 = vld [vmem:[%s270 + $0x30] sm:$0xff]
      %v1275 = vld [vmem:[%s270 + $0x38] sm:$0xf]
      %v1276 = vld [vmem:[%s270 + $0x3c] sm:$0xff]
      %v1277 = vld [vmem:[%s270 + $0x44] sm:$0xf]
      %v1278 = vld [vmem:[%s270 + $0x48] sm:$0xff]
      %v1279 = vld [vmem:[%s270 + $0x50] sm:$0xf]
      %v1280 = vld [vmem:[%s270 + $0x54] sm:$0xff]
      %v1281 = vld [vmem:[%s270 + $0x5c] sm:$0xf]
      %v1282 = vld [vmem:[%s270 + $0x60] sm:$0xff]
      %v1283 = vld [vmem:[%s270 + $0x68] sm:$0xf]
      %v1284 = vld [vmem:[%s270 + $0x6c] sm:$0xff]
      %v1285 = vld [vmem:[%s270 + $0x74] sm:$0xf]
      %v1286 = vld [vmem:[%s270 + $0x78] sm:$0xff]
      %v1287 = vld [vmem:[%s270 + $0x80] sm:$0xf]
      %v1288 = vld [vmem:[%s270 + $0x84] sm:$0xff]
      %v1289 = vld [vmem:[%s270 + $0x8c] sm:$0xf]
      %v1290 = vld [vmem:[%s270 + $0x90] sm:$0xff]
      %v1291 = vld [vmem:[%s270 + $0x98] sm:$0xf]
      %v1292 = vld [vmem:[%s270 + $0x9c] sm:$0xff]
      %v1293 = vld [vmem:[%s270 + $0xa4] sm:$0xf]
      %v1294 = vld [vmem:[%s270 + $0xa8] sm:$0xff]
      %v1295 = vld [vmem:[%s270 + $0xb0] sm:$0xf]
      %v1296 = vld [vmem:[%s270 + $0xb4] sm:$0xff]
      %v1297 = vld [vmem:[%s270 + $0xbc] sm:$0xf]
      %v1330 = vunpack.c.l.b16 %v1266
      %v1331 = vunpack.c.h.b16 %v1266
      %v1332 = vunpack.c.l.b16 %v1267
      %v1333 = vunpack.c.l.b16 %v1268
      %v1334 = vunpack.c.h.b16 %v1268
      %v1335 = vunpack.c.l.b16 %v1269
      %v1336 = vunpack.c.l.b16 %v1270
      %v1337 = vunpack.c.h.b16 %v1270
      %v1338 = vunpack.c.l.b16 %v1271
      %v1339 = vunpack.c.l.b16 %v1272
      %v1340 = vunpack.c.h.b16 %v1272
      %v1341 = vunpack.c.l.b16 %v1273
      %v1342 = vunpack.c.l.b16 %v1274
      %v1343 = vunpack.c.h.b16 %v1274
      %v1344 = vunpack.c.l.b16 %v1275
      %v1345 = vunpack.c.l.b16 %v1276
      %v1346 = vunpack.c.h.b16 %v1276
      %v1347 = vunpack.c.l.b16 %v1277
      %v1348 = vunpack.c.l.b16 %v1278
      %v1349 = vunpack.c.h.b16 %v1278
      %v1350 = vunpack.c.l.b16 %v1279
      %v1351 = vunpack.c.l.b16 %v1280
      %v1352 = vunpack.c.h.b16 %v1280
      %v1353 = vunpack.c.l.b16 %v1281
      %v1354 = vunpack.c.l.b16 %v1282
      %v1355 = vunpack.c.h.b16 %v1282
      %v1356 = vunpack.c.l.b16 %v1283
      %v1357 = vunpack.c.l.b16 %v1284
      %v1358 = vunpack.c.h.b16 %v1284
      %v1359 = vunpack.c.l.b16 %v1285
      %v1360 = vunpack.c.l.b16 %v1286
      %v1361 = vunpack.c.h.b16 %v1286
      %v1362 = vunpack.c.l.b16 %v1287
      %v1363 = vunpack.c.l.b16 %v1288
      %v1364 = vunpack.c.h.b16 %v1288
      %v1365 = vunpack.c.l.b16 %v1289
      %v1366 = vunpack.c.l.b16 %v1290
      %v1367 = vunpack.c.h.b16 %v1290
      %v1368 = vunpack.c.l.b16 %v1291
      %v1369 = vunpack.c.l.b16 %v1292
      %v1370 = vunpack.c.h.b16 %v1292
      %v1371 = vunpack.c.l.b16 %v1293
      %v1372 = vunpack.c.l.b16 %v1294
      %v1373 = vunpack.c.h.b16 %v1294
      %v1374 = vunpack.c.l.b16 %v1295
      %v1375 = vunpack.c.l.b16 %v1296
      %v1376 = vunpack.c.h.b16 %v1296
      %v1377 = vunpack.c.l.b16 %v1297
      %v1378 = vpack.c.b16 %v1333, %v1330
      %v1379 = vpack.c.b16 %v1334, %v1331
      %v1380 = vpack.c.b16 %v1335, %v1332
      %v1381 = vpack.c.b16 %v1339, %v1336
      %v1382 = vpack.c.b16 %v1340, %v1337
      %v1383 = vpack.c.b16 %v1341, %v1338
      %v1384 = vpack.c.b16 %v1345, %v1342
      %v1385 = vpack.c.b16 %v1346, %v1343
      %v1386 = vpack.c.b16 %v1347, %v1344
      %v1387 = vpack.c.b16 %v1351, %v1348
      %v1388 = vpack.c.b16 %v1352, %v1349
      %v1389 = vpack.c.b16 %v1353, %v1350
      %v1390 = vpack.c.b16 %v1357, %v1354
      %v1391 = vpack.c.b16 %v1358, %v1355
      %v1392 = vpack.c.b16 %v1359, %v1356
      %v1393 = vpack.c.b16 %v1363, %v1360
      %v1394 = vpack.c.b16 %v1364, %v1361
      %v1395 = vpack.c.b16 %v1365, %v1362
      %v1396 = vpack.c.b16 %v1369, %v1366
      %v1397 = vpack.c.b16 %v1370, %v1367
      %v1398 = vpack.c.b16 %v1371, %v1368
      %v1399 = vpack.c.b16 %v1375, %v1372
      %v1400 = vpack.c.b16 %v1376, %v1373
      %v1401 = vpack.c.b16 %v1377, %v1374
      %1426 = vmatprep.subr.bf16.mxu0 %v1379
      %1427 = vmatpush1.bf16.msra.mxu0 %v1378
      %1428 = vmatprep.subr.bf16.mxu0 %v1382
      %1429 = vmatpush1.bf16.msra.mxu0 %v1381
      %1430 = vmatprep.subr.bf16.mxu0 %v1385
      %1431 = vmatpush1.bf16.msra.mxu0 %v1384
      %1432 = vmatprep.subr.bf16.mxu0 %v1388
      %1433 = vmatpush1.bf16.msra.mxu0 %v1387
      %1434 = vmatprep.subr.bf16.mxu0 %v1391
      %1435 = vmatpush1.bf16.msra.mxu0 %v1390
      %1436 = vmatprep.subr.bf16.mxu0 %v1394
      %1437 = vmatpush1.bf16.msra.mxu0 %v1393
      %1438 = vmatprep.subr.bf16.mxu0 %v1397
      %1439 = vmatpush1.bf16.msra.mxu0 %v1396
      %1440 = vmatprep.subr.bf16.mxu0 %v1400
      %1441 = vmatpush1.bf16.msra.mxu0 %v1399
      %1442 = vmatprep.subr.bf16.mxu0 0
      %1443 = vmatpush1.bf16.msra.mxu0 0
      %1444 = vmatprep.subr.bf16.mxu0 0
      %1445 = vmatpush1.bf16.msra.mxu0 0
      %1446 = vmatprep.subr.bf16.mxu0 0
      %1447 = vmatpush1.bf16.msra.mxu0 0
      %1448 = vmatprep.subr.bf16.mxu0 0
      %1449 = vmatpush1.bf16.msra.mxu0 0
      %1450 = vmatprep.subr.bf16.mxu0 0
      %1451 = vmatpush1.bf16.msra.mxu0 0
      %1452 = vmatprep.subr.bf16.mxu0 0
      %1453 = vmatpush1.bf16.msra.mxu0 0
      %1454 = vmatprep.subr.bf16.mxu0 0
      %1455 = vmatpush1.bf16.msra.mxu0 0
      %1456 = vmatprep.subr.bf16.mxu0 0
      %1457 = vmatpush1.bf16.msra.mxu0 0
      %1458 = vmatprep.mubr.bf16.mxu0 0
      %1459 = vmatmul.mubr.bf16.gmra.mrb[0].mxu0 %v1241
      %v1460 = vpop.f32.mrb[0].mxu0
      %v1461 = vadd.f32 0.0, %v1460
      %v1462 = vpop.f32.mrb[0].mxu0
      %v1463 = vadd.f32 0.0, %v1462
      %v1464 = vpop.f32.mrb[0].mxu0
      %v1465 = vadd.f32 0.0, %v1464
      %v1466 = vpop.f32.mrb[0].mxu0
      %v1467 = vadd.f32 0.0, %v1466
      %1468 = vmatprep.mubr.bf16.mxu0 0
      %1469 = vmatmul.mubr.bf16.gmra.mrb[0].mxu0 %v1242
      %v1470 = vpop.f32.mrb[0].mxu0
      %v1471 = vadd.f32 0.0, %v1470
      %v1472 = vpop.f32.mrb[0].mxu0
      %v1473 = vadd.f32 0.0, %v1472
      %v1474 = vpop.f32.mrb[0].mxu0
      %v1475 = vadd.f32 0.0, %v1474
      %v1476 = vpop.f32.mrb[0].mxu0
      %v1477 = vadd.f32 0.0, %v1476
      %1478 = vmatprep.mubr.bf16.mxu0 0
      %1479 = vmatmul.mubr.bf16.gmra.mrb[0].mxu0 %v1243
      %v1480 = vpop.f32.mrb[0].mxu0
      %v1481 = vadd.f32 0.0, %v1480
      %v1482 = vpop.f32.mrb[0].mxu0
      %v1483 = vadd.f32 0.0, %v1482
      %v1484 = vpop.f32.mrb[0].mxu0
      %v1485 = vadd.f32 0.0, %v1484
      %v1486 = vpop.f32.mrb[0].mxu0
      %v1487 = vadd.f32 0.0, %v1486
      %1488 = vmatprep.mubr.bf16.mxu0 0
      %1489 = vmatmul.mubr.bf16.gmra.mrb[0].mxu0 %v1244
      %v1490 = vpop.f32.mrb[0].mxu0
      %v1491 = vadd.f32 0.0, %v1490
      %v1492 = vpop.f32.mrb[0].mxu0
      %v1493 = vadd.f32 0.0, %v1492
      %v1494 = vpop.f32.mrb[0].mxu0
      %v1495 = vadd.f32 0.0, %v1494
      %v1496 = vpop.f32.mrb[0].mxu0
      %v1497 = vadd.f32 0.0, %v1496
      %1498 = vmatprep.mubr.bf16.mxu0 0
      %1499 = vmatmul.mubr.bf16.gmra.mrb[0].mxu0 %v1245
      %v1500 = vpop.f32.mrb[0].mxu0
      %v1501 = vadd.f32 0.0, %v1500
      %v1502 = vpop.f32.mrb[0].mxu0
      %v1503 = vadd.f32 0.0, %v1502
      %v1504 = vpop.f32.mrb[0].mxu0
      %v1505 = vadd.f32 0.0, %v1504
      %v1506 = vpop.f32.mrb[0].mxu0
      %v1507 = vadd.f32 0.0, %v1506
      %1508 = vmatprep.mubr.bf16.mxu0 0
      %1509 = vmatmul.mubr.bf16.gmra.mrb[0].mxu0 %v1246
      %v1510 = vpop.f32.mrb[0].mxu0
      %v1511 = vadd.f32 0.0, %v1510
      %v1512 = vpop.f32.mrb[0].mxu0
      %v1513 = vadd.f32 0.0, %v1512
      %v1514 = vpop.f32.mrb[0].mxu0
      %v1515 = vadd.f32 0.0, %v1514
      %v1516 = vpop.f32.mrb[0].mxu0
      %v1517 = vadd.f32 0.0, %v1516
      %1518 = vmatprep.mubr.bf16.mxu0 0
      %1519 = vmatmul.mubr.bf16.gmra.mrb[0].mxu0 %v1247
      %v1520 = vpop.f32.mrb[0].mxu0
      %v1521 = vadd.f32 0.0, %v1520
      %v1522 = vpop.f32.mrb[0].mxu0
      %v1523 = vadd.f32 0.0, %v1522
      %v1524 = vpop.f32.mrb[0].mxu0
      %v1525 = vadd.f32 0.0, %v1524
      %v1526 = vpop.f32.mrb[0].mxu0
      %v1527 = vadd.f32 0.0, %v1526
      %1528 = vmatprep.mubr.bf16.mxu0 0
      %1529 = vmatmul.mubr.bf16.gmra.mrb[0].mxu0 %v1248
      %v1530 = vpop.f32.mrb[0].mxu0
      %v1531 = vadd.f32 0.0, %v1530
      %v1532 = vpop.f32.mrb[0].mxu0
      %v1533 = vadd.f32 0.0, %v1532
      %v1534 = vpop.f32.mrb[0].mxu0
      %v1535 = vadd.f32 0.0, %v1534
      %v1536 = vpop.f32.mrb[0].mxu0
      %v1537 = vadd.f32 0.0, %v1536
      %1538 = vmatprep.mubr.bf16.mxu0 0
      %1539 = vmatmul.mubr.bf16.gmra.mrb[0].mxu0 %v1249
      %v1540 = vpop.f32.mrb[0].mxu0
      %v1541 = vadd.f32 0.0, %v1540
      %v1542 = vpop.f32.mrb[0].mxu0
      %v1543 = vadd.f32 0.0, %v1542
      %v1544 = vpop.f32.mrb[0].mxu0
      %v1545 = vadd.f32 0.0, %v1544
      %v1546 = vpop.f32.mrb[0].mxu0
      %v1547 = vadd.f32 0.0, %v1546
      %1548 = vmatprep.mubr.bf16.mxu0 0
      %1549 = vmatmul.mubr.bf16.gmra.mrb[0].mxu0 %v1250
      %v1550 = vpop.f32.mrb[0].mxu0
      %v1551 = vadd.f32 0.0, %v1550
      %v1552 = vpop.f32.mrb[0].mxu0
      %v1553 = vadd.f32 0.0, %v1552
      %v1554 = vpop.f32.mrb[0].mxu0
      %v1555 = vadd.f32 0.0, %v1554
      %v1556 = vpop.f32.mrb[0].mxu0
      %v1557 = vadd.f32 0.0, %v1556
      %1558 = vmatprep.mubr.bf16.mxu0 0
      %1559 = vmatmul.mubr.bf16.gmra.mrb[0].mxu0 %v1251
      %v1560 = vpop.f32.mrb[0].mxu0
      %v1561 = vadd.f32 0.0, %v1560
      %v1562 = vpop.f32.mrb[0].mxu0
      %v1563 = vadd.f32 0.0, %v1562
      %v1564 = vpop.f32.mrb[0].mxu0
      %v1565 = vadd.f32 0.0, %v1564
      %v1566 = vpop.f32.mrb[0].mxu0
      %v1567 = vadd.f32 0.0, %v1566
      %1568 = vmatprep.mubr.bf16.mxu0 0
      %1569 = vmatmul.mubr.bf16.gmra.mrb[0].mxu0 %v1252
      %v1570 = vpop.f32.mrb[0].mxu0
      %v1571 = vadd.f32 0.0, %v1570
      %v1572 = vpop.f32.mrb[0].mxu0
      %v1573 = vadd.f32 0.0, %v1572
      %v1574 = vpop.f32.mrb[0].mxu0
      %v1575 = vadd.f32 0.0, %v1574
      %v1576 = vpop.f32.mrb[0].mxu0
      %v1577 = vadd.f32 0.0, %v1576
      %1578 = vmatprep.mubr.bf16.mxu0 0
      %1579 = vmatmul.mubr.bf16.gmra.mrb[0].mxu0 %v1253
      %v1580 = vpop.f32.mrb[0].mxu0
      %v1581 = vadd.f32 0.0, %v1580
      %v1582 = vpop.f32.mrb[0].mxu0
      %v1583 = vadd.f32 0.0, %v1582
      %v1584 = vpop.f32.mrb[0].mxu0
      %v1585 = vadd.f32 0.0, %v1584
      %v1586 = vpop.f32.mrb[0].mxu0
      %v1587 = vadd.f32 0.0, %v1586
      %1588 = vmatprep.mubr.bf16.mxu0 0
      %1589 = vmatmul.mubr.bf16.gmra.mrb[0].mxu0 %v1254
      %v1590 = vpop.f32.mrb[0].mxu0
      %v1591 = vadd.f32 0.0, %v1590
      %v1592 = vpop.f32.mrb[0].mxu0
      %v1593 = vadd.f32 0.0, %v1592
      %v1594 = vpop.f32.mrb[0].mxu0
      %v1595 = vadd.f32 0.0, %v1594
      %v1596 = vpop.f32.mrb[0].mxu0
      %v1597 = vadd.f32 0.0, %v1596
      %1598 = vmatprep.mubr.bf16.mxu0 0
      %1599 = vmatmul.mubr.bf16.gmra.mrb[0].mxu0 %v1255
      %v1600 = vpop.f32.mrb[0].mxu0
      %v1601 = vadd.f32 0.0, %v1600
      %v1602 = vpop.f32.mrb[0].mxu0
      %v1603 = vadd.f32 0.0, %v1602
      %v1604 = vpop.f32.mrb[0].mxu0
      %v1605 = vadd.f32 0.0, %v1604
      %v1606 = vpop.f32.mrb[0].mxu0
      %v1607 = vadd.f32 0.0, %v1606
      %1608 = vmatprep.mubr.bf16.mxu0 0
      %1609 = vmatmul.mubr.bf16.gmra.mrb[0].mxu0 %v1256
      %v1610 = vpop.f32.mrb[0].mxu0
      %v1611 = vadd.f32 0.0, %v1610
      %v1612 = vpop.f32.mrb[0].mxu0
      %v1613 = vadd.f32 0.0, %v1612
      %v1614 = vpop.f32.mrb[0].mxu0
      %v1615 = vadd.f32 0.0, %v1614
      %v1616 = vpop.f32.mrb[0].mxu0
      %v1617 = vadd.f32 0.0, %v1616
      %1618 = vmatprep.mubr.bf16.mxu0 0
      %1619 = vmatmul.mubr.bf16.gmra.mrb[0].mxu0 %v1257
      %v1620 = vpop.f32.mrb[0].mxu0
      %v1621 = vadd.f32 0.0, %v1620
      %v1622 = vpop.f32.mrb[0].mxu0
      %v1623 = vadd.f32 0.0, %v1622
      %v1624 = vpop.f32.mrb[0].mxu0
      %v1625 = vadd.f32 0.0, %v1624
      %v1626 = vpop.f32.mrb[0].mxu0
      %v1627 = vadd.f32 0.0, %v1626
      %1628 = vmatprep.mubr.bf16.mxu0 0
      %1629 = vmatmul.mubr.bf16.gmra.mrb[0].mxu0 %v1258
      %v1630 = vpop.f32.mrb[0].mxu0
      %v1631 = vadd.f32 0.0, %v1630
      %v1632 = vpop.f32.mrb[0].mxu0
      %v1633 = vadd.f32 0.0, %v1632
      %v1634 = vpop.f32.mrb[0].mxu0
      %v1635 = vadd.f32 0.0, %v1634
      %v1636 = vpop.f32.mrb[0].mxu0
      %v1637 = vadd.f32 0.0, %v1636
      %1638 = vmatprep.mubr.bf16.mxu0 0
      %1639 = vmatmul.mubr.bf16.gmra.mrb[0].mxu0 %v1259
      %v1640 = vpop.f32.mrb[0].mxu0
      %v1641 = vadd.f32 0.0, %v1640
      %v1642 = vpop.f32.mrb[0].mxu0
      %v1643 = vadd.f32 0.0, %v1642
      %v1644 = vpop.f32.mrb[0].mxu0
      %v1645 = vadd.f32 0.0, %v1644
      %v1646 = vpop.f32.mrb[0].mxu0
      %v1647 = vadd.f32 0.0, %v1646
      %1648 = vmatprep.mubr.bf16.mxu0 0
      %1649 = vmatmul.mubr.bf16.gmra.mrb[0].mxu0 %v1260
      %v1650 = vpop.f32.mrb[0].mxu0
      %v1651 = vadd.f32 0.0, %v1650
      %v1652 = vpop.f32.mrb[0].mxu0
      %v1653 = vadd.f32 0.0, %v1652
      %v1654 = vpop.f32.mrb[0].mxu0
      %v1655 = vadd.f32 0.0, %v1654
      %v1656 = vpop.f32.mrb[0].mxu0
      %v1657 = vadd.f32 0.0, %v1656
      %1658 = vmatprep.mubr.bf16.mxu0 0
      %1659 = vmatmul.mubr.bf16.gmra.mrb[0].mxu0 %v1261
      %v1660 = vpop.f32.mrb[0].mxu0
      %v1661 = vadd.f32 0.0, %v1660
      %v1662 = vpop.f32.mrb[0].mxu0
      %v1663 = vadd.f32 0.0, %v1662
      %v1664 = vpop.f32.mrb[0].mxu0
      %v1665 = vadd.f32 0.0, %v1664
      %v1666 = vpop.f32.mrb[0].mxu0
      %v1667 = vadd.f32 0.0, %v1666
      %1668 = vmatprep.mubr.bf16.mxu0 0
      %1669 = vmatmul.mubr.bf16.gmra.mrb[0].mxu0 %v1262
      %v1670 = vpop.f32.mrb[0].mxu0
      %v1671 = vadd.f32 0.0, %v1670
      %v1672 = vpop.f32.mrb[0].mxu0
      %v1673 = vadd.f32 0.0, %v1672
      %v1674 = vpop.f32.mrb[0].mxu0
      %v1675 = vadd.f32 0.0, %v1674
      %v1676 = vpop.f32.mrb[0].mxu0
      %v1677 = vadd.f32 0.0, %v1676
      %1678 = vmatprep.mubr.bf16.mxu0 0
      %1679 = vmatmul.mubr.bf16.gmra.mrb[0].mxu0 %v1263
      %v1680 = vpop.f32.mrb[0].mxu0
      %v1681 = vadd.f32 0.0, %v1680
      %v1682 = vpop.f32.mrb[0].mxu0
      %v1683 = vadd.f32 0.0, %v1682
      %v1684 = vpop.f32.mrb[0].mxu0
      %v1685 = vadd.f32 0.0, %v1684
      %v1686 = vpop.f32.mrb[0].mxu0
      %v1687 = vadd.f32 0.0, %v1686
      %1688 = vmatprep.mubr.bf16.mxu0 0
      %1689 = vmatmul.mubr.bf16.gmra.mrb[0].mxu0 %v1264
      %v1690 = vpop.f32.mrb[0].mxu0
      %v1691 = vadd.f32 0.0, %v1690
      %v1692 = vpop.f32.mrb[0].mxu0
      %v1693 = vadd.f32 0.0, %v1692
      %v1694 = vpop.f32.mrb[0].mxu0
      %v1695 = vadd.f32 0.0, %v1694
      %v1696 = vpop.f32.mrb[0].mxu0
      %v1697 = vadd.f32 0.0, %v1696
      %1698 = vmatprep.mubr.bf16.mxu0 0
      %1699 = vmatmul.mubr.bf16.gmra.mrb[0].mxu0 %v1265
      %v1700 = vpop.f32.mrb[0].mxu0
      %v1701 = vadd.f32 0.0, %v1700
      %v1702 = vpop.f32.mrb[0].mxu0
      %v1703 = vadd.f32 0.0, %v1702
      %v1704 = vpop.f32.mrb[0].mxu0
      %v1705 = vadd.f32 0.0, %v1704
      %v1706 = vpop.f32.mrb[0].mxu0
      %v1707 = vadd.f32 0.0, %v1706
      %1708 = vdwg.mxu0
      %1709 = vmatprep.subr.bf16.mxu0 0
      %1710 = vmatpush1.bf16.msra.mxu0 %v1380
      %1711 = vmatprep.subr.bf16.mxu0 0
      %1712 = vmatpush1.bf16.msra.mxu0 %v1383
      %1713 = vmatprep.subr.bf16.mxu0 0
      %1714 = vmatpush1.bf16.msra.mxu0 %v1386
      %1715 = vmatprep.subr.bf16.mxu0 0
      %1716 = vmatpush1.bf16.msra.mxu0 %v1389
      %1717 = vmatprep.subr.bf16.mxu0 0
      %1718 = vmatpush1.bf16.msra.mxu0 %v1392
      %1719 = vmatprep.subr.bf16.mxu0 0
      %1720 = vmatpush1.bf16.msra.mxu0 %v1395
      %1721 = vmatprep.subr.bf16.mxu0 0
      %1722 = vmatpush1.bf16.msra.mxu0 %v1398
      %1723 = vmatprep.subr.bf16.mxu0 0
      %1724 = vmatpush1.bf16.msra.mxu0 %v1401
      %1725 = vmatprep.subr.bf16.mxu0 0
      %1726 = vmatpush1.bf16.msra.mxu0 0
      %1727 = vmatprep.subr.bf16.mxu0 0
      %1728 = vmatpush1.bf16.msra.mxu0 0
      %1729 = vmatprep.subr.bf16.mxu0 0
      %1730 = vmatpush1.bf16.msra.mxu0 0
      %1731 = vmatprep.subr.bf16.mxu0 0
      %1732 = vmatpush1.bf16.msra.mxu0 0
      %1733 = vmatprep.subr.bf16.mxu0 0
      %1734 = vmatpush1.bf16.msra.mxu0 0
      %1735 = vmatprep.subr.bf16.mxu0 0
      %1736 = vmatpush1.bf16.msra.mxu0 0
      %1737 = vmatprep.subr.bf16.mxu0 0
      %1738 = vmatpush1.bf16.msra.mxu0 0
      %1739 = vmatprep.subr.bf16.mxu0 0
      %1740 = vmatpush1.bf16.msra.mxu0 0
      %1741 = vmatprep.mubr.bf16.mxu0 0
      %1742 = vmatmul.mubr.bf16.gmra.mrb[0].mxu0 %v1241
      %v1743 = vpop.f32.mrb[0].mxu0
      %v1744 = vadd.f32 0.0, %v1743
      %v1745 = vpop.f32.mrb[0].mxu0
      %v1746 = vpop.f32.mrb[0].mxu0
      %v1747 = vadd.f32 0.0, %v1746
      %v1748 = vpop.f32.mrb[0].mxu0
      %1749 = vmatprep.mubr.bf16.mxu0 0
      %1750 = vmatmul.mubr.bf16.gmra.mrb[0].mxu0 %v1242
      %v1751 = vpop.f32.mrb[0].mxu0
      %v1752 = vadd.f32 0.0, %v1751
      %v1753 = vpop.f32.mrb[0].mxu0
      %v1754 = vpop.f32.mrb[0].mxu0
      %v1755 = vadd.f32 0.0, %v1754
      %v1756 = vpop.f32.mrb[0].mxu0
      %1757 = vmatprep.mubr.bf16.mxu0 0
      %1758 = vmatmul.mubr.bf16.gmra.mrb[0].mxu0 %v1243
      %v1759 = vpop.f32.mrb[0].mxu0
      %v1760 = vadd.f32 0.0, %v1759
      %v1761 = vpop.f32.mrb[0].mxu0
      %v1762 = vpop.f32.mrb[0].mxu0
      %v1763 = vadd.f32 0.0, %v1762
      %v1764 = vpop.f32.mrb[0].mxu0
      %1765 = vmatprep.mubr.bf16.mxu0 0
      %1766 = vmatmul.mubr.bf16.gmra.mrb[0].mxu0 %v1244
      %v1767 = vpop.f32.mrb[0].mxu0
      %v1768 = vadd.f32 0.0, %v1767
      %v1769 = vpop.f32.mrb[0].mxu0
      %v1770 = vpop.f32.mrb[0].mxu0
      %v1771 = vadd.f32 0.0, %v1770
      %v1772 = vpop.f32.mrb[0].mxu0
      %1773 = vmatprep.mubr.bf16.mxu0 0
      %1774 = vmatmul.mubr.bf16.gmra.mrb[0].mxu0 %v1245
      %v1775 = vpop.f32.mrb[0].mxu0
      %v1776 = vadd.f32 0.0, %v1775
      %v1777 = vpop.f32.mrb[0].mxu0
      %v1778 = vpop.f32.mrb[0].mxu0
      %v1779 = vadd.f32 0.0, %v1778
      %v1780 = vpop.f32.mrb[0].mxu0
      %1781 = vmatprep.mubr.bf16.mxu0 0
      %1782 = vmatmul.mubr.bf16.gmra.mrb[0].mxu0 %v1246
      %v1783 = vpop.f32.mrb[0].mxu0
      %v1784 = vadd.f32 0.0, %v1783
      %v1785 = vpop.f32.mrb[0].mxu0
      %v1786 = vpop.f32.mrb[0].mxu0
      %v1787 = vadd.f32 0.0, %v1786
      %v1788 = vpop.f32.mrb[0].mxu0
      %1789 = vmatprep.mubr.bf16.mxu0 0
      %1790 = vmatmul.mubr.bf16.gmra.mrb[0].mxu0 %v1247
      %v1791 = vpop.f32.mrb[0].mxu0
      %v1792 = vadd.f32 0.0, %v1791
      %v1793 = vpop.f32.mrb[0].mxu0
      %v1794 = vpop.f32.mrb[0].mxu0
      %v1795 = vadd.f32 0.0, %v1794
      %v1796 = vpop.f32.mrb[0].mxu0
      %1797 = vmatprep.mubr.bf16.mxu0 0
      %1798 = vmatmul.mubr.bf16.gmra.mrb[0].mxu0 %v1248
      %v1799 = vpop.f32.mrb[0].mxu0
      %v1800 = vadd.f32 0.0, %v1799
      %v1801 = vpop.f32.mrb[0].mxu0
      %v1802 = vpop.f32.mrb[0].mxu0
      %v1803 = vadd.f32 0.0, %v1802
      %v1804 = vpop.f32.mrb[0].mxu0
      %1805 = vmatprep.mubr.bf16.mxu0 0
      %1806 = vmatmul.mubr.bf16.gmra.mrb[0].mxu0 %v1249
      %v1807 = vpop.f32.mrb[0].mxu0
      %v1808 = vadd.f32 0.0, %v1807
      %v1809 = vpop.f32.mrb[0].mxu0
      %v1810 = vpop.f32.mrb[0].mxu0
      %v1811 = vadd.f32 0.0, %v1810
      %v1812 = vpop.f32.mrb[0].mxu0
      %1813 = vmatprep.mubr.bf16.mxu0 0
      %1814 = vmatmul.mubr.bf16.gmra.mrb[0].mxu0 %v1250
      %v1815 = vpop.f32.mrb[0].mxu0
      %v1816 = vadd.f32 0.0, %v1815
      %v1817 = vpop.f32.mrb[0].mxu0
      %v1818 = vpop.f32.mrb[0].mxu0
      %v1819 = vadd.f32 0.0, %v1818
      %v1820 = vpop.f32.mrb[0].mxu0
      %1821 = vmatprep.mubr.bf16.mxu0 0
      %1822 = vmatmul.mubr.bf16.gmra.mrb[0].mxu0 %v1251
      %v1823 = vpop.f32.mrb[0].mxu0
      %v1824 = vadd.f32 0.0, %v1823
      %v1825 = vpop.f32.mrb[0].mxu0
      %v1826 = vpop.f32.mrb[0].mxu0
      %v1827 = vadd.f32 0.0, %v1826
      %v1828 = vpop.f32.mrb[0].mxu0
      %1829 = vmatprep.mubr.bf16.mxu0 0
      %1830 = vmatmul.mubr.bf16.gmra.mrb[0].mxu0 %v1252
      %v1831 = vpop.f32.mrb[0].mxu0
      %v1832 = vadd.f32 0.0, %v1831
      %v1833 = vpop.f32.mrb[0].mxu0
      %v1834 = vpop.f32.mrb[0].mxu0
      %v1835 = vadd.f32 0.0, %v1834
      %v1836 = vpop.f32.mrb[0].mxu0
      %1837 = vmatprep.mubr.bf16.mxu0 0
      %1838 = vmatmul.mubr.bf16.gmra.mrb[0].mxu0 %v1253
      %v1839 = vpop.f32.mrb[0].mxu0
      %v1840 = vadd.f32 0.0, %v1839
      %v1841 = vpop.f32.mrb[0].mxu0
      %v1842 = vpop.f32.mrb[0].mxu0
      %v1843 = vadd.f32 0.0, %v1842
      %v1844 = vpop.f32.mrb[0].mxu0
      %1845 = vmatprep.mubr.bf16.mxu0 0
      %1846 = vmatmul.mubr.bf16.gmra.mrb[0].mxu0 %v1254
      %v1847 = vpop.f32.mrb[0].mxu0
      %v1848 = vadd.f32 0.0, %v1847
      %v1849 = vpop.f32.mrb[0].mxu0
      %v1850 = vpop.f32.mrb[0].mxu0
      %v1851 = vadd.f32 0.0, %v1850
      %v1852 = vpop.f32.mrb[0].mxu0
      %1853 = vmatprep.mubr.bf16.mxu0 0
      %1854 = vmatmul.mubr.bf16.gmra.mrb[0].mxu0 %v1255
      %v1855 = vpop.f32.mrb[0].mxu0
      %v1856 = vadd.f32 0.0, %v1855
      %v1857 = vpop.f32.mrb[0].mxu0
      %v1858 = vpop.f32.mrb[0].mxu0
      %v1859 = vadd.f32 0.0, %v1858
      %v1860 = vpop.f32.mrb[0].mxu0
      %1861 = vmatprep.mubr.bf16.mxu0 0
      %1862 = vmatmul.mubr.bf16.gmra.mrb[0].mxu0 %v1256
      %v1863 = vpop.f32.mrb[0].mxu0
      %v1864 = vadd.f32 0.0, %v1863
      %v1865 = vpop.f32.mrb[0].mxu0
      %v1866 = vpop.f32.mrb[0].mxu0
      %v1867 = vadd.f32 0.0, %v1866
      %v1868 = vpop.f32.mrb[0].mxu0
      %1869 = vmatprep.mubr.bf16.mxu0 0
      %1870 = vmatmul.mubr.bf16.gmra.mrb[0].mxu0 %v1257
      %v1871 = vpop.f32.mrb[0].mxu0
      %v1872 = vadd.f32 0.0, %v1871
      %v1873 = vpop.f32.mrb[0].mxu0
      %v1874 = vpop.f32.mrb[0].mxu0
      %v1875 = vadd.f32 0.0, %v1874
      %v1876 = vpop.f32.mrb[0].mxu0
      %1877 = vmatprep.mubr.bf16.mxu0 0
      %1878 = vmatmul.mubr.bf16.gmra.mrb[0].mxu0 %v1258
      %v1879 = vpop.f32.mrb[0].mxu0
      %v1880 = vadd.f32 0.0, %v1879
      %v1881 = vpop.f32.mrb[0].mxu0
      %v1882 = vpop.f32.mrb[0].mxu0
      %v1883 = vadd.f32 0.0, %v1882
      %v1884 = vpop.f32.mrb[0].mxu0
      %1885 = vmatprep.mubr.bf16.mxu0 0
      %1886 = vmatmul.mubr.bf16.gmra.mrb[0].mxu0 %v1259
      %v1887 = vpop.f32.mrb[0].mxu0
      %v1888 = vadd.f32 0.0, %v1887
      %v1889 = vpop.f32.mrb[0].mxu0
      %v1890 = vpop.f32.mrb[0].mxu0
      %v1891 = vadd.f32 0.0, %v1890
      %v1892 = vpop.f32.mrb[0].mxu0
      %1893 = vmatprep.mubr.bf16.mxu0 0
      %1894 = vmatmul.mubr.bf16.gmra.mrb[0].mxu0 %v1260
      %v1895 = vpop.f32.mrb[0].mxu0
      %v1896 = vadd.f32 0.0, %v1895
      %v1897 = vpop.f32.mrb[0].mxu0
      %v1898 = vpop.f32.mrb[0].mxu0
      %v1899 = vadd.f32 0.0, %v1898
      %v1900 = vpop.f32.mrb[0].mxu0
      %1901 = vmatprep.mubr.bf16.mxu0 0
      %1902 = vmatmul.mubr.bf16.gmra.mrb[0].mxu0 %v1261
      %v1903 = vpop.f32.mrb[0].mxu0
      %v1904 = vadd.f32 0.0, %v1903
      %v1905 = vpop.f32.mrb[0].mxu0
      %v1906 = vpop.f32.mrb[0].mxu0
      %v1907 = vadd.f32 0.0, %v1906
      %v1908 = vpop.f32.mrb[0].mxu0
      %1909 = vmatprep.mubr.bf16.mxu0 0
      %1910 = vmatmul.mubr.bf16.gmra.mrb[0].mxu0 %v1262
      %v1911 = vpop.f32.mrb[0].mxu0
      %v1912 = vadd.f32 0.0, %v1911
      %v1913 = vpop.f32.mrb[0].mxu0
      %v1914 = vpop.f32.mrb[0].mxu0
      %v1915 = vadd.f32 0.0, %v1914
      %v1916 = vpop.f32.mrb[0].mxu0
      %1917 = vmatprep.mubr.bf16.mxu0 0
      %1918 = vmatmul.mubr.bf16.gmra.mrb[0].mxu0 %v1263
      %v1919 = vpop.f32.mrb[0].mxu0
      %v1920 = vadd.f32 0.0, %v1919
      %v1921 = vpop.f32.mrb[0].mxu0
      %v1922 = vpop.f32.mrb[0].mxu0
      %v1923 = vadd.f32 0.0, %v1922
      %v1924 = vpop.f32.mrb[0].mxu0
      %1925 = vmatprep.mubr.bf16.mxu0 0
      %1926 = vmatmul.mubr.bf16.gmra.mrb[0].mxu0 %v1264
      %v1927 = vpop.f32.mrb[0].mxu0
      %v1928 = vadd.f32 0.0, %v1927
      %v1929 = vpop.f32.mrb[0].mxu0
      %v1930 = vpop.f32.mrb[0].mxu0
      %v1931 = vadd.f32 0.0, %v1930
      %v1932 = vpop.f32.mrb[0].mxu0
      %1933 = vmatprep.mubr.bf16.mxu0 0
      %1934 = vmatmul.mubr.bf16.gmra.mrb[0].mxu0 %v1265
      %v1935 = vpop.f32.mrb[0].mxu0
      %v1936 = vadd.f32 0.0, %v1935
      %v1937 = vpop.f32.mrb[0].mxu0
      %v1938 = vpop.f32.mrb[0].mxu0
      %v1939 = vadd.f32 0.0, %v1938
      %v1940 = vpop.f32.mrb[0].mxu0
      %1941 = vdwg.mxu0
      %v1942 = vadd.f32 %v710, %v1461
      %v1943 = vadd.f32 %v712, %v1463
      %v1944 = vadd.f32 %v993, %v1744
      %v1945 = vadd.f32 %v714, %v1465
      %v1946 = vadd.f32 %v716, %v1467
      %v1947 = vadd.f32 %v997, %v1747
      %v1948 = vadd.f32 %v720, %v1471
      %v1949 = vadd.f32 %v722, %v1473
      %v1950 = vadd.f32 %v1003, %v1752
      %v1951 = vadd.f32 %v724, %v1475
      %v1952 = vadd.f32 %v726, %v1477
      %v1953 = vadd.f32 %v1007, %v1755
      %v1954 = vadd.f32 %v730, %v1481
      %v1955 = vadd.f32 %v732, %v1483
      %v1956 = vadd.f32 %v1013, %v1760
      %v1957 = vadd.f32 %v734, %v1485
      %v1958 = vadd.f32 %v736, %v1487
      %v1959 = vadd.f32 %v1017, %v1763
      %v1960 = vadd.f32 %v740, %v1491
      %v1961 = vadd.f32 %v742, %v1493
      %v1962 = vadd.f32 %v1023, %v1768
      %v1963 = vadd.f32 %v744, %v1495
      %v1964 = vadd.f32 %v746, %v1497
      %v1965 = vadd.f32 %v1027, %v1771
      %v1966 = vadd.f32 %v750, %v1501
      %v1967 = vadd.f32 %v752, %v1503
      %v1968 = vadd.f32 %v1033, %v1776
      %v1969 = vadd.f32 %v754, %v1505
      %v1970 = vadd.f32 %v756, %v1507
      %v1971 = vadd.f32 %v1037, %v1779
      %v1972 = vadd.f32 %v760, %v1511
      %v1973 = vadd.f32 %v762, %v1513
      %v1974 = vadd.f32 %v1043, %v1784
      %v1975 = vadd.f32 %v764, %v1515
      %v1976 = vadd.f32 %v766, %v1517
      %v1977 = vadd.f32 %v1047, %v1787
      %v1978 = vadd.f32 %v770, %v1521
      %v1979 = vadd.f32 %v772, %v1523
      %v1980 = vadd.f32 %v1053, %v1792
      %v1981 = vadd.f32 %v774, %v1525
      %v1982 = vadd.f32 %v776, %v1527
      %v1983 = vadd.f32 %v1057, %v1795
      %v1984 = vadd.f32 %v780, %v1531
      %v1985 = vadd.f32 %v782, %v1533
      %v1986 = vadd.f32 %v1063, %v1800
      %v1987 = vadd.f32 %v784, %v1535
      %v1988 = vadd.f32 %v786, %v1537
      %v1989 = vadd.f32 %v1067, %v1803
      %v1990 = vadd.f32 %v790, %v1541
      %v1991 = vadd.f32 %v792, %v1543
      %v1992 = vadd.f32 %v1073, %v1808
      %v1993 = vadd.f32 %v794, %v1545
      %v1994 = vadd.f32 %v796, %v1547
      %v1995 = vadd.f32 %v1077, %v1811
      %v1996 = vadd.f32 %v800, %v1551
      %v1997 = vadd.f32 %v802, %v1553
      %v1998 = vadd.f32 %v1083, %v1816
      %v1999 = vadd.f32 %v804, %v1555
      %v2000 = vadd.f32 %v806, %v1557
      %v2001 = vadd.f32 %v1087, %v1819
      %v2002 = vadd.f32 %v810, %v1561
      %v2003 = vadd.f32 %v812, %v1563
      %v2004 = vadd.f32 %v1093, %v1824
      %v2005 = vadd.f32 %v814, %v1565
      %v2006 = vadd.f32 %v816, %v1567
      %v2007 = vadd.f32 %v1097, %v1827
      %v2008 = vadd.f32 %v820, %v1571
      %v2009 = vadd.f32 %v822, %v1573
      %v2010 = vadd.f32 %v1103, %v1832
      %v2011 = vadd.f32 %v824, %v1575
      %v2012 = vadd.f32 %v826, %v1577
      %v2013 = vadd.f32 %v1107, %v1835
      %v2014 = vadd.f32 %v830, %v1581
      %v2015 = vadd.f32 %v832, %v1583
      %v2016 = vadd.f32 %v1113, %v1840
      %v2017 = vadd.f32 %v834, %v1585
      %v2018 = vadd.f32 %v836, %v1587
      %v2019 = vadd.f32 %v1117, %v1843
      %v2020 = vadd.f32 %v840, %v1591
      %v2021 = vadd.f32 %v842, %v1593
      %v2022 = vadd.f32 %v1123, %v1848
      %v2023 = vadd.f32 %v844, %v1595
      %v2024 = vadd.f32 %v846, %v1597
      %v2025 = vadd.f32 %v1127, %v1851
      %v2026 = vadd.f32 %v850, %v1601
      %v2027 = vadd.f32 %v852, %v1603
      %v2028 = vadd.f32 %v1133, %v1856
      %v2029 = vadd.f32 %v854, %v1605
      %v2030 = vadd.f32 %v856, %v1607
      %v2031 = vadd.f32 %v1137, %v1859
      %v2032 = vadd.f32 %v860, %v1611
      %v2033 = vadd.f32 %v862, %v1613
      %v2034 = vadd.f32 %v1143, %v1864
      %v2035 = vadd.f32 %v864, %v1615
      %v2036 = vadd.f32 %v866, %v1617
      %v2037 = vadd.f32 %v1147, %v1867
      %v2038 = vadd.f32 %v870, %v1621
      %v2039 = vadd.f32 %v872, %v1623
      %v2040 = vadd.f32 %v1153, %v1872
      %v2041 = vadd.f32 %v874, %v1625
      %v2042 = vadd.f32 %v876, %v1627
      %v2043 = vadd.f32 %v1157, %v1875
      %v2044 = vadd.f32 %v880, %v1631
      %v2045 = vadd.f32 %v882, %v1633
      %v2046 = vadd.f32 %v1163, %v1880
      %v2047 = vadd.f32 %v884, %v1635
      %v2048 = vadd.f32 %v886, %v1637
      %v2049 = vadd.f32 %v1167, %v1883
      %v2050 = vadd.f32 %v890, %v1641
      %v2051 = vadd.f32 %v892, %v1643
      %v2052 = vadd.f32 %v1173, %v1888
      %v2053 = vadd.f32 %v894, %v1645
      %v2054 = vadd.f32 %v896, %v1647
      %v2055 = vadd.f32 %v1177, %v1891
      %v2056 = vadd.f32 %v900, %v1651
      %v2057 = vadd.f32 %v902, %v1653
      %v2058 = vadd.f32 %v1183, %v1896
      %v2059 = vadd.f32 %v904, %v1655
      %v2060 = vadd.f32 %v906, %v1657
      %v2061 = vadd.f32 %v1187, %v1899
      %v2062 = vadd.f32 %v910, %v1661
      %v2063 = vadd.f32 %v912, %v1663
      %v2064 = vadd.f32 %v1193, %v1904
      %v2065 = vadd.f32 %v914, %v1665
      %v2066 = vadd.f32 %v916, %v1667
      %v2067 = vadd.f32 %v1197, %v1907
      %v2068 = vadd.f32 %v920, %v1671
      %v2069 = vadd.f32 %v922, %v1673
      %v2070 = vadd.f32 %v1203, %v1912
      %v2071 = vadd.f32 %v924, %v1675
      %v2072 = vadd.f32 %v926, %v1677
      %v2073 = vadd.f32 %v1207, %v1915
      %v2074 = vadd.f32 %v930, %v1681
      %v2075 = vadd.f32 %v932, %v1683
      %v2076 = vadd.f32 %v1213, %v1920
      %v2077 = vadd.f32 %v934, %v1685
      %v2078 = vadd.f32 %v936, %v1687
      %v2079 = vadd.f32 %v1217, %v1923
      %v2080 = vadd.f32 %v940, %v1691
      %v2081 = vadd.f32 %v942, %v1693
      %v2082 = vadd.f32 %v1223, %v1928
      %v2083 = vadd.f32 %v944, %v1695
      %v2084 = vadd.f32 %v946, %v1697
      %v2085 = vadd.f32 %v1227, %v1931
      %v2086 = vadd.f32 %v950, %v1701
      %v2087 = vadd.f32 %v952, %v1703
      %v2088 = vadd.f32 %v1233, %v1936
      %v2089 = vadd.f32 %v954, %v1705
      %v2090 = vadd.f32 %v956, %v1707
      %v2091 = vadd.f32 %v1237, %v1939
      %v2092 = vld [vmem:[%s265] sm:$0x7]
      %v2094 = vlaneseq
      %v2095 = vshrl.u32 %v2094, 7
      %v2096 = vsub.s32 0, %v2095
      %v2097 = vrot.slane %v2092, %v2096
      %v2098 = vlaneseq
      %v2099 = vshrl.u32 %v2098, 7
      %v2100 = vsub.s32 1, %v2099
      %v2101 = vrot.slane %v2092, %v2100
      %v2102 = vlaneseq
      %v2103 = vshrl.u32 %v2102, 7
      %v2104 = vsub.s32 2, %v2103
      %v2105 = vrot.slane %v2092, %v2104
      %v2109 = vadd.f32 %v1942, %v2097
      %v2110 = vadd.f32 %v1943, %v2101
      %v2111 = vadd.f32 %v1944, %v2105
      %v2112 = vadd.f32 %v1945, %v2097
      %v2113 = vadd.f32 %v1946, %v2101
      %v2114 = vadd.f32 %v1947, %v2105
      %v2115 = vadd.f32 %v1948, %v2097
      %v2116 = vadd.f32 %v1949, %v2101
      %v2117 = vadd.f32 %v1950, %v2105
      %v2118 = vadd.f32 %v1951, %v2097
      %v2119 = vadd.f32 %v1952, %v2101
      %v2120 = vadd.f32 %v1953, %v2105
      %v2121 = vadd.f32 %v1954, %v2097
      %v2122 = vadd.f32 %v1955, %v2101
      %v2123 = vadd.f32 %v1956, %v2105
      %v2124 = vadd.f32 %v1957, %v2097
      %v2125 = vadd.f32 %v1958, %v2101
      %v2126 = vadd.f32 %v1959, %v2105
      %v2127 = vadd.f32 %v1960, %v2097
      %v2128 = vadd.f32 %v1961, %v2101
      %v2129 = vadd.f32 %v1962, %v2105
      %v2130 = vadd.f32 %v1963, %v2097
      %v2131 = vadd.f32 %v1964, %v2101
      %v2132 = vadd.f32 %v1965, %v2105
      %v2133 = vadd.f32 %v1966, %v2097
      %v2134 = vadd.f32 %v1967, %v2101
      %v2135 = vadd.f32 %v1968, %v2105
      %v2136 = vadd.f32 %v1969, %v2097
      %v2137 = vadd.f32 %v1970, %v2101
      %v2138 = vadd.f32 %v1971, %v2105
      %v2139 = vadd.f32 %v1972, %v2097
      %v2140 = vadd.f32 %v1973, %v2101
      %v2141 = vadd.f32 %v1974, %v2105
      %v2142 = vadd.f32 %v1975, %v2097
      %v2143 = vadd.f32 %v1976, %v2101
      %v2144 = vadd.f32 %v1977, %v2105
      %v2145 = vadd.f32 %v1978, %v2097
      %v2146 = vadd.f32 %v1979, %v2101
      %v2147 = vadd.f32 %v1980, %v2105
      %v2148 = vadd.f32 %v1981, %v2097
      %v2149 = vadd.f32 %v1982, %v2101
      %v2150 = vadd.f32 %v1983, %v2105
      %v2151 = vadd.f32 %v1984, %v2097
      %v2152 = vadd.f32 %v1985, %v2101
      %v2153 = vadd.f32 %v1986, %v2105
      %v2154 = vadd.f32 %v1987, %v2097
      %v2155 = vadd.f32 %v1988, %v2101
      %v2156 = vadd.f32 %v1989, %v2105
      %v2157 = vadd.f32 %v1990, %v2097
      %v2158 = vadd.f32 %v1991, %v2101
      %v2159 = vadd.f32 %v1992, %v2105
      %v2160 = vadd.f32 %v1993, %v2097
      %v2161 = vadd.f32 %v1994, %v2101
      %v2162 = vadd.f32 %v1995, %v2105
      %v2163 = vadd.f32 %v1996, %v2097
      %v2164 = vadd.f32 %v1997, %v2101
      %v2165 = vadd.f32 %v1998, %v2105
      %v2166 = vadd.f32 %v1999, %v2097
      %v2167 = vadd.f32 %v2000, %v2101
      %v2168 = vadd.f32 %v2001, %v2105
      %v2169 = vadd.f32 %v2002, %v2097
      %v2170 = vadd.f32 %v2003, %v2101
      %v2171 = vadd.f32 %v2004, %v2105
      %v2172 = vadd.f32 %v2005, %v2097
      %v2173 = vadd.f32 %v2006, %v2101
      %v2174 = vadd.f32 %v2007, %v2105
      %v2175 = vadd.f32 %v2008, %v2097
      %v2176 = vadd.f32 %v2009, %v2101
      %v2177 = vadd.f32 %v2010, %v2105
      %v2178 = vadd.f32 %v2011, %v2097
      %v2179 = vadd.f32 %v2012, %v2101
      %v2180 = vadd.f32 %v2013, %v2105
      %v2181 = vadd.f32 %v2014, %v2097
      %v2182 = vadd.f32 %v2015, %v2101
      %v2183 = vadd.f32 %v2016, %v2105
      %v2184 = vadd.f32 %v2017, %v2097
      %v2185 = vadd.f32 %v2018, %v2101
      %v2186 = vadd.f32 %v2019, %v2105
      %v2187 = vadd.f32 %v2020, %v2097
      %v2188 = vadd.f32 %v2021, %v2101
      %v2189 = vadd.f32 %v2022, %v2105
      %v2190 = vadd.f32 %v2023, %v2097
      %v2191 = vadd.f32 %v2024, %v2101
      %v2192 = vadd.f32 %v2025, %v2105
      %v2193 = vadd.f32 %v2026, %v2097
      %v2194 = vadd.f32 %v2027, %v2101
      %v2195 = vadd.f32 %v2028, %v2105
      %v2196 = vadd.f32 %v2029, %v2097
      %v2197 = vadd.f32 %v2030, %v2101
      %v2198 = vadd.f32 %v2031, %v2105
      %v2199 = vadd.f32 %v2032, %v2097
      %v2200 = vadd.f32 %v2033, %v2101
      %v2201 = vadd.f32 %v2034, %v2105
      %v2202 = vadd.f32 %v2035, %v2097
      %v2203 = vadd.f32 %v2036, %v2101
      %v2204 = vadd.f32 %v2037, %v2105
      %v2205 = vadd.f32 %v2038, %v2097
      %v2206 = vadd.f32 %v2039, %v2101
      %v2207 = vadd.f32 %v2040, %v2105
      %v2208 = vadd.f32 %v2041, %v2097
      %v2209 = vadd.f32 %v2042, %v2101
      %v2210 = vadd.f32 %v2043, %v2105
      %v2211 = vadd.f32 %v2044, %v2097
      %v2212 = vadd.f32 %v2045, %v2101
      %v2213 = vadd.f32 %v2046, %v2105
      %v2214 = vadd.f32 %v2047, %v2097
      %v2215 = vadd.f32 %v2048, %v2101
      %v2216 = vadd.f32 %v2049, %v2105
      %v2217 = vadd.f32 %v2050, %v2097
      %v2218 = vadd.f32 %v2051, %v2101
      %v2219 = vadd.f32 %v2052, %v2105
      %v2220 = vadd.f32 %v2053, %v2097
      %v2221 = vadd.f32 %v2054, %v2101
      %v2222 = vadd.f32 %v2055, %v2105
      %v2223 = vadd.f32 %v2056, %v2097
      %v2224 = vadd.f32 %v2057, %v2101
      %v2225 = vadd.f32 %v2058, %v2105
      %v2226 = vadd.f32 %v2059, %v2097
      %v2227 = vadd.f32 %v2060, %v2101
      %v2228 = vadd.f32 %v2061, %v2105
      %v2229 = vadd.f32 %v2062, %v2097
      %v2230 = vadd.f32 %v2063, %v2101
      %v2231 = vadd.f32 %v2064, %v2105
      %v2232 = vadd.f32 %v2065, %v2097
      %v2233 = vadd.f32 %v2066, %v2101
      %v2234 = vadd.f32 %v2067, %v2105
      %v2235 = vadd.f32 %v2068, %v2097
      %v2236 = vadd.f32 %v2069, %v2101
      %v2237 = vadd.f32 %v2070, %v2105
      %v2238 = vadd.f32 %v2071, %v2097
      %v2239 = vadd.f32 %v2072, %v2101
      %v2240 = vadd.f32 %v2073, %v2105
      %v2241 = vadd.f32 %v2074, %v2097
      %v2242 = vadd.f32 %v2075, %v2101
      %v2243 = vadd.f32 %v2076, %v2105
      %v2244 = vadd.f32 %v2077, %v2097
      %v2245 = vadd.f32 %v2078, %v2101
      %v2246 = vadd.f32 %v2079, %v2105
      %v2247 = vadd.f32 %v2080, %v2097
      %v2248 = vadd.f32 %v2081, %v2101
      %v2249 = vadd.f32 %v2082, %v2105
      %v2250 = vadd.f32 %v2083, %v2097
      %v2251 = vadd.f32 %v2084, %v2101
      %v2252 = vadd.f32 %v2085, %v2105
      %v2253 = vadd.f32 %v2086, %v2097
      %v2254 = vadd.f32 %v2087, %v2101
      %v2255 = vadd.f32 %v2088, %v2105
      %v2256 = vadd.f32 %v2089, %v2097
      %v2257 = vadd.f32 %v2090, %v2101
      %v2258 = vadd.f32 %v2091, %v2105
      %v2259 = vpack.c.bf16 %v2112, %v2109
      %v2260 = vpack.c.bf16 %v2113, %v2110
      %v2261 = vpack.c.bf16 %v2114, %v2111
      %v2262 = vpack.c.bf16 %v2118, %v2115
      %v2263 = vpack.c.bf16 %v2119, %v2116
      %v2264 = vpack.c.bf16 %v2120, %v2117
      %v2265 = vpack.c.bf16 %v2124, %v2121
      %v2266 = vpack.c.bf16 %v2125, %v2122
      %v2267 = vpack.c.bf16 %v2126, %v2123
      %v2268 = vpack.c.bf16 %v2130, %v2127
      %v2269 = vpack.c.bf16 %v2131, %v2128
      %v2270 = vpack.c.bf16 %v2132, %v2129
      %v2271 = vpack.c.bf16 %v2136, %v2133
      %v2272 = vpack.c.bf16 %v2137, %v2134
      %v2273 = vpack.c.bf16 %v2138, %v2135
      %v2274 = vpack.c.bf16 %v2142, %v2139
      %v2275 = vpack.c.bf16 %v2143, %v2140
      %v2276 = vpack.c.bf16 %v2144, %v2141
      %v2277 = vpack.c.bf16 %v2148, %v2145
      %v2278 = vpack.c.bf16 %v2149, %v2146
      %v2279 = vpack.c.bf16 %v2150, %v2147
      %v2280 = vpack.c.bf16 %v2154, %v2151
      %v2281 = vpack.c.bf16 %v2155, %v2152
      %v2282 = vpack.c.bf16 %v2156, %v2153
      %v2283 = vpack.c.bf16 %v2160, %v2157
      %v2284 = vpack.c.bf16 %v2161, %v2158
      %v2285 = vpack.c.bf16 %v2162, %v2159
      %v2286 = vpack.c.bf16 %v2166, %v2163
      %v2287 = vpack.c.bf16 %v2167, %v2164
      %v2288 = vpack.c.bf16 %v2168, %v2165
      %v2289 = vpack.c.bf16 %v2172, %v2169
      %v2290 = vpack.c.bf16 %v2173, %v2170
      %v2291 = vpack.c.bf16 %v2174, %v2171
      %v2292 = vpack.c.bf16 %v2178, %v2175
      %v2293 = vpack.c.bf16 %v2179, %v2176
      %v2294 = vpack.c.bf16 %v2180, %v2177
      %v2295 = vpack.c.bf16 %v2184, %v2181
      %v2296 = vpack.c.bf16 %v2185, %v2182
      %v2297 = vpack.c.bf16 %v2186, %v2183
      %v2298 = vpack.c.bf16 %v2190, %v2187
      %v2299 = vpack.c.bf16 %v2191, %v2188
      %v2300 = vpack.c.bf16 %v2192, %v2189
      %v2301 = vpack.c.bf16 %v2196, %v2193
      %v2302 = vpack.c.bf16 %v2197, %v2194
      %v2303 = vpack.c.bf16 %v2198, %v2195
      %v2304 = vpack.c.bf16 %v2202, %v2199
      %v2305 = vpack.c.bf16 %v2203, %v2200
      %v2306 = vpack.c.bf16 %v2204, %v2201
      %v2307 = vpack.c.bf16 %v2208, %v2205
      %v2308 = vpack.c.bf16 %v2209, %v2206
      %v2309 = vpack.c.bf16 %v2210, %v2207
      %v2310 = vpack.c.bf16 %v2214, %v2211
      %v2311 = vpack.c.bf16 %v2215, %v2212
      %v2312 = vpack.c.bf16 %v2216, %v2213
      %v2313 = vpack.c.bf16 %v2220, %v2217
      %v2314 = vpack.c.bf16 %v2221, %v2218
      %v2315 = vpack.c.bf16 %v2222, %v2219
      %v2316 = vpack.c.bf16 %v2226, %v2223
      %v2317 = vpack.c.bf16 %v2227, %v2224
      %v2318 = vpack.c.bf16 %v2228, %v2225
      %v2319 = vpack.c.bf16 %v2232, %v2229
      %v2320 = vpack.c.bf16 %v2233, %v2230
      %v2321 = vpack.c.bf16 %v2234, %v2231
      %v2322 = vpack.c.bf16 %v2238, %v2235
      %v2323 = vpack.c.bf16 %v2239, %v2236
      %v2324 = vpack.c.bf16 %v2240, %v2237
      %v2325 = vpack.c.bf16 %v2244, %v2241
      %v2326 = vpack.c.bf16 %v2245, %v2242
      %v2327 = vpack.c.bf16 %v2246, %v2243
      %v2328 = vpack.c.bf16 %v2250, %v2247
      %v2329 = vpack.c.bf16 %v2251, %v2248
      %v2330 = vpack.c.bf16 %v2252, %v2249
      %v2331 = vpack.c.bf16 %v2256, %v2253
      %v2332 = vpack.c.bf16 %v2257, %v2254
      %v2333 = vpack.c.bf16 %v2258, %v2255
      %v2409 = vunpack.c.l.b16 %v2259
      %v2410 = vunpack.c.l.b16 %v2260
      %v2411 = vunpack.c.l.b16 %v2261
      %v2412 = vunpack.c.h.b16 %v2259
      %v2413 = vunpack.c.h.b16 %v2260
      %v2414 = vunpack.c.h.b16 %v2261
      %v2415 = vunpack.c.l.b16 %v2262
      %v2416 = vunpack.c.l.b16 %v2263
      %v2417 = vunpack.c.l.b16 %v2264
      %v2418 = vunpack.c.h.b16 %v2262
      %v2419 = vunpack.c.h.b16 %v2263
      %v2420 = vunpack.c.h.b16 %v2264
      %v2421 = vunpack.c.l.b16 %v2265
      %v2422 = vunpack.c.l.b16 %v2266
      %v2423 = vunpack.c.l.b16 %v2267
      %v2424 = vunpack.c.h.b16 %v2265
      %v2425 = vunpack.c.h.b16 %v2266
      %v2426 = vunpack.c.h.b16 %v2267
      %v2427 = vunpack.c.l.b16 %v2268
      %v2428 = vunpack.c.l.b16 %v2269
      %v2429 = vunpack.c.l.b16 %v2270
      %v2430 = vunpack.c.h.b16 %v2268
      %v2431 = vunpack.c.h.b16 %v2269
      %v2432 = vunpack.c.h.b16 %v2270
      %v2433 = vunpack.c.l.b16 %v2271
      %v2434 = vunpack.c.l.b16 %v2272
      %v2435 = vunpack.c.l.b16 %v2273
      %v2436 = vunpack.c.h.b16 %v2271
      %v2437 = vunpack.c.h.b16 %v2272
      %v2438 = vunpack.c.h.b16 %v2273
      %v2439 = vunpack.c.l.b16 %v2274
      %v2440 = vunpack.c.l.b16 %v2275
      %v2441 = vunpack.c.l.b16 %v2276
      %v2442 = vunpack.c.h.b16 %v2274
      %v2443 = vunpack.c.h.b16 %v2275
      %v2444 = vunpack.c.h.b16 %v2276
      %v2445 = vunpack.c.l.b16 %v2277
      %v2446 = vunpack.c.l.b16 %v2278
      %v2447 = vunpack.c.l.b16 %v2279
      %v2448 = vunpack.c.h.b16 %v2277
      %v2449 = vunpack.c.h.b16 %v2278
      %v2450 = vunpack.c.h.b16 %v2279
      %v2451 = vunpack.c.l.b16 %v2280
      %v2452 = vunpack.c.l.b16 %v2281
      %v2453 = vunpack.c.l.b16 %v2282
      %v2454 = vunpack.c.h.b16 %v2280
      %v2455 = vunpack.c.h.b16 %v2281
      %v2456 = vunpack.c.h.b16 %v2282
      %v2457 = vunpack.c.l.b16 %v2283
      %v2458 = vunpack.c.l.b16 %v2284
      %v2459 = vunpack.c.l.b16 %v2285
      %v2460 = vunpack.c.h.b16 %v2283
      %v2461 = vunpack.c.h.b16 %v2284
      %v2462 = vunpack.c.h.b16 %v2285
      %v2463 = vunpack.c.l.b16 %v2286
      %v2464 = vunpack.c.l.b16 %v2287
      %v2465 = vunpack.c.l.b16 %v2288
      %v2466 = vunpack.c.h.b16 %v2286
      %v2467 = vunpack.c.h.b16 %v2287
      %v2468 = vunpack.c.h.b16 %v2288
      %v2469 = vunpack.c.l.b16 %v2289
      %v2470 = vunpack.c.l.b16 %v2290
      %v2471 = vunpack.c.l.b16 %v2291
      %v2472 = vunpack.c.h.b16 %v2289
      %v2473 = vunpack.c.h.b16 %v2290
      %v2474 = vunpack.c.h.b16 %v2291
      %v2475 = vunpack.c.l.b16 %v2292
      %v2476 = vunpack.c.l.b16 %v2293
      %v2477 = vunpack.c.l.b16 %v2294
      %v2478 = vunpack.c.h.b16 %v2292
      %v2479 = vunpack.c.h.b16 %v2293
      %v2480 = vunpack.c.h.b16 %v2294
      %v2481 = vunpack.c.l.b16 %v2295
      %v2482 = vunpack.c.l.b16 %v2296
      %v2483 = vunpack.c.l.b16 %v2297
      %v2484 = vunpack.c.h.b16 %v2295
      %v2485 = vunpack.c.h.b16 %v2296
      %v2486 = vunpack.c.h.b16 %v2297
      %v2487 = vunpack.c.l.b16 %v2298
      %v2488 = vunpack.c.l.b16 %v2299
      %v2489 = vunpack.c.l.b16 %v2300
      %v2490 = vunpack.c.h.b16 %v2298
      %v2491 = vunpack.c.h.b16 %v2299
      %v2492 = vunpack.c.h.b16 %v2300
      %v2493 = vunpack.c.l.b16 %v2301
      %v2494 = vunpack.c.l.b16 %v2302
      %v2495 = vunpack.c.l.b16 %v2303
      %v2496 = vunpack.c.h.b16 %v2301
      %v2497 = vunpack.c.h.b16 %v2302
      %v2498 = vunpack.c.h.b16 %v2303
      %v2499 = vunpack.c.l.b16 %v2304
      %v2500 = vunpack.c.l.b16 %v2305
      %v2501 = vunpack.c.l.b16 %v2306
      %v2502 = vunpack.c.h.b16 %v2304
      %v2503 = vunpack.c.h.b16 %v2305
      %v2504 = vunpack.c.h.b16 %v2306
      %v2505 = vunpack.c.l.b16 %v2307
      %v2506 = vunpack.c.l.b16 %v2308
      %v2507 = vunpack.c.l.b16 %v2309
      %v2508 = vunpack.c.h.b16 %v2307
      %v2509 = vunpack.c.h.b16 %v2308
      %v2510 = vunpack.c.h.b16 %v2309
      %v2511 = vunpack.c.l.b16 %v2310
      %v2512 = vunpack.c.l.b16 %v2311
      %v2513 = vunpack.c.l.b16 %v2312
      %v2514 = vunpack.c.h.b16 %v2310
      %v2515 = vunpack.c.h.b16 %v2311
      %v2516 = vunpack.c.h.b16 %v2312
      %v2517 = vunpack.c.l.b16 %v2313
      %v2518 = vunpack.c.l.b16 %v2314
      %v2519 = vunpack.c.l.b16 %v2315
      %v2520 = vunpack.c.h.b16 %v2313
      %v2521 = vunpack.c.h.b16 %v2314
      %v2522 = vunpack.c.h.b16 %v2315
      %v2523 = vunpack.c.l.b16 %v2316
      %v2524 = vunpack.c.l.b16 %v2317
      %v2525 = vunpack.c.l.b16 %v2318
      %v2526 = vunpack.c.h.b16 %v2316
      %v2527 = vunpack.c.h.b16 %v2317
      %v2528 = vunpack.c.h.b16 %v2318
      %v2529 = vunpack.c.l.b16 %v2319
      %v2530 = vunpack.c.l.b16 %v2320
      %v2531 = vunpack.c.l.b16 %v2321
      %v2532 = vunpack.c.h.b16 %v2319
      %v2533 = vunpack.c.h.b16 %v2320
      %v2534 = vunpack.c.h.b16 %v2321
      %v2535 = vunpack.c.l.b16 %v2322
      %v2536 = vunpack.c.l.b16 %v2323
      %v2537 = vunpack.c.l.b16 %v2324
      %v2538 = vunpack.c.h.b16 %v2322
      %v2539 = vunpack.c.h.b16 %v2323
      %v2540 = vunpack.c.h.b16 %v2324
      %v2541 = vunpack.c.l.b16 %v2325
      %v2542 = vunpack.c.l.b16 %v2326
      %v2543 = vunpack.c.l.b16 %v2327
      %v2544 = vunpack.c.h.b16 %v2325
      %v2545 = vunpack.c.h.b16 %v2326
      %v2546 = vunpack.c.h.b16 %v2327
      %v2547 = vunpack.c.l.b16 %v2328
      %v2548 = vunpack.c.l.b16 %v2329
      %v2549 = vunpack.c.l.b16 %v2330
      %v2550 = vunpack.c.h.b16 %v2328
      %v2551 = vunpack.c.h.b16 %v2329
      %v2552 = vunpack.c.h.b16 %v2330
      %v2553 = vunpack.c.l.b16 %v2331
      %v2554 = vunpack.c.l.b16 %v2332
      %v2555 = vunpack.c.l.b16 %v2333
      %v2556 = vunpack.c.h.b16 %v2331
      %v2557 = vunpack.c.h.b16 %v2332
      %v2558 = vunpack.c.h.b16 %v2333
      %v2559 = vpack.c.b16 %v2410, %v2409
      %v2560 = vpack.c.b16 %v2411, %v2411
      %v2561 = vpack.c.b16 %v2413, %v2412
      %v2562 = vpack.c.b16 %v2414, %v2414
      %v2563 = vpack.c.b16 %v2416, %v2415
      %v2564 = vpack.c.b16 %v2417, %v2417
      %v2565 = vpack.c.b16 %v2419, %v2418
      %v2566 = vpack.c.b16 %v2420, %v2420
      %v2567 = vpack.c.b16 %v2422, %v2421
      %v2568 = vpack.c.b16 %v2423, %v2423
      %v2569 = vpack.c.b16 %v2425, %v2424
      %v2570 = vpack.c.b16 %v2426, %v2426
      %v2571 = vpack.c.b16 %v2428, %v2427
      %v2572 = vpack.c.b16 %v2429, %v2429
      %v2573 = vpack.c.b16 %v2431, %v2430
      %v2574 = vpack.c.b16 %v2432, %v2432
      %v2575 = vpack.c.b16 %v2434, %v2433
      %v2576 = vpack.c.b16 %v2435, %v2435
      %v2577 = vpack.c.b16 %v2437, %v2436
      %v2578 = vpack.c.b16 %v2438, %v2438
      %v2579 = vpack.c.b16 %v2440, %v2439
      %v2580 = vpack.c.b16 %v2441, %v2441
      %v2581 = vpack.c.b16 %v2443, %v2442
      %v2582 = vpack.c.b16 %v2444, %v2444
      %v2583 = vpack.c.b16 %v2446, %v2445
      %v2584 = vpack.c.b16 %v2447, %v2447
      %v2585 = vpack.c.b16 %v2449, %v2448
      %v2586 = vpack.c.b16 %v2450, %v2450
      %v2587 = vpack.c.b16 %v2452, %v2451
      %v2588 = vpack.c.b16 %v2453, %v2453
      %v2589 = vpack.c.b16 %v2455, %v2454
      %v2590 = vpack.c.b16 %v2456, %v2456
      %v2591 = vpack.c.b16 %v2458, %v2457
      %v2592 = vpack.c.b16 %v2459, %v2459
      %v2593 = vpack.c.b16 %v2461, %v2460
      %v2594 = vpack.c.b16 %v2462, %v2462
      %v2595 = vpack.c.b16 %v2464, %v2463
      %v2596 = vpack.c.b16 %v2465, %v2465
      %v2597 = vpack.c.b16 %v2467, %v2466
      %v2598 = vpack.c.b16 %v2468, %v2468
      %v2599 = vpack.c.b16 %v2470, %v2469
      %v2600 = vpack.c.b16 %v2471, %v2471
      %v2601 = vpack.c.b16 %v2473, %v2472
      %v2602 = vpack.c.b16 %v2474, %v2474
      %v2603 = vpack.c.b16 %v2476, %v2475
      %v2604 = vpack.c.b16 %v2477, %v2477
      %v2605 = vpack.c.b16 %v2479, %v2478
      %v2606 = vpack.c.b16 %v2480, %v2480
      %v2607 = vpack.c.b16 %v2482, %v2481
      %v2608 = vpack.c.b16 %v2483, %v2483
      %v2609 = vpack.c.b16 %v2485, %v2484
      %v2610 = vpack.c.b16 %v2486, %v2486
      %v2611 = vpack.c.b16 %v2488, %v2487
      %v2612 = vpack.c.b16 %v2489, %v2489
      %v2613 = vpack.c.b16 %v2491, %v2490
      %v2614 = vpack.c.b16 %v2492, %v2492
      %v2615 = vpack.c.b16 %v2494, %v2493
      %v2616 = vpack.c.b16 %v2495, %v2495
      %v2617 = vpack.c.b16 %v2497, %v2496
      %v2618 = vpack.c.b16 %v2498, %v2498
      %v2619 = vpack.c.b16 %v2500, %v2499
      %v2620 = vpack.c.b16 %v2501, %v2501
      %v2621 = vpack.c.b16 %v2503, %v2502
      %v2622 = vpack.c.b16 %v2504, %v2504
      %v2623 = vpack.c.b16 %v2506, %v2505
      %v2624 = vpack.c.b16 %v2507, %v2507
      %v2625 = vpack.c.b16 %v2509, %v2508
      %v2626 = vpack.c.b16 %v2510, %v2510
      %v2627 = vpack.c.b16 %v2512, %v2511
      %v2628 = vpack.c.b16 %v2513, %v2513
      %v2629 = vpack.c.b16 %v2515, %v2514
      %v2630 = vpack.c.b16 %v2516, %v2516
      %v2631 = vpack.c.b16 %v2518, %v2517
      %v2632 = vpack.c.b16 %v2519, %v2519
      %v2633 = vpack.c.b16 %v2521, %v2520
      %v2634 = vpack.c.b16 %v2522, %v2522
      %v2635 = vpack.c.b16 %v2524, %v2523
      %v2636 = vpack.c.b16 %v2525, %v2525
      %v2637 = vpack.c.b16 %v2527, %v2526
      %v2638 = vpack.c.b16 %v2528, %v2528
      %v2639 = vpack.c.b16 %v2530, %v2529
      %v2640 = vpack.c.b16 %v2531, %v2531
      %v2641 = vpack.c.b16 %v2533, %v2532
      %v2642 = vpack.c.b16 %v2534, %v2534
      %v2643 = vpack.c.b16 %v2536, %v2535
      %v2644 = vpack.c.b16 %v2537, %v2537
      %v2645 = vpack.c.b16 %v2539, %v2538
      %v2646 = vpack.c.b16 %v2540, %v2540
      %v2647 = vpack.c.b16 %v2542, %v2541
      %v2648 = vpack.c.b16 %v2543, %v2543
      %v2649 = vpack.c.b16 %v2545, %v2544
      %v2650 = vpack.c.b16 %v2546, %v2546
      %v2651 = vpack.c.b16 %v2548, %v2547
      %v2652 = vpack.c.b16 %v2549, %v2549
      %v2653 = vpack.c.b16 %v2551, %v2550
      %v2654 = vpack.c.b16 %v2552, %v2552
      %v2655 = vpack.c.b16 %v2554, %v2553
      %v2656 = vpack.c.b16 %v2555, %v2555
      %v2657 = vpack.c.b16 %v2557, %v2556
      %v2658 = vpack.c.b16 %v2558, %v2558
      %2759 = vst [vmem:[%s280] sm:$0xff] %v2559
      %vm2760 = vcmask 257024
      %2761 = vst.msk [vmem:[%s280 + $0x8] sm:$0xf] %vm2760, %v2560
      %2762 = vst [vmem:[%s280 + $0xc] sm:$0xff] %v2561
      %2763 = vst.msk [vmem:[%s280 + $0x14] sm:$0xf] %vm2760, %v2562
      %2764 = vst [vmem:[%s280 + $0x18] sm:$0xff] %v2563
      %2765 = vst.msk [vmem:[%s280 + $0x20] sm:$0xf] %vm2760, %v2564
      %2766 = vst [vmem:[%s280 + $0x24] sm:$0xff] %v2565
      %2767 = vst.msk [vmem:[%s280 + $0x2c] sm:$0xf] %vm2760, %v2566
      %2768 = vst [vmem:[%s280 + $0x30] sm:$0xff] %v2567
      %2769 = vst.msk [vmem:[%s280 + $0x38] sm:$0xf] %vm2760, %v2568
      %2770 = vst [vmem:[%s280 + $0x3c] sm:$0xff] %v2569
      %2771 = vst.msk [vmem:[%s280 + $0x44] sm:$0xf] %vm2760, %v2570
      %2772 = vst [vmem:[%s280 + $0x48] sm:$0xff] %v2571
      %2773 = vst.msk [vmem:[%s280 + $0x50] sm:$0xf] %vm2760, %v2572
      %2774 = vst [vmem:[%s280 + $0x54] sm:$0xff] %v2573
      %2775 = vst.msk [vmem:[%s280 + $0x5c] sm:$0xf] %vm2760, %v2574
      %2776 = vst [vmem:[%s280 + $0x60] sm:$0xff] %v2575
      %2777 = vst.msk [vmem:[%s280 + $0x68] sm:$0xf] %vm2760, %v2576
      %2778 = vst [vmem:[%s280 + $0x6c] sm:$0xff] %v2577
      %2779 = vst.msk [vmem:[%s280 + $0x74] sm:$0xf] %vm2760, %v2578
      %2780 = vst [vmem:[%s280 + $0x78] sm:$0xff] %v2579
      %2781 = vst.msk [vmem:[%s280 + $0x80] sm:$0xf] %vm2760, %v2580
      %2782 = vst [vmem:[%s280 + $0x84] sm:$0xff] %v2581
      %2783 = vst.msk [vmem:[%s280 + $0x8c] sm:$0xf] %vm2760, %v2582
      %2784 = vst [vmem:[%s280 + $0x90] sm:$0xff] %v2583
      %2785 = vst.msk [vmem:[%s280 + $0x98] sm:$0xf] %vm2760, %v2584
      %2786 = vst [vmem:[%s280 + $0x9c] sm:$0xff] %v2585
      %2787 = vst.msk [vmem:[%s280 + $0xa4] sm:$0xf] %vm2760, %v2586
      %2788 = vst [vmem:[%s280 + $0xa8] sm:$0xff] %v2587
      %2789 = vst.msk [vmem:[%s280 + $0xb0] sm:$0xf] %vm2760, %v2588
      %2790 = vst [vmem:[%s280 + $0xb4] sm:$0xff] %v2589
      %2791 = vst.msk [vmem:[%s280 + $0xbc] sm:$0xf] %vm2760, %v2590
      %2792 = vst [vmem:[%s280 + $0xc0] sm:$0xff] %v2591
      %2793 = vst.msk [vmem:[%s280 + $0xc8] sm:$0xf] %vm2760, %v2592
      %2794 = vst [vmem:[%s280 + $0xcc] sm:$0xff] %v2593
      %2795 = vst.msk [vmem:[%s280 + $0xd4] sm:$0xf] %vm2760, %v2594
      %2796 = vst [vmem:[%s280 + $0xd8] sm:$0xff] %v2595
      %2797 = vst.msk [vmem:[%s280 + $0xe0] sm:$0xf] %vm2760, %v2596
      %2798 = vst [vmem:[%s280 + $0xe4] sm:$0xff] %v2597
      %2799 = vst.msk [vmem:[%s280 + $0xec] sm:$0xf] %vm2760, %v2598
      %2800 = vst [vmem:[%s280 + $0xf0] sm:$0xff] %v2599
      %2801 = vst.msk [vmem:[%s280 + $0xf8] sm:$0xf] %vm2760, %v2600
      %2802 = vst [vmem:[%s280 + $0xfc] sm:$0xff] %v2601
      %2803 = vst.msk [vmem:[%s280 + $0x104] sm:$0xf] %vm2760, %v2602
      %2804 = vst [vmem:[%s280 + $0x108] sm:$0xff] %v2603
      %2805 = vst.msk [vmem:[%s280 + $0x110] sm:$0xf] %vm2760, %v2604
      %2806 = vst [vmem:[%s280 + $0x114] sm:$0xff] %v2605
      %2807 = vst.msk [vmem:[%s280 + $0x11c] sm:$0xf] %vm2760, %v2606
      %2808 = vst [vmem:[%s280 + $0x120] sm:$0xff] %v2607
      %2809 = vst.msk [vmem:[%s280 + $0x128] sm:$0xf] %vm2760, %v2608
      %2810 = vst [vmem:[%s280 + $0x12c] sm:$0xff] %v2609
      %2811 = vst.msk [vmem:[%s280 + $0x134] sm:$0xf] %vm2760, %v2610
      %2812 = vst [vmem:[%s280 + $0x138] sm:$0xff] %v2611
      %2813 = vst.msk [vmem:[%s280 + $0x140] sm:$0xf] %vm2760, %v2612
      %2814 = vst [vmem:[%s280 + $0x144] sm:$0xff] %v2613
      %2815 = vst.msk [vmem:[%s280 + $0x14c] sm:$0xf] %vm2760, %v2614
      %2816 = vst [vmem:[%s280 + $0x150] sm:$0xff] %v2615
      %2817 = vst.msk [vmem:[%s280 + $0x158] sm:$0xf] %vm2760, %v2616
      %2818 = vst [vmem:[%s280 + $0x15c] sm:$0xff] %v2617
      %2819 = vst.msk [vmem:[%s280 + $0x164] sm:$0xf] %vm2760, %v2618
      %2820 = vst [vmem:[%s280 + $0x168] sm:$0xff] %v2619
      %2821 = vst.msk [vmem:[%s280 + $0x170] sm:$0xf] %vm2760, %v2620
      %2822 = vst [vmem:[%s280 + $0x174] sm:$0xff] %v2621
      %2823 = vst.msk [vmem:[%s280 + $0x17c] sm:$0xf] %vm2760, %v2622
      %2824 = vst [vmem:[%s280 + $0x180] sm:$0xff] %v2623
      %2825 = vst.msk [vmem:[%s280 + $0x188] sm:$0xf] %vm2760, %v2624
      %2826 = vst [vmem:[%s280 + $0x18c] sm:$0xff] %v2625
      %2827 = vst.msk [vmem:[%s280 + $0x194] sm:$0xf] %vm2760, %v2626
      %2828 = vst [vmem:[%s280 + $0x198] sm:$0xff] %v2627
      %2829 = vst.msk [vmem:[%s280 + $0x1a0] sm:$0xf] %vm2760, %v2628
      %2830 = vst [vmem:[%s280 + $0x1a4] sm:$0xff] %v2629
      %2831 = vst.msk [vmem:[%s280 + $0x1ac] sm:$0xf] %vm2760, %v2630
      %2832 = vst [vmem:[%s280 + $0x1b0] sm:$0xff] %v2631
      %2833 = vst.msk [vmem:[%s280 + $0x1b8] sm:$0xf] %vm2760, %v2632
      %2834 = vst [vmem:[%s280 + $0x1bc] sm:$0xff] %v2633
      %2835 = vst.msk [vmem:[%s280 + $0x1c4] sm:$0xf] %vm2760, %v2634
      %2836 = vst [vmem:[%s280 + $0x1c8] sm:$0xff] %v2635
      %2837 = vst.msk [vmem:[%s280 + $0x1d0] sm:$0xf] %vm2760, %v2636
      %2838 = vst [vmem:[%s280 + $0x1d4] sm:$0xff] %v2637
      %2839 = vst.msk [vmem:[%s280 + $0x1dc] sm:$0xf] %vm2760, %v2638
      %2840 = vst [vmem:[%s280 + $0x1e0] sm:$0xff] %v2639
      %2841 = vst.msk [vmem:[%s280 + $0x1e8] sm:$0xf] %vm2760, %v2640
      %2842 = vst [vmem:[%s280 + $0x1ec] sm:$0xff] %v2641
      %2843 = vst.msk [vmem:[%s280 + $0x1f4] sm:$0xf] %vm2760, %v2642
      %2844 = vst [vmem:[%s280 + $0x1f8] sm:$0xff] %v2643
      %2845 = vst.msk [vmem:[%s280 + $0x200] sm:$0xf] %vm2760, %v2644
      %2846 = vst [vmem:[%s280 + $0x204] sm:$0xff] %v2645
      %2847 = vst.msk [vmem:[%s280 + $0x20c] sm:$0xf] %vm2760, %v2646
      %2848 = vst [vmem:[%s280 + $0x210] sm:$0xff] %v2647
      %2849 = vst.msk [vmem:[%s280 + $0x218] sm:$0xf] %vm2760, %v2648
      %2850 = vst [vmem:[%s280 + $0x21c] sm:$0xff] %v2649
      %2851 = vst.msk [vmem:[%s280 + $0x224] sm:$0xf] %vm2760, %v2650
      %2852 = vst [vmem:[%s280 + $0x228] sm:$0xff] %v2651
      %2853 = vst.msk [vmem:[%s280 + $0x230] sm:$0xf] %vm2760, %v2652
      %2854 = vst [vmem:[%s280 + $0x234] sm:$0xff] %v2653
      %2855 = vst.msk [vmem:[%s280 + $0x23c] sm:$0xf] %vm2760, %v2654
      %2856 = vst [vmem:[%s280 + $0x240] sm:$0xff] %v2655
      %2857 = vst.msk [vmem:[%s280 + $0x248] sm:$0xf] %vm2760, %v2656
      %2858 = vst [vmem:[%s280 + $0x24c] sm:$0xff] %v2657
      %2859 = vst.msk [vmem:[%s280 + $0x254] sm:$0xf] %vm2760, %v2658
      %s2860 = smul.u32 50, %s20
      %p2861 = scmp.lt.s32.totalorder %s19, 2
      %s2862 = scalar_select %p2861, %s19, 2
      %p2863 = scmp.lt.s32.totalorder %s2860, 49
      %s2864 = scalar_select %p2863, %s2860, 49
      %s2865 = smul.addr %s2864, 3
      %s2866 = smul.addr %s2862, 150
      %s2867 = sadd.s32 %s2865, %s2866
      %s2868 = smul.addr %s2867, 4
      %s2869 = scalar_lea.vmem %s4, %s2868
      // Predicated region
      $region37: #{_forward_impl.1} parent=35 // pred_check
        %p2870 = pneg %p151
      $region38: #{_forward_impl.1} parent=35 // pred_check_branch
        %2872 = sbr.rel (%p2870) target = $region40
      $region39: #{_forward_impl.1} parent=35 // pred_region
        %s2873 = smul.u32 50, %s20
      $region40: #{_forward_impl.1} parent=35 // pred_fallthru
        _
    $region36: #{_forward_impl.1} parent=5 // pred_fallthru
      _
    %p2874 = scmp.le.s32.totalorder 2, %s10
    // Predicated region
    $region41: #{_forward_impl.1} parent=5 // pred_check
      %p2875 = pneg %p2874
    $region42: #{_forward_impl.1} parent=5 // pred_check_branch
      %2877 = sbr.rel (%p2875) target = $region44
    $region43: #{_forward_impl.1} parent=5 // pred_region
      %s2878 = ssub.s32 %s10, 2
      // Predicated region
      $region45: #{_forward_impl.1} parent=43 // pred_check
        %p2879 = pneg %p157
      $region46: #{_forward_impl.1} parent=43 // pred_check_branch
        %2881 = sbr.rel (%p2879) target = $region48
      $region47: #{_forward_impl.1} parent=43 // pred_region
        %s2882 = smul.u32 50, %s22
        %p2883 = scmp.lt.s32.totalorder %s21, 2
        %s2884 = scalar_select %p2883, %s21, 2
        %p2885 = scmp.lt.s32.totalorder %s2882, 49
        %s2886 = scalar_select %p2885, %s2882, 49
        %s2887 = smul.addr %s2886, 3
        %s2888 = smul.addr %s2884, 150
        %s2889 = sadd.s32 %s2887, %s2888
        %s2890 = smul.addr %s2889, 4
        %s2891 = scalar_lea.vmem %s4, %s2890
      $region48: #{_forward_impl.1} parent=43 // pred_fallthru
        _
    $region44: #{_forward_impl.1} parent=5 // pred_fallthru
      _
  $region6: #{_forward_impl.1} parent=0 // loop_footer
    %s14 = sadd.s32 1, %s10
  $region7: #{_forward_impl.1} parent=0 // loop_footer_branch
    %9 = sbr.rel target = $region3
  $region8: #{_forward_impl.1} parent=0 // loop_exit
    _

</llo_original>
